<compile_context>
chip_gen: v7x
topology: tpu7x:2x2x1
jax: 0.10.0
libtpu: 0.0.40
codegen_flags: <defaults>
</compile_context>

<pallas_src>
import functools
import itertools

import numpy as np
import jax
import jax.numpy as jnp
from jax import lax
from jax.experimental import pallas as pl
from jax.experimental.pallas import tpu as pltpu

EPS = 1e-5


def _hardswish(x):
    # torch.nn.Hardswish: x * relu6(x + 3) / 6
    return x * jnp.clip(x + 3.0, 0.0, 6.0) * (1.0 / 6.0)


# ------------------------------ fused kernel -------------------------------

def _attention_block_kernel(x_ref, qkv_w_ref, qkv_b_ref, proj_w_ref,
                            proj_b_ref, ab_ref, o_ref, acc_ref, *,
                            num_heads, key_dim, d):
    Bb, N, C = x_ref.shape
    nh_kd = num_heads * key_dim
    dh = num_heads * d

    # ---- qkv Linear_BN: one fat matmul over all Bb*N rows (bf16 x bf16 -> f32)
    x2d = x_ref[...].reshape(Bb * N, C)                      # bf16
    qkv = jnp.dot(x2d, qkv_w_ref[...],
                  preferred_element_type=jnp.float32)        # (Bb*N, H) f32
    qkv = qkv + qkv_b_ref[...]                               # f32 bias
    qkv = qkv.reshape(Bb, N, 2 * nh_kd + dh)

    # Columns were permuted host-side to [Q heads | K heads | V heads];
    # `scale` is already folded into the Q columns.
    q_all = qkv[:, :, :nh_kd]                                # (Bb, N, nh*kd)
    k_all = qkv[:, :, nh_kd:2 * nh_kd]                       # (Bb, N, nh*kd)
    v_all = qkv[:, :, 2 * nh_kd:]                            # (Bb, N, dh), 128-lane aligned

    # ---- per-head attention, batched over Bb (softmax slabs are (Bb*N, N))
    for h in range(num_heads):                               # static, unrolled
        q = q_all[:, :, h * key_dim:(h + 1) * key_dim]       # (Bb, N, kd)
        k = k_all[:, :, h * key_dim:(h + 1) * key_dim]       # (Bb, N, kd)
        v = v_all[:, :, h * d:(h + 1) * d]                   # (Bb, N, d)

        # q @ k^T, batched over Bb, no explicit transpose.
        s = lax.dot_general(q, k, (((2,), (2,)), ((0,), (0,))),
                            preferred_element_type=jnp.float32)   # (Bb, N, N)
        s = s + ab_ref[h][None]                              # attention bias
        s = s - jnp.max(s, axis=-1, keepdims=True)
        p = jnp.exp(s)
        p = p * pl.reciprocal(jnp.sum(p, axis=-1, keepdims=True), approx=True)

        o_h = lax.dot_general(p, v, (((2,), (1,)), ((0,), (0,))),
                              preferred_element_type=jnp.float32)  # (Bb, N, d)
        # Head-major placement == (attn @ v).transpose(1,2).reshape(N, dh).
        acc_ref[:, :, h * d:(h + 1) * d] = o_h

    # ---- proj = Hardswish -> Linear_BN (fused), one fat matmul.
    act = _hardswish(acc_ref[...])                           # f32 (Bb, N, dh)
    act = act.reshape(Bb * N, dh).astype(jnp.bfloat16)
    out = jnp.dot(act, proj_w_ref[...],
                  preferred_element_type=jnp.float32)        # (Bb*N, C) f32
    out = out + proj_b_ref[...]
    o_ref[...] = out.reshape(Bb, N, C)


def attention_forward(x, params, *, num_heads, key_dim, d, scale,
                      batch_block=4):
    """Fused LeViT Attention block.  x: (B, N, C) float32 -> (B, N, C) f32."""
    B, N, C = x.shape
    nh_kd = num_heads * key_dim
    dh = num_heads * d
    H = params['qkv_w'].shape[1]
    assert H == 2 * nh_kd + dh
    assert params['proj_w'].shape == (dh, C)

    # Batch Bb rows per grid step (keep >= 2 grid steps for v7x megacore).
    Bb = max(1, min(batch_block, B))
    while B % Bb:
        Bb -= 1
    grid = (B // Bb,)

    # ---- host-side (trace-time) weight prep -------------------------------
    # Permute qkv output columns to [Q all-heads | K all-heads | V all-heads]
    # and fold the softmax scale into the Q columns (weights + bias).
    stride = 2 * key_dim + d
    base = np.arange(num_heads)[:, None] * stride
    q_idx = (base + np.arange(key_dim)[None, :]).reshape(-1)
    k_idx = (base + key_dim + np.arange(key_dim)[None, :]).reshape(-1)
    v_idx = (base + 2 * key_dim + np.arange(d)[None, :]).reshape(-1)
    perm = np.concatenate([q_idx, k_idx, v_idx])
    col_scale = np.ones((H,), np.float32)
    col_scale[:nh_kd] = scale

    qkv_w = params['qkv_w'][:, perm] * col_scale[None, :]
    qkv_b = params['qkv_b'][perm] * col_scale

    x_bf = x.astype(jnp.bfloat16)
    qkv_w_bf = qkv_w.astype(jnp.bfloat16)
    proj_w_bf = params['proj_w'].astype(jnp.bfloat16)
    qkv_b_f32 = qkv_b.reshape(1, H).astype(jnp.float32)
    proj_b_f32 = params['proj_b'].reshape(1, C).astype(jnp.float32)
    ab = params['ab'].astype(jnp.float32)

    cost = pl.CostEstimate(
        flops=(2 * B * N * C * H
               + 2 * B * num_heads * N * N * (key_dim + d)
               + 2 * B * N * dh * C),
        transcendentals=B * num_heads * N * N,
        bytes_accessed=(B * N * C * 2 + C * H * 2 + dh * C * 2     # bf16 ins
                        + H * 4 + C * 4 + num_heads * N * N * 4    # f32 ins
                        + B * N * C * 4))                          # f32 out

    kernel = functools.partial(_attention_block_kernel, num_heads=num_heads,
                               key_dim=key_dim, d=d)

    return pl.pallas_call(
        kernel,
        out_shape=jax.ShapeDtypeStruct((B, N, C), jnp.float32),
        grid=grid,
        in_specs=[
            pl.BlockSpec((Bb, N, C), lambda b: (b, 0, 0)),           # x block
            pl.BlockSpec((C, H), lambda b: (0, 0)),                  # qkv weight
            pl.BlockSpec((1, H), lambda b: (0, 0)),                  # qkv bias
            pl.BlockSpec((dh, C), lambda b: (0, 0)),                 # proj weight
            pl.BlockSpec((1, C), lambda b: (0, 0)),                  # proj bias
            pl.BlockSpec((num_heads, N, N), lambda b: (0, 0, 0)),    # attn bias
        ],
        out_specs=pl.BlockSpec((Bb, N, C), lambda b: (b, 0, 0)),
        scratch_shapes=[pltpu.VMEM((Bb, N, dh), jnp.float32)],       # head concat
        compiler_params=pltpu.CompilerParams(
            dimension_semantics=("parallel",)),
        cost_estimate=cost,
    )(x_bf, qkv_w_bf, qkv_b_f32, proj_w_bf, proj_b_f32, ab)


# --------------------------- pure-JAX reference -----------------------------

def attention_reference(x, params, *, num_heads, key_dim, d, scale):
    hp = jax.lax.Precision.HIGHEST
    B, N, C = x.shape
    qkv = jnp.dot(x, params['qkv_w'], precision=hp) + params['qkv_b']
    qkv = qkv.reshape(B, N, num_heads, 2 * key_dim + d)
    q = qkv[..., :key_dim].transpose(0, 2, 1, 3)
    k = qkv[..., key_dim:2 * key_dim].transpose(0, 2, 1, 3)
    v = qkv[..., 2 * key_dim:].transpose(0, 2, 1, 3)
    attn = (jnp.einsum('bhqe,bhke->bhqk', q, k, precision=hp) * scale
            + params['ab'][None])
    attn = jax.nn.softmax(attn, axis=-1)
    o = jnp.einsum('bhqk,bhke->bhqe', attn, v, precision=hp)
    o = o.transpose(0, 2, 1, 3).reshape(B, N, num_heads * d)
    o = _hardswish(o)
    return jnp.dot(o, params['proj_w'], precision=hp) + params['proj_b']


# ---------------------------- parameter helpers -----------------------------

class KeyGen:
    def __init__(self, seed=0):
        self._key = jax.random.PRNGKey(seed)

    def __call__(self):
        self._key, k = jax.random.split(self._key)
        return k


def make_linear_bn_params(kg, a, b, bn_weight_init=1.0):
    """Fuse Linear(a->b, bias=False) + BatchNorm1d(b) (eval) into (w, b)."""
    w = jax.random.normal(kg(), (b, a), jnp.float32) / np.sqrt(a)
    gamma = bn_weight_init + 0.1 * jax.random.normal(kg(), (b,), jnp.float32)
    beta = 0.1 * jax.random.normal(kg(), (b,), jnp.float32)
    mean = 0.1 * jax.random.normal(kg(), (b,), jnp.float32)
    var = 1.0 + 0.1 * jnp.abs(jax.random.normal(kg(), (b,), jnp.float32))
    scale = gamma / jnp.sqrt(var + EPS)
    w_f = (w * scale[:, None]).T           # (a, b)
    b_f = beta - mean * scale              # (b,)
    return w_f, b_f


def attn_bias_idxs(resolution):
    points = list(itertools.product(range(resolution), range(resolution)))
    N = len(points)
    offsets, idxs = {}, []
    for p1 in points:
        for p2 in points:
            off = (abs(p1[0] - p2[0]), abs(p1[1] - p2[1]))
            if off not in offsets:
                offsets[off] = len(offsets)
            idxs.append(offsets[off])
    return np.array(idxs, dtype=np.int32).reshape(N, N), len(offsets)


# ----------------------------------- main -----------------------------------

if __name__ == "__main__":
    # Lane-friendly configuration consistent with the module:
    #   dim=128, key_dim=16, num_heads=4, attn_ratio=2, resolution=4 -> N=16
    B = 8                                    # batched 4-per-step -> grid=(2,)
    resolution = 4
    dim = 128
    key_dim = 16
    num_heads = 4
    attn_ratio = 2
    d = int(attn_ratio * key_dim)            # 32
    dh = d * num_heads                       # 128
    h = dh + 2 * key_dim * num_heads         # 256
    N = resolution * resolution              # 16
    scale = float(key_dim) ** -0.5

    kg = KeyGen(0)
    qkv_w, qkv_b = make_linear_bn_params(kg, dim, h)
    proj_w, proj_b = make_linear_bn_params(kg, dh, dim)
    idxs, n_off = attn_bias_idxs(resolution)
    biases = 0.1 * jax.random.normal(kg(), (num_heads, n_off), jnp.float32)
    ab = biases[:, idxs]                     # eval-mode precomputed self.ab (nh, N, N)

    params = dict(qkv_w=qkv_w, qkv_b=qkv_b, proj_w=proj_w, proj_b=proj_b, ab=ab)

    x = jax.random.normal(kg(), (B, N, dim), dtype=jnp.float32)

    out = attention_forward(x, params, num_heads=num_heads, key_dim=key_dim,
                            d=d, scale=scale, batch_block=4)
    out = jax.block_until_ready(out)

    ref = attention_reference(x, params, num_heads=num_heads, key_dim=key_dim,
                              d=d, scale=scale)

    assert out.shape == (B, N, dim), out.shape
    assert bool(jnp.all(jnp.isfinite(out)))
    # bf16 matmul operands with f32 accumulation (softmax path in f32), so the
    # tolerance vs. the HIGHEST-precision f32 reference is bf16-level.
    max_err = float(jnp.max(jnp.abs(out - ref)))
    assert max_err < 5e-2, f"max abs err {max_err}"
    print("KERNEL_OK")
</pallas_src>

<mosaic_0001>
module attributes {stable_mosaic.version = 11 : i64} {
  func.func @_attention_block_kernel(%arg0: i32, %arg1: memref<4x16x128xbf16, #tpu.memory_space<vmem>>, %arg2: memref<128x256xbf16, #tpu.memory_space<vmem>>, %arg3: memref<1x256xf32, #tpu.memory_space<vmem>>, %arg4: memref<128x128xbf16, #tpu.memory_space<vmem>>, %arg5: memref<1x128xf32, #tpu.memory_space<vmem>>, %arg6: memref<4x16x16xf32, #tpu.memory_space<vmem>>, %arg7: memref<4x16x128xf32, #tpu.memory_space<vmem>>, %arg8: memref<4x16x128xf32, #tpu.memory_space<vmem>>) attributes {dimension_semantics = [#tpu.dimension_semantics<parallel>], iteration_bounds = array<i64: 2>, scalar_prefetch = 0 : i64, scratch_operands = 1 : i64, tpu.core_type = #tpu.core_type<tc>, window_params = [{transform_indices = @transform_0, window_bounds = array<i64: 4, 16, 128>}, {pipeline_mode = #tpu.pipeline_mode<synchronous>, transform_indices = @transform_1, window_bounds = array<i64: 128, 256>}, {pipeline_mode = #tpu.pipeline_mode<synchronous>, transform_indices = @transform_2, window_bounds = array<i64: 1, 256>}, {pipeline_mode = #tpu.pipeline_mode<synchronous>, transform_indices = @transform_3, window_bounds = array<i64: 128, 128>}, {pipeline_mode = #tpu.pipeline_mode<synchronous>, transform_indices = @transform_4, window_bounds = array<i64: 1, 128>}, {pipeline_mode = #tpu.pipeline_mode<synchronous>, transform_indices = @transform_5, window_bounds = array<i64: 4, 16, 16>}, {transform_indices = @transform_6, window_bounds = array<i64: 4, 16, 128>}]} {
    %c0 = arith.constant 0 : index
    %c0_0 = arith.constant 0 : index
    %c0_1 = arith.constant 0 : index
    %0 = vector.load %arg1[%c0, %c0_0, %c0_1] : memref<4x16x128xbf16, #tpu.memory_space<vmem>>, vector<4x16x128xbf16>
    %1 = vector.shape_cast %0 : vector<4x16x128xbf16> to vector<64x128xbf16>
    %c0_2 = arith.constant 0 : index
    %c0_3 = arith.constant 0 : index
    %2 = vector.load %arg2[%c0_2, %c0_3] : memref<128x256xbf16, #tpu.memory_space<vmem>>, vector<128x256xbf16>
    %cst = arith.constant dense<0.000000e+00> : vector<64x256xf32>
    %3 = tpu.matmul %1, %2, %cst {dimension_numbers = #tpu.dot_dimension_numbers<[1], [0], [0], [1], [0, 0, 1, 1], [], []>} : vector<64x128xbf16>, vector<128x256xbf16>, vector<64x256xf32> -> vector<64x256xf32>
    %c0_4 = arith.constant 0 : index
    %c0_5 = arith.constant 0 : index
    %4 = vector.load %arg3[%c0_4, %c0_5] : memref<1x256xf32, #tpu.memory_space<vmem>>, vector<1x256xf32>
    %5 = vector.broadcast %4 : vector<1x256xf32> to vector<64x256xf32>
    %6 = arith.addf %3, %5 : vector<64x256xf32>
    %7 = vector.shape_cast %6 : vector<64x256xf32> to vector<4x16x256xf32>
    %8 = vector.extract_strided_slice %7 {offsets = [0, 0, 0], sizes = [4, 16, 64], strides = [1, 1, 1]} : vector<4x16x256xf32> to vector<4x16x64xf32>
    %9 = vector.extract_strided_slice %7 {offsets = [0, 0, 64], sizes = [4, 16, 64], strides = [1, 1, 1]} : vector<4x16x256xf32> to vector<4x16x64xf32>
    %10 = vector.extract_strided_slice %7 {offsets = [0, 0, 128], sizes = [4, 16, 128], strides = [1, 1, 1]} : vector<4x16x256xf32> to vector<4x16x128xf32>
    %11 = vector.extract_strided_slice %8 {offsets = [0, 0, 0], sizes = [4, 16, 16], strides = [1, 1, 1]} : vector<4x16x64xf32> to vector<4x16x16xf32>
    %12 = vector.extract_strided_slice %9 {offsets = [0, 0, 0], sizes = [4, 16, 16], strides = [1, 1, 1]} : vector<4x16x64xf32> to vector<4x16x16xf32>
    %13 = vector.extract_strided_slice %10 {offsets = [0, 0, 0], sizes = [4, 16, 32], strides = [1, 1, 1]} : vector<4x16x128xf32> to vector<4x16x32xf32>
    %cst_6 = arith.constant dense<0.000000e+00> : vector<4x16x16xf32>
    %14 = tpu.matmul %11, %12, %cst_6 {dimension_numbers = #tpu.dot_dimension_numbers<[2], [2], [1], [1], [0, 0, 0, 1, 1, 1], [0], [0]>} : vector<4x16x16xf32>, vector<4x16x16xf32>, vector<4x16x16xf32> -> vector<4x16x16xf32>
    %c0_7 = arith.constant 0 : index
    %c0_8 = arith.constant 0 : index
    %c0_9 = arith.constant 0 : index
    %15 = vector.load %arg6[%c0_7, %c0_8, %c0_9] : memref<4x16x16xf32, #tpu.memory_space<vmem>>, vector<1x16x16xf32>
    %16 = vector.shape_cast %15 : vector<1x16x16xf32> to vector<16x16xf32>
    %17 = vector.shape_cast %16 : vector<16x16xf32> to vector<1x16x16xf32>
    %18 = vector.broadcast %17 : vector<1x16x16xf32> to vector<4x16x16xf32>
    %19 = arith.addf %14, %18 : vector<4x16x16xf32>
    %cst_10 = arith.constant dense<0xFF800000> : vector<4x16xf32>
    %20 = vector.multi_reduction <maximumf>, %19, %cst_10 [2] : vector<4x16x16xf32> to vector<4x16xf32>
    %21 = vector.shape_cast %20 : vector<4x16xf32> to vector<4x16x1xf32>
    %22 = vector.broadcast %21 : vector<4x16x1xf32> to vector<4x16x16xf32>
    %23 = arith.subf %19, %22 : vector<4x16x16xf32>
    %24 = math.exp %23 : vector<4x16x16xf32>
    %cst_11 = arith.constant dense<0.000000e+00> : vector<4x16xf32>
    %25 = vector.multi_reduction <add>, %24, %cst_11 [2] : vector<4x16x16xf32> to vector<4x16xf32>
    %26 = vector.shape_cast %25 : vector<4x16xf32> to vector<4x16x1xf32>
    %27 = tpu.reciprocal %26 {approx = true} : vector<4x16x1xf32> -> vector<4x16x1xf32>
    %28 = vector.broadcast %27 : vector<4x16x1xf32> to vector<4x16x16xf32>
    %29 = arith.mulf %24, %28 : vector<4x16x16xf32>
    %cst_12 = arith.constant dense<0.000000e+00> : vector<4x16x32xf32>
    %30 = tpu.matmul %29, %13, %cst_12 {dimension_numbers = #tpu.dot_dimension_numbers<[2], [1], [1], [2], [0, 0, 0, 1, 1, 2], [0], [0]>} : vector<4x16x16xf32>, vector<4x16x32xf32>, vector<4x16x32xf32> -> vector<4x16x32xf32>
    %c0_13 = arith.constant 0 : index
    %c0_14 = arith.constant 0 : index
    %c0_15 = arith.constant 0 : index
    %31 = vector.load %arg8[%c0_13, %c0_14, %c0_15] : memref<4x16x128xf32, #tpu.memory_space<vmem>>, vector<4x16x32xf32>
    tpu.vector_store %arg8[%c0_13, %c0_14, %c0_15], %30 {strides = array<i32>} : memref<4x16x128xf32, #tpu.memory_space<vmem>>, vector<4x16x32xf32>,
    %32 = vector.extract_strided_slice %8 {offsets = [0, 0, 16], sizes = [4, 16, 16], strides = [1, 1, 1]} : vector<4x16x64xf32> to vector<4x16x16xf32>
    %33 = vector.extract_strided_slice %9 {offsets = [0, 0, 16], sizes = [4, 16, 16], strides = [1, 1, 1]} : vector<4x16x64xf32> to vector<4x16x16xf32>
    %34 = vector.extract_strided_slice %10 {offsets = [0, 0, 32], sizes = [4, 16, 32], strides = [1, 1, 1]} : vector<4x16x128xf32> to vector<4x16x32xf32>
    %cst_16 = arith.constant dense<0.000000e+00> : vector<4x16x16xf32>
    %35 = tpu.matmul %32, %33, %cst_16 {dimension_numbers = #tpu.dot_dimension_numbers<[2], [2], [1], [1], [0, 0, 0, 1, 1, 1], [0], [0]>} : vector<4x16x16xf32>, vector<4x16x16xf32>, vector<4x16x16xf32> -> vector<4x16x16xf32>
    %c1 = arith.constant 1 : index
    %c0_17 = arith.constant 0 : index
    %c0_18 = arith.constant 0 : index
    %36 = vector.load %arg6[%c1, %c0_17, %c0_18] : memref<4x16x16xf32, #tpu.memory_space<vmem>>, vector<1x16x16xf32>
    %37 = vector.shape_cast %36 : vector<1x16x16xf32> to vector<16x16xf32>
    %38 = vector.shape_cast %37 : vector<16x16xf32> to vector<1x16x16xf32>
    %39 = vector.broadcast %38 : vector<1x16x16xf32> to vector<4x16x16xf32>
    %40 = arith.addf %35, %39 : vector<4x16x16xf32>
    %cst_19 = arith.constant dense<0xFF800000> : vector<4x16xf32>
    %41 = vector.multi_reduction <maximumf>, %40, %cst_19 [2] : vector<4x16x16xf32> to vector<4x16xf32>
    %42 = vector.shape_cast %41 : vector<4x16xf32> to vector<4x16x1xf32>
    %43 = vector.broadcast %42 : vector<4x16x1xf32> to vector<4x16x16xf32>
    %44 = arith.subf %40, %43 : vector<4x16x16xf32>
    %45 = math.exp %44 : vector<4x16x16xf32>
    %cst_20 = arith.constant dense<0.000000e+00> : vector<4x16xf32>
    %46 = vector.multi_reduction <add>, %45, %cst_20 [2] : vector<4x16x16xf32> to vector<4x16xf32>
    %47 = vector.shape_cast %46 : vector<4x16xf32> to vector<4x16x1xf32>
    %48 = tpu.reciprocal %47 {approx = true} : vector<4x16x1xf32> -> vector<4x16x1xf32>
    %49 = vector.broadcast %48 : vector<4x16x1xf32> to vector<4x16x16xf32>
    %50 = arith.mulf %45, %49 : vector<4x16x16xf32>
    %cst_21 = arith.constant dense<0.000000e+00> : vector<4x16x32xf32>
    %51 = tpu.matmul %50, %34, %cst_21 {dimension_numbers = #tpu.dot_dimension_numbers<[2], [1], [1], [2], [0, 0, 0, 1, 1, 2], [0], [0]>} : vector<4x16x16xf32>, vector<4x16x32xf32>, vector<4x16x32xf32> -> vector<4x16x32xf32>
    %c0_22 = arith.constant 0 : index
    %c0_23 = arith.constant 0 : index
    %c32 = arith.constant 32 : index
    %52 = vector.load %arg8[%c0_22, %c0_23, %c32] : memref<4x16x128xf32, #tpu.memory_space<vmem>>, vector<4x16x32xf32>
    tpu.vector_store %arg8[%c0_22, %c0_23, %c32], %51 {strides = array<i32>} : memref<4x16x128xf32, #tpu.memory_space<vmem>>, vector<4x16x32xf32>,
    %53 = vector.extract_strided_slice %8 {offsets = [0, 0, 32], sizes = [4, 16, 16], strides = [1, 1, 1]} : vector<4x16x64xf32> to vector<4x16x16xf32>
    %54 = vector.extract_strided_slice %9 {offsets = [0, 0, 32], sizes = [4, 16, 16], strides = [1, 1, 1]} : vector<4x16x64xf32> to vector<4x16x16xf32>
    %55 = vector.extract_strided_slice %10 {offsets = [0, 0, 64], sizes = [4, 16, 32], strides = [1, 1, 1]} : vector<4x16x128xf32> to vector<4x16x32xf32>
    %cst_24 = arith.constant dense<0.000000e+00> : vector<4x16x16xf32>
    %56 = tpu.matmul %53, %54, %cst_24 {dimension_numbers = #tpu.dot_dimension_numbers<[2], [2], [1], [1], [0, 0, 0, 1, 1, 1], [0], [0]>} : vector<4x16x16xf32>, vector<4x16x16xf32>, vector<4x16x16xf32> -> vector<4x16x16xf32>
    %c2 = arith.constant 2 : index
    %c0_25 = arith.constant 0 : index
    %c0_26 = arith.constant 0 : index
    %57 = vector.load %arg6[%c2, %c0_25, %c0_26] : memref<4x16x16xf32, #tpu.memory_space<vmem>>, vector<1x16x16xf32>
    %58 = vector.shape_cast %57 : vector<1x16x16xf32> to vector<16x16xf32>
    %59 = vector.shape_cast %58 : vector<16x16xf32> to vector<1x16x16xf32>
    %60 = vector.broadcast %59 : vector<1x16x16xf32> to vector<4x16x16xf32>
    %61 = arith.addf %56, %60 : vector<4x16x16xf32>
    %cst_27 = arith.constant dense<0xFF800000> : vector<4x16xf32>
    %62 = vector.multi_reduction <maximumf>, %61, %cst_27 [2] : vector<4x16x16xf32> to vector<4x16xf32>
    %63 = vector.shape_cast %62 : vector<4x16xf32> to vector<4x16x1xf32>
    %64 = vector.broadcast %63 : vector<4x16x1xf32> to vector<4x16x16xf32>
    %65 = arith.subf %61, %64 : vector<4x16x16xf32>
    %66 = math.exp %65 : vector<4x16x16xf32>
    %cst_28 = arith.constant dense<0.000000e+00> : vector<4x16xf32>
    %67 = vector.multi_reduction <add>, %66, %cst_28 [2] : vector<4x16x16xf32> to vector<4x16xf32>
    %68 = vector.shape_cast %67 : vector<4x16xf32> to vector<4x16x1xf32>
    %69 = tpu.reciprocal %68 {approx = true} : vector<4x16x1xf32> -> vector<4x16x1xf32>
    %70 = vector.broadcast %69 : vector<4x16x1xf32> to vector<4x16x16xf32>
    %71 = arith.mulf %66, %70 : vector<4x16x16xf32>
    %cst_29 = arith.constant dense<0.000000e+00> : vector<4x16x32xf32>
    %72 = tpu.matmul %71, %55, %cst_29 {dimension_numbers = #tpu.dot_dimension_numbers<[2], [1], [1], [2], [0, 0, 0, 1, 1, 2], [0], [0]>} : vector<4x16x16xf32>, vector<4x16x32xf32>, vector<4x16x32xf32> -> vector<4x16x32xf32>
    %c0_30 = arith.constant 0 : index
    %c0_31 = arith.constant 0 : index
    %c64 = arith.constant 64 : index
    %73 = vector.load %arg8[%c0_30, %c0_31, %c64] : memref<4x16x128xf32, #tpu.memory_space<vmem>>, vector<4x16x32xf32>
    tpu.vector_store %arg8[%c0_30, %c0_31, %c64], %72 {strides = array<i32>} : memref<4x16x128xf32, #tpu.memory_space<vmem>>, vector<4x16x32xf32>,
    %74 = vector.extract_strided_slice %8 {offsets = [0, 0, 48], sizes = [4, 16, 16], strides = [1, 1, 1]} : vector<4x16x64xf32> to vector<4x16x16xf32>
    %75 = vector.extract_strided_slice %9 {offsets = [0, 0, 48], sizes = [4, 16, 16], strides = [1, 1, 1]} : vector<4x16x64xf32> to vector<4x16x16xf32>
    %76 = vector.extract_strided_slice %10 {offsets = [0, 0, 96], sizes = [4, 16, 32], strides = [1, 1, 1]} : vector<4x16x128xf32> to vector<4x16x32xf32>
    %cst_32 = arith.constant dense<0.000000e+00> : vector<4x16x16xf32>
    %77 = tpu.matmul %74, %75, %cst_32 {dimension_numbers = #tpu.dot_dimension_numbers<[2], [2], [1], [1], [0, 0, 0, 1, 1, 1], [0], [0]>} : vector<4x16x16xf32>, vector<4x16x16xf32>, vector<4x16x16xf32> -> vector<4x16x16xf32>
    %c3 = arith.constant 3 : index
    %c0_33 = arith.constant 0 : index
    %c0_34 = arith.constant 0 : index
    %78 = vector.load %arg6[%c3, %c0_33, %c0_34] : memref<4x16x16xf32, #tpu.memory_space<vmem>>, vector<1x16x16xf32>
    %79 = vector.shape_cast %78 : vector<1x16x16xf32> to vector<16x16xf32>
    %80 = vector.shape_cast %79 : vector<16x16xf32> to vector<1x16x16xf32>
    %81 = vector.broadcast %80 : vector<1x16x16xf32> to vector<4x16x16xf32>
    %82 = arith.addf %77, %81 : vector<4x16x16xf32>
    %cst_35 = arith.constant dense<0xFF800000> : vector<4x16xf32>
    %83 = vector.multi_reduction <maximumf>, %82, %cst_35 [2] : vector<4x16x16xf32> to vector<4x16xf32>
    %84 = vector.shape_cast %83 : vector<4x16xf32> to vector<4x16x1xf32>
    %85 = vector.broadcast %84 : vector<4x16x1xf32> to vector<4x16x16xf32>
    %86 = arith.subf %82, %85 : vector<4x16x16xf32>
    %87 = math.exp %86 : vector<4x16x16xf32>
    %cst_36 = arith.constant dense<0.000000e+00> : vector<4x16xf32>
    %88 = vector.multi_reduction <add>, %87, %cst_36 [2] : vector<4x16x16xf32> to vector<4x16xf32>
    %89 = vector.shape_cast %88 : vector<4x16xf32> to vector<4x16x1xf32>
    %90 = tpu.reciprocal %89 {approx = true} : vector<4x16x1xf32> -> vector<4x16x1xf32>
    %91 = vector.broadcast %90 : vector<4x16x1xf32> to vector<4x16x16xf32>
    %92 = arith.mulf %87, %91 : vector<4x16x16xf32>
    %cst_37 = arith.constant dense<0.000000e+00> : vector<4x16x32xf32>
    %93 = tpu.matmul %92, %76, %cst_37 {dimension_numbers = #tpu.dot_dimension_numbers<[2], [1], [1], [2], [0, 0, 0, 1, 1, 2], [0], [0]>} : vector<4x16x16xf32>, vector<4x16x32xf32>, vector<4x16x32xf32> -> vector<4x16x32xf32>
    %c0_38 = arith.constant 0 : index
    %c0_39 = arith.constant 0 : index
    %c96 = arith.constant 96 : index
    %94 = vector.load %arg8[%c0_38, %c0_39, %c96] : memref<4x16x128xf32, #tpu.memory_space<vmem>>, vector<4x16x32xf32>
    tpu.vector_store %arg8[%c0_38, %c0_39, %c96], %93 {strides = array<i32>} : memref<4x16x128xf32, #tpu.memory_space<vmem>>, vector<4x16x32xf32>,
    %c0_40 = arith.constant 0 : index
    %c0_41 = arith.constant 0 : index
    %c0_42 = arith.constant 0 : index
    %95 = vector.load %arg8[%c0_40, %c0_41, %c0_42] : memref<4x16x128xf32, #tpu.memory_space<vmem>>, vector<4x16x128xf32>
    %cst_43 = arith.constant 3.000000e+00 : f32
    %96 = vector.broadcast %cst_43 : f32 to vector<4x16x128xf32>
    %97 = arith.addf %95, %96 : vector<4x16x128xf32>
    %cst_44 = arith.constant 0.000000e+00 : f32
    %cst_45 = arith.constant 6.000000e+00 : f32
    %98 = vector.broadcast %cst_44 : f32 to vector<4x16x128xf32>
    %99 = arith.maximumf %98, %97 : vector<4x16x128xf32>
    %100 = vector.broadcast %cst_45 : f32 to vector<4x16x128xf32>
    %101 = arith.minimumf %100, %99 : vector<4x16x128xf32>
    %102 = arith.mulf %95, %101 : vector<4x16x128xf32>
    %cst_46 = arith.constant 0.166666672 : f32
    %103 = vector.broadcast %cst_46 : f32 to vector<4x16x128xf32>
    %104 = arith.mulf %102, %103 : vector<4x16x128xf32>
    %105 = vector.shape_cast %104 : vector<4x16x128xf32> to vector<64x128xf32>
    %106 = arith.truncf %105 : vector<64x128xf32> to vector<64x128xbf16>
    %c0_47 = arith.constant 0 : index
    %c0_48 = arith.constant 0 : index
    %107 = vector.load %arg4[%c0_47, %c0_48] : memref<128x128xbf16, #tpu.memory_space<vmem>>, vector<128x128xbf16>
    %cst_49 = arith.constant dense<0.000000e+00> : vector<64x128xf32>
    %108 = tpu.matmul %106, %107, %cst_49 {dimension_numbers = #tpu.dot_dimension_numbers<[1], [0], [0], [1], [0, 0, 1, 1], [], []>} : vector<64x128xbf16>, vector<128x128xbf16>, vector<64x128xf32> -> vector<64x128xf32>
    %c0_50 = arith.constant 0 : index
    %c0_51 = arith.constant 0 : index
    %109 = vector.load %arg5[%c0_50, %c0_51] : memref<1x128xf32, #tpu.memory_space<vmem>>, vector<1x128xf32>
    %110 = vector.broadcast %109 : vector<1x128xf32> to vector<64x128xf32>
    %111 = arith.addf %108, %110 : vector<64x128xf32>
    %112 = vector.shape_cast %111 : vector<64x128xf32> to vector<4x16x128xf32>
    %c0_52 = arith.constant 0 : index
    %c0_53 = arith.constant 0 : index
    %c0_54 = arith.constant 0 : index
    %113 = vector.load %arg7[%c0_52, %c0_53, %c0_54] : memref<4x16x128xf32, #tpu.memory_space<vmem>>, vector<4x16x128xf32>
    tpu.vector_store %arg7[%c0_52, %c0_53, %c0_54], %112 {strides = array<i32>} : memref<4x16x128xf32, #tpu.memory_space<vmem>>, vector<4x16x128xf32>,
    return
  }
  func.func @transform_0(%arg0: i32) -> (i32, i32, i32) {
    %c0_i32 = arith.constant 0 : i32
    %c0_i32_0 = arith.constant 0 : i32
    %c0_i32_1 = arith.constant 0 : i32
    return %arg0, %c0_i32, %c0_i32_0 : i32, i32, i32
  }
  func.func @transform_1(%arg0: i32) -> (i32, i32) {
    %c0_i32 = arith.constant 0 : i32
    %c0_i32_0 = arith.constant 0 : i32
    %c0_i32_1 = arith.constant 0 : i32
    return %c0_i32, %c0_i32_0 : i32, i32
  }
  func.func @transform_2(%arg0: i32) -> (i32, i32) {
    %c0_i32 = arith.constant 0 : i32
    %c0_i32_0 = arith.constant 0 : i32
    %c0_i32_1 = arith.constant 0 : i32
    return %c0_i32, %c0_i32_0 : i32, i32
  }
  func.func @transform_3(%arg0: i32) -> (i32, i32) {
    %c0_i32 = arith.constant 0 : i32
    %c0_i32_0 = arith.constant 0 : i32
    %c0_i32_1 = arith.constant 0 : i32
    return %c0_i32, %c0_i32_0 : i32, i32
  }
  func.func @transform_4(%arg0: i32) -> (i32, i32) {
    %c0_i32 = arith.constant 0 : i32
    %c0_i32_0 = arith.constant 0 : i32
    %c0_i32_1 = arith.constant 0 : i32
    return %c0_i32, %c0_i32_0 : i32, i32
  }
  func.func @transform_5(%arg0: i32) -> (i32, i32, i32) {
    %c0_i32 = arith.constant 0 : i32
    %c0_i32_0 = arith.constant 0 : i32
    %c0_i32_1 = arith.constant 0 : i32
    %c0_i32_2 = arith.constant 0 : i32
    return %c0_i32, %c0_i32_0, %c0_i32_1 : i32, i32, i32
  }
  func.func @transform_6(%arg0: i32) -> (i32, i32, i32) {
    %c0_i32 = arith.constant 0 : i32
    %c0_i32_0 = arith.constant 0 : i32
    %c0_i32_1 = arith.constant 0 : i32
    return %arg0, %c0_i32, %c0_i32_0 : i32, i32, i32
  }
}

</mosaic_0001>

<llo_original>
// kernel: tpu_custom_call.1
$region0: #{tpu_custom_call.1}
  #allocation0 [shape = 'u32[]', space=smem, size = 0x4, offset = 0x4, fixed_abs, tag = 'smem constant byte address 0x4 - core index']
  #allocation1 [shape = 'u32[144,128]{1,0:T(1,128)}', space=vmem, size = 0x12000, scoped, tag = 'internal scratch']
  #allocation2 [shape = 'f32[4,16,128]{2,1,0:T(8,128)}', space=vmem, size = 0x8000, scoped, tag = 'scratch operand']
  %s0 = inlined_call_operand.hbm [shape: bf16[8,16,128], index: 0, kind: input, shape index: {}]
  %s1 = inlined_call_operand.hbm [shape: bf16[128,256], index: 1, kind: input, shape index: {}]
  %s2 = inlined_call_operand.vmem [shape: f32[1,256], index: 2, kind: input, shape index: {}]
  %s3 = inlined_call_operand.hbm [shape: bf16[128,128], index: 3, kind: input, shape index: {}]
  %s4 = inlined_call_operand.vmem [shape: f32[1,128], index: 4, kind: input, shape index: {}]
  %s5 = inlined_call_operand.hbm [shape: f32[4,16,16], index: 5, kind: input, shape index: {}]
  %s6 = inlined_call_operand.hbm [shape: f32[8,16,128], index: 6, kind: output, shape index: {}]
  %s7 = sld [smem:[#allocation0]]
  $region73: #{tpu_custom_call.1} parent=0
    _
  %s9 = ssub.s32 1, %s7
  %s10 = scalar_select 0, %s9, %s7
  $region1: #{tpu_custom_call.1} parent=0
    #allocation3 [shape = 'u8[32768]{0}', space=vmem, size = 0x8000, scoped, tag = 'input window, operand 0']
    #allocation4 [shape = 's32[2]{0}', space=sflag, size = 0x8, scoped, tag = 'scoped memory for tpu_custom_call.1']
    #allocation5 [shape = 's32[2]{0}', space=sflag, size = 0x8, scoped, tag = 'scoped memory for tpu_custom_call.1']
    #allocation6 [shape = 'u8[65536]{0}', space=vmem, size = 0x10000, scoped, tag = 'input window, operand 1, single buffered']
    #allocation7 [shape = 's32[1]{0}', space=sflag, size = 0x4, scoped, tag = 'scoped memory for tpu_custom_call.1']
    #allocation8 [shape = 'u8[32768]{0}', space=vmem, size = 0x8000, scoped, tag = 'input window, operand 3, single buffered']
    #allocation9 [shape = 'u8[32768]{0}', space=vmem, size = 0x8000, scoped, tag = 'input window, operand 5, single buffered']
    #allocation10 [shape = 's32[1]{0}', space=sflag, size = 0x4, scoped, tag = 'scoped memory for tpu_custom_call.1']
    #allocation11 [shape = 'u8[65536]{0}', space=vmem, size = 0x10000, scoped, tag = 'output window, operand 0']
    %11 = vsyncpa [#allocation4], 0
    %s12 = scalar_lea.sflag [#allocation4], 1
    %13 = vsyncpa %s12, 0
    %14 = vsyncpa [#allocation7], 0
    %15 = vsyncpa [#allocation10], 0
    %16 = vsyncpa [#allocation5], 0
    %s17 = scalar_lea.sflag [#allocation5], 1
    %18 = vsyncpa %s17, 0
    loop: start=0, step=1, limit=4
    $region2: #{tpu_custom_call.1} parent=1 // loop_pre_header
      _
    $region3: #{tpu_custom_call.1} parent=1 // loop_header
      %s20 = sphi 0, %s24
      %p21 = scmp.ge.s32.totalorder %s20, 4
      %s30 = sphi 0, %s32
      %s33 = sphi 0, %s30
      %s34 = sphi 0, %s33
      %s50 = sphi 0, %s34
      %s54 = sphi 0, %s54
      %s56 = sphi 0, %s54
      %s57 = sphi 0, %s56
      %s71 = sphi 0, %s57
      %s75 = sphi 0, %s75
      %s77 = sphi 0, %s75
      %s78 = sphi 0, %s77
      %s92 = sphi 0, %s78
      %s96 = sphi 0, %s96
      %s98 = sphi 0, %s96
      %s99 = sphi 0, %s98
      %s113 = sphi 0, %s99
      %s117 = sphi 0, %s117
      %s119 = sphi 0, %s117
      %s120 = sphi 0, %s119
      %s134 = sphi 0, %s120
      %s138 = sphi 0, %s138
      %s140 = sphi 0, %s138
      %s141 = sphi 0, %s140
      %s155 = sphi 0, %s141
      %s161 = sphi 0, %s163
      %s164 = sphi 0, %s161
      %s165 = sphi 0, %s164
      %s181 = sphi 0, %s165
    $region4: #{tpu_custom_call.1} parent=1 // loop_header_branch
      %23 = sbr.rel (%p21) target = $region8
    $region5: #{tpu_custom_call.1} parent=1 // loop_body
      %s25 = ssub.s32 %s20, 1
      %s26 = ssub.s32 %s20, 2
      %s27 = sadd.s32 %s20, 1
      %s28 = ssub.s32 %s20, %s27
      %p29 = scmp.eq.s32.totalorder %s28, 0
      %s31 = sadd.s32 %s30, 1
      %s32 = scalar_select %p29, %s30, %s31
      %p35 = pneg %p29
      %p36 = scmp.eq.s32.totalorder %s20, 1
      %p37 = por %p35, %p36
      %p38 = scmp.ne.s32.totalorder %s30, %s33
      %p39 = scmp.eq.s32.totalorder %s20, 0
      %p40 = por %p38, %p39
      %p41 = scmp.ne.s32.totalorder %s30, %s33
      %p42 = scmp.eq.s32.totalorder %s25, 1
      %p43 = por %p41, %p42
      %p44 = scmp.ne.s32.totalorder %s33, %s34
      %p45 = scmp.eq.s32.totalorder %s25, 0
      %p46 = por %p44, %p45
      %p47 = scmp.ne.s32.totalorder %s33, %s34
      %p48 = scmp.eq.s32.totalorder %s26, 1
      %p49 = por %p47, %p48
      %p51 = scmp.ne.s32.totalorder %s34, %s50
      %p52 = scmp.eq.s32.totalorder %s26, 0
      %p53 = por %p51, %p52
      %s55 = sadd.s32 %s54, 1
      %p58 = scmp.eq.s32.totalorder %s20, 1
      %p59 = scmp.ne.s32.totalorder %s54, %s56
      %p60 = scmp.eq.s32.totalorder %s20, 0
      %p61 = por %p59, %p60
      %p62 = scmp.ne.s32.totalorder %s54, %s56
      %p63 = scmp.eq.s32.totalorder %s25, 1
      %p64 = por %p62, %p63
      %p65 = scmp.ne.s32.totalorder %s56, %s57
      %p66 = scmp.eq.s32.totalorder %s25, 0
      %p67 = por %p65, %p66
      %p68 = scmp.ne.s32.totalorder %s56, %s57
      %p69 = scmp.eq.s32.totalorder %s26, 1
      %p70 = por %p68, %p69
      %p72 = scmp.ne.s32.totalorder %s57, %s71
      %p73 = scmp.eq.s32.totalorder %s26, 0
      %p74 = por %p72, %p73
      %s76 = sadd.s32 %s75, 1
      %p79 = scmp.eq.s32.totalorder %s20, 1
      %p80 = scmp.ne.s32.totalorder %s75, %s77
      %p81 = scmp.eq.s32.totalorder %s20, 0
      %p82 = por %p80, %p81
      %p83 = scmp.ne.s32.totalorder %s75, %s77
      %p84 = scmp.eq.s32.totalorder %s25, 1
      %p85 = por %p83, %p84
      %p86 = scmp.ne.s32.totalorder %s77, %s78
      %p87 = scmp.eq.s32.totalorder %s25, 0
      %p88 = por %p86, %p87
      %p89 = scmp.ne.s32.totalorder %s77, %s78
      %p90 = scmp.eq.s32.totalorder %s26, 1
      %p91 = por %p89, %p90
      %p93 = scmp.ne.s32.totalorder %s78, %s92
      %p94 = scmp.eq.s32.totalorder %s26, 0
      %p95 = por %p93, %p94
      %s97 = sadd.s32 %s96, 1
      %p100 = scmp.eq.s32.totalorder %s20, 1
      %p101 = scmp.ne.s32.totalorder %s96, %s98
      %p102 = scmp.eq.s32.totalorder %s20, 0
      %p103 = por %p101, %p102
      %p104 = scmp.ne.s32.totalorder %s96, %s98
      %p105 = scmp.eq.s32.totalorder %s25, 1
      %p106 = por %p104, %p105
      %p107 = scmp.ne.s32.totalorder %s98, %s99
      %p108 = scmp.eq.s32.totalorder %s25, 0
      %p109 = por %p107, %p108
      %p110 = scmp.ne.s32.totalorder %s98, %s99
      %p111 = scmp.eq.s32.totalorder %s26, 1
      %p112 = por %p110, %p111
      %p114 = scmp.ne.s32.totalorder %s99, %s113
      %p115 = scmp.eq.s32.totalorder %s26, 0
      %p116 = por %p114, %p115
      %s118 = sadd.s32 %s117, 1
      %p121 = scmp.eq.s32.totalorder %s20, 1
      %p122 = scmp.ne.s32.totalorder %s117, %s119
      %p123 = scmp.eq.s32.totalorder %s20, 0
      %p124 = por %p122, %p123
      %p125 = scmp.ne.s32.totalorder %s117, %s119
      %p126 = scmp.eq.s32.totalorder %s25, 1
      %p127 = por %p125, %p126
      %p128 = scmp.ne.s32.totalorder %s119, %s120
      %p129 = scmp.eq.s32.totalorder %s25, 0
      %p130 = por %p128, %p129
      %p131 = scmp.ne.s32.totalorder %s119, %s120
      %p132 = scmp.eq.s32.totalorder %s26, 1
      %p133 = por %p131, %p132
      %p135 = scmp.ne.s32.totalorder %s120, %s134
      %p136 = scmp.eq.s32.totalorder %s26, 0
      %p137 = por %p135, %p136
      %s139 = sadd.s32 %s138, 1
      %p142 = scmp.eq.s32.totalorder %s20, 1
      %p143 = scmp.ne.s32.totalorder %s138, %s140
      %p144 = scmp.eq.s32.totalorder %s20, 0
      %p145 = por %p143, %p144
      %p146 = scmp.ne.s32.totalorder %s138, %s140
      %p147 = scmp.eq.s32.totalorder %s25, 1
      %p148 = por %p146, %p147
      %p149 = scmp.ne.s32.totalorder %s140, %s141
      %p150 = scmp.eq.s32.totalorder %s25, 0
      %p151 = por %p149, %p150
      %p152 = scmp.ne.s32.totalorder %s140, %s141
      %p153 = scmp.eq.s32.totalorder %s26, 1
      %p154 = por %p152, %p153
      %p156 = scmp.ne.s32.totalorder %s141, %s155
      %p157 = scmp.eq.s32.totalorder %s26, 0
      %p158 = por %p156, %p157
      %s159 = ssub.s32 %s20, %s27
      %p160 = scmp.eq.s32.totalorder %s159, 0
      %s162 = sadd.s32 %s161, 1
      %s163 = scalar_select %p160, %s161, %s162
      %p166 = pneg %p160
      %p167 = scmp.eq.s32.totalorder %s20, 1
      %p168 = por %p166, %p167
      %p169 = scmp.ne.s32.totalorder %s161, %s164
      %p170 = scmp.eq.s32.totalorder %s20, 0
      %p171 = por %p169, %p170
      %p172 = scmp.ne.s32.totalorder %s161, %s164
      %p173 = scmp.eq.s32.totalorder %s25, 1
      %p174 = por %p172, %p173
      %p175 = scmp.ne.s32.totalorder %s164, %s165
      %p176 = scmp.eq.s32.totalorder %s25, 0
      %p177 = por %p175, %p176
      %p178 = scmp.ne.s32.totalorder %s164, %s165
      %p179 = scmp.eq.s32.totalorder %s26, 1
      %p180 = por %p178, %p179
      %p182 = scmp.ne.s32.totalorder %s165, %s181
      %p183 = scmp.eq.s32.totalorder %s26, 0
      %p184 = por %p182, %p183
      %p185 = scmp.le.s32.totalorder 1, %s20
      %p186 = scmp.lt.s32.totalorder %s20, 3
      %p187 = pnand %p185, %p186
      %p188 = pneg %p187
      // Predicated region
      $region9: #{tpu_custom_call.1} parent=5 // pred_check
        _
      $region10: #{tpu_custom_call.1} parent=5 // pred_check_branch
        %190 = sbr.rel (%p187) target = $region12
      $region11: #{tpu_custom_call.1} parent=5 // pred_region
        %s191 = ssub.s32 %s20, 1
        // Predicated region
        $region13: #{tpu_custom_call.1} parent=11 // pred_check
          %p192 = pneg %p67
        $region14: #{tpu_custom_call.1} parent=11 // pred_check_branch
          %194 = sbr.rel (%p192) target = $region16
        $region15: #{tpu_custom_call.1} parent=11 // pred_region
          %s196 = ssub.s32 2048, 2048
          %197 = vsyncadd [#allocation7], %s196
          %s198 = sshll.u32 [#allocation6], 4
          %s199 = int_to_ptr.vmem [resolvable:$true] %s198
          %204 = dma.hbm_to_vmem [thread:$0]  %s1, 2048, %s199, [#allocation7], 128, 128, 8
        $region16: #{tpu_custom_call.1} parent=11 // pred_fallthru
          _
        // Predicated region
        $region17: #{tpu_custom_call.1} parent=11 // pred_check
          %p205 = pneg %p88
        $region18: #{tpu_custom_call.1} parent=11 // pred_check_branch
          %207 = sbr.rel (%p205) target = $region20
        $region19: #{tpu_custom_call.1} parent=11 // pred_region
          _
        $region20: #{tpu_custom_call.1} parent=11 // pred_fallthru
          _
        // Predicated region
        $region21: #{tpu_custom_call.1} parent=11 // pred_check
          %p208 = pneg %p109
        $region22: #{tpu_custom_call.1} parent=11 // pred_check_branch
          %210 = sbr.rel (%p208) target = $region24
        $region23: #{tpu_custom_call.1} parent=11 // pred_region
          %s212 = ssub.s32 1024, 1024
          %213 = vsyncadd [#allocation7], %s212
          %s214 = sshll.u32 [#allocation8], 4
          %s215 = int_to_ptr.vmem [resolvable:$true] %s214
          %220 = dma.hbm_to_vmem [thread:$0]  %s3, 1024, %s215, [#allocation7], 64, 64, 4
        $region24: #{tpu_custom_call.1} parent=11 // pred_fallthru
          _
        // Predicated region
        $region25: #{tpu_custom_call.1} parent=11 // pred_check
          %p221 = pneg %p130
        $region26: #{tpu_custom_call.1} parent=11 // pred_check_branch
          %223 = sbr.rel (%p221) target = $region28
        $region27: #{tpu_custom_call.1} parent=11 // pred_region
          _
        $region28: #{tpu_custom_call.1} parent=11 // pred_fallthru
          _
        // Predicated region
        $region29: #{tpu_custom_call.1} parent=11 // pred_check
          %p224 = pneg %p151
        $region30: #{tpu_custom_call.1} parent=11 // pred_check_branch
          %226 = sbr.rel (%p224) target = $region32
        $region31: #{tpu_custom_call.1} parent=11 // pred_region
          %s228 = ssub.s32 1024, 1024
          %229 = vsyncadd [#allocation10], %s228
          %s230 = sshll.u32 [#allocation9], 4
          %s231 = int_to_ptr.vmem [resolvable:$true] %s230
          %236 = dma.hbm_to_vmem [thread:$0]  %s5, 1024, %s231, [#allocation10], 128, 128, 8
        $region32: #{tpu_custom_call.1} parent=11 // pred_fallthru
          _
      $region12: #{tpu_custom_call.1} parent=5 // pred_fallthru
        _
      %p237 = scmp.lt.s32.totalorder %s20, 2
      // Predicated region
      $region33: #{tpu_custom_call.1} parent=5 // pred_check
        %p238 = pneg %p237
      $region34: #{tpu_custom_call.1} parent=5 // pred_check_branch
        %240 = sbr.rel (%p238) target = $region36
      $region35: #{tpu_custom_call.1} parent=5 // pred_region
        // Predicated region
        $region37: #{tpu_custom_call.1} parent=35 // pred_check
          %p241 = pneg %p40
        $region38: #{tpu_custom_call.1} parent=35 // pred_check_branch
          %243 = sbr.rel (%p241) target = $region40
        $region39: #{tpu_custom_call.1} parent=35 // pred_region
          %s244 = sand.u32 %s30, 1
          %s245 = scalar_lea.sflag [#allocation4], %s244
          %s246 = sand.u32 %s30, 1
          %s247 = smul.addr %s246, 32
          %s248 = scalar_lea.vmem [#allocation3], %s247
          %s249 = smul.u32 4, %s20
          %s251 = ssub.s32 512, 512
          %252 = vsyncadd %s245, %s251
          %s253 = smul.addr %s249, 2
          %s254 = smul.addr %s253, 64
          %s255 = scalar_lea.hbm %s0, %s254
          %s256 = sshll.u32 %s248, 4
          %s257 = int_to_ptr.vmem [resolvable:$true] %s256
          %262 = dma.hbm_to_vmem [thread:$0]  %s255, 512, %s257, %s245, 64, 64, 4
        $region40: #{tpu_custom_call.1} parent=35 // pred_fallthru
          _
      $region36: #{tpu_custom_call.1} parent=5 // pred_fallthru
        _
      %p263 = scmp.le.s32.totalorder 1, %s20
      %p264 = scmp.lt.s32.totalorder %s20, 3
      %p265 = pnand %p263, %p264
      %p266 = pneg %p265
      // Predicated region
      $region41: #{tpu_custom_call.1} parent=5 // pred_check
        _
      $region42: #{tpu_custom_call.1} parent=5 // pred_check_branch
        %268 = sbr.rel (%p265) target = $region44
      $region43: #{tpu_custom_call.1} parent=5 // pred_region
        %s269 = ssub.s32 %s20, 1
        %s270 = sand.u32 %s33, 1
        %s271 = scalar_lea.sflag [#allocation4], %s270
        %s272 = sand.u32 %s33, 1
        %s273 = smul.addr %s272, 32
        %s274 = scalar_lea.vmem [#allocation3], %s273
        // Predicated region
        $region45: #{tpu_custom_call.1} parent=43 // pred_check
          %p275 = pneg %p46
        $region46: #{tpu_custom_call.1} parent=43 // pred_check_branch
          %277 = sbr.rel (%p275) target = $region48
        $region47: #{tpu_custom_call.1} parent=43 // pred_region
          %278 = dma.done %s271, 512
        $region48: #{tpu_custom_call.1} parent=43 // pred_fallthru
          _
        // Predicated region
        $region49: #{tpu_custom_call.1} parent=43 // pred_check
          %p279 = pneg %p67
        $region50: #{tpu_custom_call.1} parent=43 // pred_check_branch
          %281 = sbr.rel (%p279) target = $region52
        $region51: #{tpu_custom_call.1} parent=43 // pred_region
          %282 = dma.done [#allocation7], 2048
        $region52: #{tpu_custom_call.1} parent=43 // pred_fallthru
          _
        // Predicated region
        $region53: #{tpu_custom_call.1} parent=43 // pred_check
          %p283 = pneg %p109
        $region54: #{tpu_custom_call.1} parent=43 // pred_check_branch
          %285 = sbr.rel (%p283) target = $region56
        $region55: #{tpu_custom_call.1} parent=43 // pred_region
          %286 = dma.done [#allocation7], 1024
        $region56: #{tpu_custom_call.1} parent=43 // pred_fallthru
          _
        // Predicated region
        $region57: #{tpu_custom_call.1} parent=43 // pred_check
          %p287 = pneg %p151
        $region58: #{tpu_custom_call.1} parent=43 // pred_check_branch
          %289 = sbr.rel (%p287) target = $region60
        $region59: #{tpu_custom_call.1} parent=43 // pred_region
          %290 = dma.done [#allocation10], 1024
        $region60: #{tpu_custom_call.1} parent=43 // pred_fallthru
          _
        %s291 = sand.u32 %s33, 1
        %s292 = scalar_lea.sflag [#allocation4], %s291
        %s293 = sand.u32 %s33, 1
        %s294 = smul.addr %s293, 32
        %s295 = scalar_lea.vmem [#allocation3], %s294
        %p296 = pneg %p46
        %p297 = pneg %p43
        %p298 = pneg %p67
        %p299 = pneg %p64
        %p300 = pneg %p88
        %p301 = pneg %p85
        %p302 = pneg %p109
        %p303 = pneg %p106
        %p304 = pneg %p130
        %p305 = pneg %p127
        %p306 = pneg %p151
        %p307 = pneg %p148
        %p308 = pneg %p177
        %p309 = pneg %p174
        %s310 = sand.u32 %s164, 1
        %s311 = scalar_lea.sflag [#allocation5], %s310
        %s312 = sand.u32 %s164, 1
        %s313 = smul.addr %s312, 64
        %s314 = scalar_lea.vmem [#allocation11], %s313
        %s315 = smul.u32 4, %s25
        %s316 = smul.u32 4, %s25
        %v318 = vld [vmem:[%s274] sm:$0xf]
        %v319 = vld [vmem:[%s274 + $0x4] sm:$0xf]
        %v320 = vld [vmem:[%s274 + $0x8] sm:$0xf]
        %v321 = vld [vmem:[%s274 + $0xc] sm:$0xf]
        %v322 = vld [vmem:[%s274 + $0x10] sm:$0xf]
        %v323 = vld [vmem:[%s274 + $0x14] sm:$0xf]
        %v324 = vld [vmem:[%s274 + $0x18] sm:$0xf]
        %v325 = vld [vmem:[%s274 + $0x1c] sm:$0xf]
        %v326 = vld [vmem:[#allocation6] sm:$0xff]
        %v327 = vld [vmem:[#allocation6 + $0x8] sm:$0xff]
        %v328 = vld [vmem:[#allocation6 + $0x10] sm:$0xff]
        %v329 = vld [vmem:[#allocation6 + $0x18] sm:$0xff]
        %v330 = vld [vmem:[#allocation6 + $0x20] sm:$0xff]
        %v331 = vld [vmem:[#allocation6 + $0x28] sm:$0xff]
        %v332 = vld [vmem:[#allocation6 + $0x30] sm:$0xff]
        %v333 = vld [vmem:[#allocation6 + $0x38] sm:$0xff]
        %v334 = vld [vmem:[#allocation6 + $0x40] sm:$0xff]
        %v335 = vld [vmem:[#allocation6 + $0x48] sm:$0xff]
        %v336 = vld [vmem:[#allocation6 + $0x50] sm:$0xff]
        %v337 = vld [vmem:[#allocation6 + $0x58] sm:$0xff]
        %v338 = vld [vmem:[#allocation6 + $0x60] sm:$0xff]
        %v339 = vld [vmem:[#allocation6 + $0x68] sm:$0xff]
        %v340 = vld [vmem:[#allocation6 + $0x70] sm:$0xff]
        %v341 = vld [vmem:[#allocation6 + $0x78] sm:$0xff]
        %v342 = vld [vmem:[%s2] sm:$0x3]
        %v344 = vlaneseq
        %v345 = vshrl.u32 %v344, 7
        %v346 = vsub.s32 0, %v345
        %v347 = vrot.slane %v342, %v346
        %v348 = vlaneseq
        %v349 = vshrl.u32 %v348, 7
        %v350 = vsub.s32 1, %v349
        %v351 = vrot.slane %v342, %v350
        %v362 = vunpack.c.l.b16 %v318
        %v363 = vunpack.c.l.b16 %v319
        %v364 = vunpack.c.l.b16 %v320
        %v365 = vunpack.c.l.b16 %v321
        %v366 = vunpack.c.l.b16 %v322
        %v367 = vunpack.c.l.b16 %v323
        %v368 = vunpack.c.l.b16 %v324
        %v369 = vunpack.c.l.b16 %v325
        %v370 = vpack.c.b16 %v363, %v362
        %v371 = vpack.c.b16 %v365, %v364
        %v372 = vpack.c.b16 %v367, %v366
        %v373 = vpack.c.b16 %v369, %v368
        %v394 = vunpack.c.l.b16 %v326
        %v395 = vunpack.c.h.b16 %v326
        %v396 = vunpack.c.l.b16 %v327
        %v397 = vunpack.c.h.b16 %v327
        %v398 = vunpack.c.l.b16 %v328
        %v399 = vunpack.c.h.b16 %v328
        %v400 = vunpack.c.l.b16 %v329
        %v401 = vunpack.c.h.b16 %v329
        %v402 = vunpack.c.l.b16 %v330
        %v403 = vunpack.c.h.b16 %v330
        %v404 = vunpack.c.l.b16 %v331
        %v405 = vunpack.c.h.b16 %v331
        %v406 = vunpack.c.l.b16 %v332
        %v407 = vunpack.c.h.b16 %v332
        %v408 = vunpack.c.l.b16 %v333
        %v409 = vunpack.c.h.b16 %v333
        %v410 = vunpack.c.l.b16 %v334
        %v411 = vunpack.c.h.b16 %v334
        %v412 = vunpack.c.l.b16 %v335
        %v413 = vunpack.c.h.b16 %v335
        %v414 = vunpack.c.l.b16 %v336
        %v415 = vunpack.c.h.b16 %v336
        %v416 = vunpack.c.l.b16 %v337
        %v417 = vunpack.c.h.b16 %v337
        %v418 = vunpack.c.l.b16 %v338
        %v419 = vunpack.c.h.b16 %v338
        %v420 = vunpack.c.l.b16 %v339
        %v421 = vunpack.c.h.b16 %v339
        %v422 = vunpack.c.l.b16 %v340
        %v423 = vunpack.c.h.b16 %v340
        %v424 = vunpack.c.l.b16 %v341
        %v425 = vunpack.c.h.b16 %v341
        %v426 = vpack.c.b16 %v396, %v394
        %v427 = vpack.c.b16 %v397, %v395
        %v428 = vpack.c.b16 %v400, %v398
        %v429 = vpack.c.b16 %v401, %v399
        %v430 = vpack.c.b16 %v404, %v402
        %v431 = vpack.c.b16 %v405, %v403
        %v432 = vpack.c.b16 %v408, %v406
        %v433 = vpack.c.b16 %v409, %v407
        %v434 = vpack.c.b16 %v412, %v410
        %v435 = vpack.c.b16 %v413, %v411
        %v436 = vpack.c.b16 %v416, %v414
        %v437 = vpack.c.b16 %v417, %v415
        %v438 = vpack.c.b16 %v420, %v418
        %v439 = vpack.c.b16 %v421, %v419
        %v440 = vpack.c.b16 %v424, %v422
        %v441 = vpack.c.b16 %v425, %v423
        %458 = vmatprep.subr.bf16.mxu0 %v427
        %459 = vmatpush1.bf16.msra.mxu0 %v426
        %460 = vmatprep.subr.bf16.mxu0 %v429
        %461 = vmatpush1.bf16.msra.mxu0 %v428
        %462 = vmatprep.subr.bf16.mxu0 %v431
        %463 = vmatpush1.bf16.msra.mxu0 %v430
        %464 = vmatprep.subr.bf16.mxu0 %v433
        %465 = vmatpush1.bf16.msra.mxu0 %v432
        %466 = vmatprep.subr.bf16.mxu0 %v435
        %467 = vmatpush1.bf16.msra.mxu0 %v434
        %468 = vmatprep.subr.bf16.mxu0 %v437
        %469 = vmatpush1.bf16.msra.mxu0 %v436
        %470 = vmatprep.subr.bf16.mxu0 %v439
        %471 = vmatpush1.bf16.msra.mxu0 %v438
        %472 = vmatprep.subr.bf16.mxu0 %v441
        %473 = vmatpush1.bf16.msra.mxu0 %v440
        %474 = vmatprep.subr.bf16.mxu0 0
        %475 = vmatpush1.bf16.msra.mxu0 0
        %476 = vmatprep.subr.bf16.mxu0 0
        %477 = vmatpush1.bf16.msra.mxu0 0
        %478 = vmatprep.subr.bf16.mxu0 0
        %479 = vmatpush1.bf16.msra.mxu0 0
        %480 = vmatprep.subr.bf16.mxu0 0
        %481 = vmatpush1.bf16.msra.mxu0 0
        %482 = vmatprep.subr.bf16.mxu0 0
        %483 = vmatpush1.bf16.msra.mxu0 0
        %484 = vmatprep.subr.bf16.mxu0 0
        %485 = vmatpush1.bf16.msra.mxu0 0
        %486 = vmatprep.subr.bf16.mxu0 0
        %487 = vmatpush1.bf16.msra.mxu0 0
        %488 = vmatprep.subr.bf16.mxu0 0
        %489 = vmatpush1.bf16.msra.mxu0 0
        %490 = vmatprep.mubr.bf16.mxu0 0
        %491 = vmatmul.mubr.bf16.gmra.mrb[0].mxu0 %v370
        %v492 = vpop.f32.mrb[0].mxu0
        %v493 = vadd.f32 %v347, %v492
        %v494 = vpop.f32.mrb[0].mxu0
        %v495 = vadd.f32 %v351, %v494
        %v496 = vpop.f32.mrb[0].mxu0
        %v497 = vadd.f32 %v347, %v496
        %v498 = vpop.f32.mrb[0].mxu0
        %v499 = vadd.f32 %v351, %v498
        %500 = vmatprep.mubr.bf16.mxu0 0
        %501 = vmatmul.mubr.bf16.gmra.mrb[0].mxu0 %v371
        %v502 = vpop.f32.mrb[0].mxu0
        %v503 = vadd.f32 %v347, %v502
        %v504 = vpop.f32.mrb[0].mxu0
        %v505 = vadd.f32 %v351, %v504
        %v506 = vpop.f32.mrb[0].mxu0
        %v507 = vadd.f32 %v347, %v506
        %v508 = vpop.f32.mrb[0].mxu0
        %v509 = vadd.f32 %v351, %v508
        %510 = vmatprep.mubr.bf16.mxu0 0
        %511 = vmatmul.mubr.bf16.gmra.mrb[0].mxu0 %v372
        %v512 = vpop.f32.mrb[0].mxu0
        %v513 = vadd.f32 %v347, %v512
        %v514 = vpop.f32.mrb[0].mxu0
        %v515 = vadd.f32 %v351, %v514
        %v516 = vpop.f32.mrb[0].mxu0
        %v517 = vadd.f32 %v347, %v516
        %v518 = vpop.f32.mrb[0].mxu0
        %v519 = vadd.f32 %v351, %v518
        %520 = vmatprep.mubr.bf16.mxu0 0
        %521 = vmatmul.mubr.bf16.gmra.mrb[0].mxu0 %v373
        %v522 = vpop.f32.mrb[0].mxu0
        %v523 = vadd.f32 %v347, %v522
        %v524 = vpop.f32.mrb[0].mxu0
        %v525 = vadd.f32 %v351, %v524
        %v526 = vpop.f32.mrb[0].mxu0
        %v527 = vadd.f32 %v347, %v526
        %v528 = vpop.f32.mrb[0].mxu0
        %v529 = vadd.f32 %v351, %v528
        %530 = vdwg.mxu0
        %v531 = vld [vmem:[#allocation9] sm:$0xff]
        %v532 = vld [vmem:[#allocation9 + $0x8] sm:$0xff]
        %535 = vrot.lane.b32.xlu0 %v493, 64
        %v536 = vpop.permute.xlu0 %535
        %537 = vrot.lane.b32.xlu0 %v497, 64
        %v538 = vpop.permute.xlu0 %537
        %vm539 = vcmask 130048
        %v540 = vsel %vm539, %v493, 0
        %v542 = vsel %vm539, %v497, 0
        %v544 = vsel %vm539, %v536, 0
        %v546 = vsel %vm539, %v538, 0
        %548 = vmatprep.subr.mxu0 0.0
        %549 = vmatpush1.xpose.msra.mxu0 %v544
        %550 = vmatprep.subr.mxu0 0.0
        %551 = vmatpush1.xpose.msra.mxu0 %v546
        %552 = vmatprep.subr.mxu0 0.0
        %553 = vmatpush1.xpose.msra.mxu0 0.0
        %554 = vmatprep.subr.mxu0 0.0
        %555 = vmatpush1.xpose.msra.mxu0 0.0
        %556 = vmatprep.subr.mxu0 0.0
        %557 = vmatpush1.xpose.msra.mxu0 0.0
        %558 = vmatprep.subr.mxu0 0.0
        %559 = vmatpush1.xpose.msra.mxu0 0.0
        %560 = vmatprep.subr.mxu0 0.0
        %561 = vmatpush1.xpose.msra.mxu0 0.0
        %562 = vmatprep.subr.mxu0 0.0
        %563 = vmatpush1.xpose.msra.mxu0 0.0
        %564 = vmatprep.subr.mxu0 0.0
        %565 = vmatpush1.xpose.msra.mxu0 0.0
        %566 = vmatprep.subr.mxu0 0.0
        %567 = vmatpush1.xpose.msra.mxu0 0.0
        %568 = vmatprep.subr.mxu0 0.0
        %569 = vmatpush1.xpose.msra.mxu0 0.0
        %570 = vmatprep.subr.mxu0 0.0
        %571 = vmatpush1.xpose.msra.mxu0 0.0
        %572 = vmatprep.subr.mxu0 0.0
        %573 = vmatpush1.xpose.msra.mxu0 0.0
        %574 = vmatprep.subr.mxu0 0.0
        %575 = vmatpush1.xpose.msra.mxu0 0.0
        %576 = vmatprep.subr.mxu0 0.0
        %577 = vmatpush1.xpose.msra.mxu0 0.0
        %578 = vmatprep.subr.mxu0 0.0
        %579 = vmatpush1.xpose.msra.mxu0 0.0
        %580 = vmatprep.subr.mxu0 0.0
        %581 = vmatpush1.xpose.msra.mxu0 0.0
        %582 = vmatprep.subr.mxu0 0.0
        %583 = vmatpush1.xpose.msra.mxu0 0.0
        %584 = vmatprep.subr.mxu0 0.0
        %585 = vmatpush1.xpose.msra.mxu0 0.0
        %586 = vmatprep.subr.mxu0 0.0
        %587 = vmatpush1.xpose.msra.mxu0 0.0
        %588 = vmatprep.subr.mxu0 0.0
        %589 = vmatpush1.xpose.msra.mxu0 0.0
        %590 = vmatprep.subr.mxu0 0.0
        %591 = vmatpush1.xpose.msra.mxu0 0.0
        %592 = vmatprep.subr.mxu0 0.0
        %593 = vmatpush1.xpose.msra.mxu0 0.0
        %594 = vmatprep.subr.mxu0 0.0
        %595 = vmatpush1.xpose.msra.mxu0 0.0
        %596 = vmatprep.subr.mxu0 0.0
        %597 = vmatpush1.xpose.msra.mxu0 0.0
        %598 = vmatprep.subr.mxu0 0.0
        %599 = vmatpush1.xpose.msra.mxu0 0.0
        %600 = vmatprep.subr.mxu0 0.0
        %601 = vmatpush1.xpose.msra.mxu0 0.0
        %602 = vmatprep.subr.mxu0 0.0
        %603 = vmatpush1.xpose.msra.mxu0 0.0
        %604 = vmatprep.subr.mxu0 0.0
        %605 = vmatpush1.xpose.msra.mxu0 0.0
        %606 = vmatprep.subr.mxu0 0.0
        %607 = vmatpush1.xpose.msra.mxu0 0.0
        %608 = vmatprep.subr.mxu0 0.0
        %609 = vmatpush1.xpose.msra.mxu0 0.0
        %610 = vmatprep.subr.mxu0 0.0
        %611 = vmatpush1.xpose.msra.mxu0 0.0
        %612 = vmatprep.mubr.f32.mxu0 0.0
        %613 = vmatmul.mubr.f32.gmra.mrb[0].mxu0 %v540
        %v614 = vpop.f32.mrb[0].mxu0
        %v615 = vadd.f32 %v531, %v614
        %v616 = vpop.f32.mrb[0].mxu0
        %617 = vmatprep.mubr.f32.mxu0 0.0
        %618 = vmatmul.mubr.f32.gmra.mrb[0].mxu0 %v542
        %v619 = vpop.f32.mrb[0].mxu0
        %v620 = vadd.f32 %v532, %v619
        %v621 = vpop.f32.mrb[0].mxu0
        %622 = vdwg.mxu0
        %625 = vrot.lane.b32.xlu0 %v503, 64
        %v626 = vpop.permute.xlu0 %625
        %627 = vrot.lane.b32.xlu0 %v507, 64
        %v628 = vpop.permute.xlu0 %627
        %v629 = vsel %vm539, %v503, 0
        %v631 = vsel %vm539, %v507, 0
        %v633 = vsel %vm539, %v626, 0
        %v635 = vsel %vm539, %v628, 0
        %637 = vmatprep.subr.mxu0 0.0
        %638 = vmatpush1.xpose.msra.mxu0 %v633
        %639 = vmatprep.subr.mxu0 0.0
        %640 = vmatpush1.xpose.msra.mxu0 %v635
        %641 = vmatprep.subr.mxu0 0.0
        %642 = vmatpush1.xpose.msra.mxu0 0.0
        %643 = vmatprep.subr.mxu0 0.0
        %644 = vmatpush1.xpose.msra.mxu0 0.0
        %645 = vmatprep.subr.mxu0 0.0
        %646 = vmatpush1.xpose.msra.mxu0 0.0
        %647 = vmatprep.subr.mxu0 0.0
        %648 = vmatpush1.xpose.msra.mxu0 0.0
        %649 = vmatprep.subr.mxu0 0.0
        %650 = vmatpush1.xpose.msra.mxu0 0.0
        %651 = vmatprep.subr.mxu0 0.0
        %652 = vmatpush1.xpose.msra.mxu0 0.0
        %653 = vmatprep.subr.mxu0 0.0
        %654 = vmatpush1.xpose.msra.mxu0 0.0
        %655 = vmatprep.subr.mxu0 0.0
        %656 = vmatpush1.xpose.msra.mxu0 0.0
        %657 = vmatprep.subr.mxu0 0.0
        %658 = vmatpush1.xpose.msra.mxu0 0.0
        %659 = vmatprep.subr.mxu0 0.0
        %660 = vmatpush1.xpose.msra.mxu0 0.0
        %661 = vmatprep.subr.mxu0 0.0
        %662 = vmatpush1.xpose.msra.mxu0 0.0
        %663 = vmatprep.subr.mxu0 0.0
        %664 = vmatpush1.xpose.msra.mxu0 0.0
        %665 = vmatprep.subr.mxu0 0.0
        %666 = vmatpush1.xpose.msra.mxu0 0.0
        %667 = vmatprep.subr.mxu0 0.0
        %668 = vmatpush1.xpose.msra.mxu0 0.0
        %669 = vmatprep.subr.mxu0 0.0
        %670 = vmatpush1.xpose.msra.mxu0 0.0
        %671 = vmatprep.subr.mxu0 0.0
        %672 = vmatpush1.xpose.msra.mxu0 0.0
        %673 = vmatprep.subr.mxu0 0.0
        %674 = vmatpush1.xpose.msra.mxu0 0.0
        %675 = vmatprep.subr.mxu0 0.0
        %676 = vmatpush1.xpose.msra.mxu0 0.0
        %677 = vmatprep.subr.mxu0 0.0
        %678 = vmatpush1.xpose.msra.mxu0 0.0
        %679 = vmatprep.subr.mxu0 0.0
        %680 = vmatpush1.xpose.msra.mxu0 0.0
        %681 = vmatprep.subr.mxu0 0.0
        %682 = vmatpush1.xpose.msra.mxu0 0.0
        %683 = vmatprep.subr.mxu0 0.0
        %684 = vmatpush1.xpose.msra.mxu0 0.0
        %685 = vmatprep.subr.mxu0 0.0
        %686 = vmatpush1.xpose.msra.mxu0 0.0
        %687 = vmatprep.subr.mxu0 0.0
        %688 = vmatpush1.xpose.msra.mxu0 0.0
        %689 = vmatprep.subr.mxu0 0.0
        %690 = vmatpush1.xpose.msra.mxu0 0.0
        %691 = vmatprep.subr.mxu0 0.0
        %692 = vmatpush1.xpose.msra.mxu0 0.0
        %693 = vmatprep.subr.mxu0 0.0
        %694 = vmatpush1.xpose.msra.mxu0 0.0
        %695 = vmatprep.subr.mxu0 0.0
        %696 = vmatpush1.xpose.msra.mxu0 0.0
        %697 = vmatprep.subr.mxu0 0.0
        %698 = vmatpush1.xpose.msra.mxu0 0.0
        %699 = vmatprep.subr.mxu0 0.0
        %700 = vmatpush1.xpose.msra.mxu0 0.0
        %701 = vmatprep.mubr.f32.mxu0 0.0
        %702 = vmatmul.mubr.f32.gmra.mrb[0].mxu0 %v629
        %v703 = vpop.f32.mrb[0].mxu0
        %v704 = vadd.f32 %v531, %v703
        %v705 = vpop.f32.mrb[0].mxu0
        %706 = vmatprep.mubr.f32.mxu0 0.0
        %707 = vmatmul.mubr.f32.gmra.mrb[0].mxu0 %v631
        %v708 = vpop.f32.mrb[0].mxu0
        %v709 = vadd.f32 %v532, %v708
        %v710 = vpop.f32.mrb[0].mxu0
        %711 = vdwg.mxu0
        %714 = vrot.lane.b32.xlu0 %v513, 64
        %v715 = vpop.permute.xlu0 %714
        %716 = vrot.lane.b32.xlu0 %v517, 64
        %v717 = vpop.permute.xlu0 %716
        %v718 = vsel %vm539, %v513, 0
        %v720 = vsel %vm539, %v517, 0
        %v722 = vsel %vm539, %v715, 0
        %v724 = vsel %vm539, %v717, 0
        %726 = vmatprep.subr.mxu0 0.0
        %727 = vmatpush1.xpose.msra.mxu0 %v722
        %728 = vmatprep.subr.mxu0 0.0
        %729 = vmatpush1.xpose.msra.mxu0 %v724
        %730 = vmatprep.subr.mxu0 0.0
        %731 = vmatpush1.xpose.msra.mxu0 0.0
        %732 = vmatprep.subr.mxu0 0.0
        %733 = vmatpush1.xpose.msra.mxu0 0.0
        %734 = vmatprep.subr.mxu0 0.0
        %735 = vmatpush1.xpose.msra.mxu0 0.0
        %736 = vmatprep.subr.mxu0 0.0
        %737 = vmatpush1.xpose.msra.mxu0 0.0
        %738 = vmatprep.subr.mxu0 0.0
        %739 = vmatpush1.xpose.msra.mxu0 0.0
        %740 = vmatprep.subr.mxu0 0.0
        %741 = vmatpush1.xpose.msra.mxu0 0.0
        %742 = vmatprep.subr.mxu0 0.0
        %743 = vmatpush1.xpose.msra.mxu0 0.0
        %744 = vmatprep.subr.mxu0 0.0
        %745 = vmatpush1.xpose.msra.mxu0 0.0
        %746 = vmatprep.subr.mxu0 0.0
        %747 = vmatpush1.xpose.msra.mxu0 0.0
        %748 = vmatprep.subr.mxu0 0.0
        %749 = vmatpush1.xpose.msra.mxu0 0.0
        %750 = vmatprep.subr.mxu0 0.0
        %751 = vmatpush1.xpose.msra.mxu0 0.0
        %752 = vmatprep.subr.mxu0 0.0
        %753 = vmatpush1.xpose.msra.mxu0 0.0
        %754 = vmatprep.subr.mxu0 0.0
        %755 = vmatpush1.xpose.msra.mxu0 0.0
        %756 = vmatprep.subr.mxu0 0.0
        %757 = vmatpush1.xpose.msra.mxu0 0.0
        %758 = vmatprep.subr.mxu0 0.0
        %759 = vmatpush1.xpose.msra.mxu0 0.0
        %760 = vmatprep.subr.mxu0 0.0
        %761 = vmatpush1.xpose.msra.mxu0 0.0
        %762 = vmatprep.subr.mxu0 0.0
        %763 = vmatpush1.xpose.msra.mxu0 0.0
        %764 = vmatprep.subr.mxu0 0.0
        %765 = vmatpush1.xpose.msra.mxu0 0.0
        %766 = vmatprep.subr.mxu0 0.0
        %767 = vmatpush1.xpose.msra.mxu0 0.0
        %768 = vmatprep.subr.mxu0 0.0
        %769 = vmatpush1.xpose.msra.mxu0 0.0
        %770 = vmatprep.subr.mxu0 0.0
        %771 = vmatpush1.xpose.msra.mxu0 0.0
        %772 = vmatprep.subr.mxu0 0.0
        %773 = vmatpush1.xpose.msra.mxu0 0.0
        %774 = vmatprep.subr.mxu0 0.0
        %775 = vmatpush1.xpose.msra.mxu0 0.0
        %776 = vmatprep.subr.mxu0 0.0
        %777 = vmatpush1.xpose.msra.mxu0 0.0
        %778 = vmatprep.subr.mxu0 0.0
        %779 = vmatpush1.xpose.msra.mxu0 0.0
        %780 = vmatprep.subr.mxu0 0.0
        %781 = vmatpush1.xpose.msra.mxu0 0.0
        %782 = vmatprep.subr.mxu0 0.0
        %783 = vmatpush1.xpose.msra.mxu0 0.0
        %784 = vmatprep.subr.mxu0 0.0
        %785 = vmatpush1.xpose.msra.mxu0 0.0
        %786 = vmatprep.subr.mxu0 0.0
        %787 = vmatpush1.xpose.msra.mxu0 0.0
        %788 = vmatprep.subr.mxu0 0.0
        %789 = vmatpush1.xpose.msra.mxu0 0.0
        %790 = vmatprep.mubr.f32.mxu0 0.0
        %791 = vmatmul.mubr.f32.gmra.mrb[0].mxu0 %v718
        %v792 = vpop.f32.mrb[0].mxu0
        %v793 = vadd.f32 %v531, %v792
        %v794 = vpop.f32.mrb[0].mxu0
        %795 = vmatprep.mubr.f32.mxu0 0.0
        %796 = vmatmul.mubr.f32.gmra.mrb[0].mxu0 %v720
        %v797 = vpop.f32.mrb[0].mxu0
        %v798 = vadd.f32 %v532, %v797
        %v799 = vpop.f32.mrb[0].mxu0
        %800 = vdwg.mxu0
        %803 = vrot.lane.b32.xlu0 %v523, 64
        %v804 = vpop.permute.xlu0 %803
        %805 = vrot.lane.b32.xlu0 %v527, 64
        %v806 = vpop.permute.xlu0 %805
        %v807 = vsel %vm539, %v523, 0
        %v809 = vsel %vm539, %v527, 0
        %v811 = vsel %vm539, %v804, 0
        %v813 = vsel %vm539, %v806, 0
        %815 = vmatprep.subr.mxu0 0.0
        %816 = vmatpush1.xpose.msra.mxu0 %v811
        %817 = vmatprep.subr.mxu0 0.0
        %818 = vmatpush1.xpose.msra.mxu0 %v813
        %819 = vmatprep.subr.mxu0 0.0
        %820 = vmatpush1.xpose.msra.mxu0 0.0
        %821 = vmatprep.subr.mxu0 0.0
        %822 = vmatpush1.xpose.msra.mxu0 0.0
        %823 = vmatprep.subr.mxu0 0.0
        %824 = vmatpush1.xpose.msra.mxu0 0.0
        %825 = vmatprep.subr.mxu0 0.0
        %826 = vmatpush1.xpose.msra.mxu0 0.0
        %827 = vmatprep.subr.mxu0 0.0
        %828 = vmatpush1.xpose.msra.mxu0 0.0
        %829 = vmatprep.subr.mxu0 0.0
        %830 = vmatpush1.xpose.msra.mxu0 0.0
        %831 = vmatprep.subr.mxu0 0.0
        %832 = vmatpush1.xpose.msra.mxu0 0.0
        %833 = vmatprep.subr.mxu0 0.0
        %834 = vmatpush1.xpose.msra.mxu0 0.0
        %835 = vmatprep.subr.mxu0 0.0
        %836 = vmatpush1.xpose.msra.mxu0 0.0
        %837 = vmatprep.subr.mxu0 0.0
        %838 = vmatpush1.xpose.msra.mxu0 0.0
        %839 = vmatprep.subr.mxu0 0.0
        %840 = vmatpush1.xpose.msra.mxu0 0.0
        %841 = vmatprep.subr.mxu0 0.0
        %842 = vmatpush1.xpose.msra.mxu0 0.0
        %843 = vmatprep.subr.mxu0 0.0
        %844 = vmatpush1.xpose.msra.mxu0 0.0
        %845 = vmatprep.subr.mxu0 0.0
        %846 = vmatpush1.xpose.msra.mxu0 0.0
        %847 = vmatprep.subr.mxu0 0.0
        %848 = vmatpush1.xpose.msra.mxu0 0.0
        %849 = vmatprep.subr.mxu0 0.0
        %850 = vmatpush1.xpose.msra.mxu0 0.0
        %851 = vmatprep.subr.mxu0 0.0
        %852 = vmatpush1.xpose.msra.mxu0 0.0
        %853 = vmatprep.subr.mxu0 0.0
        %854 = vmatpush1.xpose.msra.mxu0 0.0
        %855 = vmatprep.subr.mxu0 0.0
        %856 = vmatpush1.xpose.msra.mxu0 0.0
        %857 = vmatprep.subr.mxu0 0.0
        %858 = vmatpush1.xpose.msra.mxu0 0.0
        %859 = vmatprep.subr.mxu0 0.0
        %860 = vmatpush1.xpose.msra.mxu0 0.0
        %861 = vmatprep.subr.mxu0 0.0
        %862 = vmatpush1.xpose.msra.mxu0 0.0
        %863 = vmatprep.subr.mxu0 0.0
        %864 = vmatpush1.xpose.msra.mxu0 0.0
        %865 = vmatprep.subr.mxu0 0.0
        %866 = vmatpush1.xpose.msra.mxu0 0.0
        %867 = vmatprep.subr.mxu0 0.0
        %868 = vmatpush1.xpose.msra.mxu0 0.0
        %869 = vmatprep.subr.mxu0 0.0
        %870 = vmatpush1.xpose.msra.mxu0 0.0
        %871 = vmatprep.subr.mxu0 0.0
        %872 = vmatpush1.xpose.msra.mxu0 0.0
        %873 = vmatprep.subr.mxu0 0.0
        %874 = vmatpush1.xpose.msra.mxu0 0.0
        %875 = vmatprep.subr.mxu0 0.0
        %876 = vmatpush1.xpose.msra.mxu0 0.0
        %877 = vmatprep.subr.mxu0 0.0
        %878 = vmatpush1.xpose.msra.mxu0 0.0
        %879 = vmatprep.mubr.f32.mxu0 0.0
        %880 = vmatmul.mubr.f32.gmra.mrb[0].mxu0 %v807
        %v881 = vpop.f32.mrb[0].mxu0
        %v882 = vadd.f32 %v531, %v881
        %v883 = vpop.f32.mrb[0].mxu0
        %884 = vmatprep.mubr.f32.mxu0 0.0
        %885 = vmatmul.mubr.f32.gmra.mrb[0].mxu0 %v809
        %v886 = vpop.f32.mrb[0].mxu0
        %v887 = vadd.f32 %v532, %v886
        %v888 = vpop.f32.mrb[0].mxu0
        %889 = vdwg.mxu0
        %v890 = vsel %vm539, %v615, -inf
        %891 = vmax.xlane.f32.xlu0 %v890
        %v892 = vpop.xlane.xlu0 %891
        %v893 = vsel %vm539, %v620, -inf
        %894 = vmax.xlane.f32.xlu0 %v893
        %v895 = vpop.xlane.xlu0 %894
        %v896 = vsel %vm539, %v704, -inf
        %897 = vmax.xlane.f32.xlu0 %v896
        %v898 = vpop.xlane.xlu0 %897
        %v899 = vsel %vm539, %v709, -inf
        %900 = vmax.xlane.f32.xlu0 %v899
        %v901 = vpop.xlane.xlu0 %900
        %v902 = vsel %vm539, %v793, -inf
        %903 = vmax.xlane.f32.xlu0 %v902
        %v904 = vpop.xlane.xlu0 %903
        %v905 = vsel %vm539, %v798, -inf
        %906 = vmax.xlane.f32.xlu0 %v905
        %v907 = vpop.xlane.xlu0 %906
        %v908 = vsel %vm539, %v882, -inf
        %909 = vmax.xlane.f32.xlu0 %v908
        %v910 = vpop.xlane.xlu0 %909
        %v911 = vsel %vm539, %v887, -inf
        %912 = vmax.xlane.f32.xlu0 %v911
        %v913 = vpop.xlane.xlu0 %912
        %v914 = vsub.f32 %v615, %v892
        %v915 = vsub.f32 %v620, %v895
        %v916 = vsub.f32 %v704, %v898
        %v917 = vsub.f32 %v709, %v901
        %v918 = vsub.f32 %v793, %v904
        %v919 = vsub.f32 %v798, %v907
        %v920 = vsub.f32 %v882, %v910
        %v921 = vsub.f32 %v887, %v913
        %v922 = vmul.f32 %v914, 1.442695
        %v923 = vpow.pop %v922
        %v924 = vmul.f32 %v915, 1.442695
        %v925 = vpow.pop %v924
        %v926 = vmul.f32 %v916, 1.442695
        %v927 = vpow.pop %v926
        %v928 = vmul.f32 %v917, 1.442695
        %v929 = vpow.pop %v928
        %v930 = vmul.f32 %v918, 1.442695
        %v931 = vpow.pop %v930
        %v932 = vmul.f32 %v919, 1.442695
        %v933 = vpow.pop %v932
        %v934 = vmul.f32 %v920, 1.442695
        %v935 = vpow.pop %v934
        %v936 = vmul.f32 %v921, 1.442695
        %v937 = vpow.pop %v936
        %v938 = vsel %vm539, %v923, 0.0
        %939 = vadd.xlane.f32.xlu0 %v938
        %v940 = vpop.xlane.xlu0 %939
        %v941 = vsel %vm539, %v925, 0.0
        %942 = vadd.xlane.f32.xlu0 %v941
        %v943 = vpop.xlane.xlu0 %942
        %v944 = vsel %vm539, %v927, 0.0
        %945 = vadd.xlane.f32.xlu0 %v944
        %v946 = vpop.xlane.xlu0 %945
        %v947 = vsel %vm539, %v929, 0.0
        %948 = vadd.xlane.f32.xlu0 %v947
        %v949 = vpop.xlane.xlu0 %948
        %v950 = vsel %vm539, %v931, 0.0
        %951 = vadd.xlane.f32.xlu0 %v950
        %v952 = vpop.xlane.xlu0 %951
        %v953 = vsel %vm539, %v933, 0.0
        %954 = vadd.xlane.f32.xlu0 %v953
        %v955 = vpop.xlane.xlu0 %954
        %v956 = vsel %vm539, %v935, 0.0
        %957 = vadd.xlane.f32.xlu0 %v956
        %v958 = vpop.xlane.xlu0 %957
        %v959 = vsel %vm539, %v937, 0.0
        %960 = vadd.xlane.f32.xlu0 %v959
        %v961 = vpop.xlane.xlu0 %960
        %v962 = vrcp.pop %v940
        %v963 = vrcp.pop %v943
        %v964 = vrcp.pop %v946
        %v965 = vrcp.pop %v949
        %v966 = vrcp.pop %v952
        %v967 = vrcp.pop %v955
        %v968 = vrcp.pop %v958
        %v969 = vrcp.pop %v961
        %v970 = vmul.f32 %v923, %v962
        %v971 = vmul.f32 %v925, %v963
        %v972 = vmul.f32 %v927, %v964
        %v973 = vmul.f32 %v929, %v965
        %v974 = vmul.f32 %v931, %v966
        %v975 = vmul.f32 %v933, %v967
        %v976 = vmul.f32 %v935, %v968
        %v977 = vmul.f32 %v937, %v969
        %v979 = vsel %vm539, %v970, 0
        %v982 = vsel %vm539, %v971, 0
        %984 = vmatprep.subr.mxu0 0.0
        %985 = vmatpush1.msra.mxu0 %v495
        %986 = vmatprep.subr.mxu0 0.0
        %987 = vmatpush1.msra.mxu0 %v499
        %988 = vmatprep.subr.mxu0 0.0
        %989 = vmatpush1.msra.mxu0 0.0
        %990 = vmatprep.subr.mxu0 0.0
        %991 = vmatpush1.msra.mxu0 0.0
        %992 = vmatprep.subr.mxu0 0.0
        %993 = vmatpush1.msra.mxu0 0.0
        %994 = vmatprep.subr.mxu0 0.0
        %995 = vmatpush1.msra.mxu0 0.0
        %996 = vmatprep.subr.mxu0 0.0
        %997 = vmatpush1.msra.mxu0 0.0
        %998 = vmatprep.subr.mxu0 0.0
        %999 = vmatpush1.msra.mxu0 0.0
        %1000 = vmatprep.subr.mxu0 0.0
        %1001 = vmatpush1.msra.mxu0 0.0
        %1002 = vmatprep.subr.mxu0 0.0
        %1003 = vmatpush1.msra.mxu0 0.0
        %1004 = vmatprep.subr.mxu0 0.0
        %1005 = vmatpush1.msra.mxu0 0.0
        %1006 = vmatprep.subr.mxu0 0.0
        %1007 = vmatpush1.msra.mxu0 0.0
        %1008 = vmatprep.subr.mxu0 0.0
        %1009 = vmatpush1.msra.mxu0 0.0
        %1010 = vmatprep.subr.mxu0 0.0
        %1011 = vmatpush1.msra.mxu0 0.0
        %1012 = vmatprep.subr.mxu0 0.0
        %1013 = vmatpush1.msra.mxu0 0.0
        %1014 = vmatprep.subr.mxu0 0.0
        %1015 = vmatpush1.msra.mxu0 0.0
        %1016 = vmatprep.subr.mxu0 0.0
        %1017 = vmatpush1.msra.mxu0 0.0
        %1018 = vmatprep.subr.mxu0 0.0
        %1019 = vmatpush1.msra.mxu0 0.0
        %1020 = vmatprep.subr.mxu0 0.0
        %1021 = vmatpush1.msra.mxu0 0.0
        %1022 = vmatprep.subr.mxu0 0.0
        %1023 = vmatpush1.msra.mxu0 0.0
        %1024 = vmatprep.subr.mxu0 0.0
        %1025 = vmatpush1.msra.mxu0 0.0
        %1026 = vmatprep.subr.mxu0 0.0
        %1027 = vmatpush1.msra.mxu0 0.0
        %1028 = vmatprep.subr.mxu0 0.0
        %1029 = vmatpush1.msra.mxu0 0.0
        %1030 = vmatprep.subr.mxu0 0.0
        %1031 = vmatpush1.msra.mxu0 0.0
        %1032 = vmatprep.subr.mxu0 0.0
        %1033 = vmatpush1.msra.mxu0 0.0
        %1034 = vmatprep.subr.mxu0 0.0
        %1035 = vmatpush1.msra.mxu0 0.0
        %1036 = vmatprep.subr.mxu0 0.0
        %1037 = vmatpush1.msra.mxu0 0.0
        %1038 = vmatprep.subr.mxu0 0.0
        %1039 = vmatpush1.msra.mxu0 0.0
        %1040 = vmatprep.subr.mxu0 0.0
        %1041 = vmatpush1.msra.mxu0 0.0
        %1042 = vmatprep.subr.mxu0 0.0
        %1043 = vmatpush1.msra.mxu0 0.0
        %1044 = vmatprep.subr.mxu0 0.0
        %1045 = vmatpush1.msra.mxu0 0.0
        %1046 = vmatprep.subr.mxu0 0.0
        %1047 = vmatpush1.msra.mxu0 0.0
        %1048 = vmatprep.mubr.f32.mxu0 0.0
        %1049 = vmatmul.mubr.f32.gmra.mrb[0].mxu0 %v979
        %v1050 = vpop.f32.mrb[0].mxu0
        %v1051 = vadd.f32 0.0, %v1050
        %v1052 = vpop.f32.mrb[0].mxu0
        %1053 = vmatprep.mubr.f32.mxu0 0.0
        %1054 = vmatmul.mubr.f32.gmra.mrb[0].mxu0 %v982
        %v1055 = vpop.f32.mrb[0].mxu0
        %v1056 = vadd.f32 0.0, %v1055
        %v1057 = vpop.f32.mrb[0].mxu0
        %1058 = vdwg.mxu0
        %v1060 = vsel %vm539, %v972, 0
        %v1063 = vsel %vm539, %v973, 0
        %1065 = vmatprep.subr.mxu0 0.0
        %1066 = vmatpush1.msra.mxu0 %v505
        %1067 = vmatprep.subr.mxu0 0.0
        %1068 = vmatpush1.msra.mxu0 %v509
        %1069 = vmatprep.subr.mxu0 0.0
        %1070 = vmatpush1.msra.mxu0 0.0
        %1071 = vmatprep.subr.mxu0 0.0
        %1072 = vmatpush1.msra.mxu0 0.0
        %1073 = vmatprep.subr.mxu0 0.0
        %1074 = vmatpush1.msra.mxu0 0.0
        %1075 = vmatprep.subr.mxu0 0.0
        %1076 = vmatpush1.msra.mxu0 0.0
        %1077 = vmatprep.subr.mxu0 0.0
        %1078 = vmatpush1.msra.mxu0 0.0
        %1079 = vmatprep.subr.mxu0 0.0
        %1080 = vmatpush1.msra.mxu0 0.0
        %1081 = vmatprep.subr.mxu0 0.0
        %1082 = vmatpush1.msra.mxu0 0.0
        %1083 = vmatprep.subr.mxu0 0.0
        %1084 = vmatpush1.msra.mxu0 0.0
        %1085 = vmatprep.subr.mxu0 0.0
        %1086 = vmatpush1.msra.mxu0 0.0
        %1087 = vmatprep.subr.mxu0 0.0
        %1088 = vmatpush1.msra.mxu0 0.0
        %1089 = vmatprep.subr.mxu0 0.0
        %1090 = vmatpush1.msra.mxu0 0.0
        %1091 = vmatprep.subr.mxu0 0.0
        %1092 = vmatpush1.msra.mxu0 0.0
        %1093 = vmatprep.subr.mxu0 0.0
        %1094 = vmatpush1.msra.mxu0 0.0
        %1095 = vmatprep.subr.mxu0 0.0
        %1096 = vmatpush1.msra.mxu0 0.0
        %1097 = vmatprep.subr.mxu0 0.0
        %1098 = vmatpush1.msra.mxu0 0.0
        %1099 = vmatprep.subr.mxu0 0.0
        %1100 = vmatpush1.msra.mxu0 0.0
        %1101 = vmatprep.subr.mxu0 0.0
        %1102 = vmatpush1.msra.mxu0 0.0
        %1103 = vmatprep.subr.mxu0 0.0
        %1104 = vmatpush1.msra.mxu0 0.0
        %1105 = vmatprep.subr.mxu0 0.0
        %1106 = vmatpush1.msra.mxu0 0.0
        %1107 = vmatprep.subr.mxu0 0.0
        %1108 = vmatpush1.msra.mxu0 0.0
        %1109 = vmatprep.subr.mxu0 0.0
        %1110 = vmatpush1.msra.mxu0 0.0
        %1111 = vmatprep.subr.mxu0 0.0
        %1112 = vmatpush1.msra.mxu0 0.0
        %1113 = vmatprep.subr.mxu0 0.0
        %1114 = vmatpush1.msra.mxu0 0.0
        %1115 = vmatprep.subr.mxu0 0.0
        %1116 = vmatpush1.msra.mxu0 0.0
        %1117 = vmatprep.subr.mxu0 0.0
        %1118 = vmatpush1.msra.mxu0 0.0
        %1119 = vmatprep.subr.mxu0 0.0
        %1120 = vmatpush1.msra.mxu0 0.0
        %1121 = vmatprep.subr.mxu0 0.0
        %1122 = vmatpush1.msra.mxu0 0.0
        %1123 = vmatprep.subr.mxu0 0.0
        %1124 = vmatpush1.msra.mxu0 0.0
        %1125 = vmatprep.subr.mxu0 0.0
        %1126 = vmatpush1.msra.mxu0 0.0
        %1127 = vmatprep.subr.mxu0 0.0
        %1128 = vmatpush1.msra.mxu0 0.0
        %1129 = vmatprep.mubr.f32.mxu0 0.0
        %1130 = vmatmul.mubr.f32.gmra.mrb[0].mxu0 %v1060
        %v1131 = vpop.f32.mrb[0].mxu0
        %v1132 = vadd.f32 0.0, %v1131
        %v1133 = vpop.f32.mrb[0].mxu0
        %1134 = vmatprep.mubr.f32.mxu0 0.0
        %1135 = vmatmul.mubr.f32.gmra.mrb[0].mxu0 %v1063
        %v1136 = vpop.f32.mrb[0].mxu0
        %v1137 = vadd.f32 0.0, %v1136
        %v1138 = vpop.f32.mrb[0].mxu0
        %1139 = vdwg.mxu0
        %v1141 = vsel %vm539, %v974, 0
        %v1144 = vsel %vm539, %v975, 0
        %1146 = vmatprep.subr.mxu0 0.0
        %1147 = vmatpush1.msra.mxu0 %v515
        %1148 = vmatprep.subr.mxu0 0.0
        %1149 = vmatpush1.msra.mxu0 %v519
        %1150 = vmatprep.subr.mxu0 0.0
        %1151 = vmatpush1.msra.mxu0 0.0
        %1152 = vmatprep.subr.mxu0 0.0
        %1153 = vmatpush1.msra.mxu0 0.0
        %1154 = vmatprep.subr.mxu0 0.0
        %1155 = vmatpush1.msra.mxu0 0.0
        %1156 = vmatprep.subr.mxu0 0.0
        %1157 = vmatpush1.msra.mxu0 0.0
        %1158 = vmatprep.subr.mxu0 0.0
        %1159 = vmatpush1.msra.mxu0 0.0
        %1160 = vmatprep.subr.mxu0 0.0
        %1161 = vmatpush1.msra.mxu0 0.0
        %1162 = vmatprep.subr.mxu0 0.0
        %1163 = vmatpush1.msra.mxu0 0.0
        %1164 = vmatprep.subr.mxu0 0.0
        %1165 = vmatpush1.msra.mxu0 0.0
        %1166 = vmatprep.subr.mxu0 0.0
        %1167 = vmatpush1.msra.mxu0 0.0
        %1168 = vmatprep.subr.mxu0 0.0
        %1169 = vmatpush1.msra.mxu0 0.0
        %1170 = vmatprep.subr.mxu0 0.0
        %1171 = vmatpush1.msra.mxu0 0.0
        %1172 = vmatprep.subr.mxu0 0.0
        %1173 = vmatpush1.msra.mxu0 0.0
        %1174 = vmatprep.subr.mxu0 0.0
        %1175 = vmatpush1.msra.mxu0 0.0
        %1176 = vmatprep.subr.mxu0 0.0
        %1177 = vmatpush1.msra.mxu0 0.0
        %1178 = vmatprep.subr.mxu0 0.0
        %1179 = vmatpush1.msra.mxu0 0.0
        %1180 = vmatprep.subr.mxu0 0.0
        %1181 = vmatpush1.msra.mxu0 0.0
        %1182 = vmatprep.subr.mxu0 0.0
        %1183 = vmatpush1.msra.mxu0 0.0
        %1184 = vmatprep.subr.mxu0 0.0
        %1185 = vmatpush1.msra.mxu0 0.0
        %1186 = vmatprep.subr.mxu0 0.0
        %1187 = vmatpush1.msra.mxu0 0.0
        %1188 = vmatprep.subr.mxu0 0.0
        %1189 = vmatpush1.msra.mxu0 0.0
        %1190 = vmatprep.subr.mxu0 0.0
        %1191 = vmatpush1.msra.mxu0 0.0
        %1192 = vmatprep.subr.mxu0 0.0
        %1193 = vmatpush1.msra.mxu0 0.0
        %1194 = vmatprep.subr.mxu0 0.0
        %1195 = vmatpush1.msra.mxu0 0.0
        %1196 = vmatprep.subr.mxu0 0.0
        %1197 = vmatpush1.msra.mxu0 0.0
        %1198 = vmatprep.subr.mxu0 0.0
        %1199 = vmatpush1.msra.mxu0 0.0
        %1200 = vmatprep.subr.mxu0 0.0
        %1201 = vmatpush1.msra.mxu0 0.0
        %1202 = vmatprep.subr.mxu0 0.0
        %1203 = vmatpush1.msra.mxu0 0.0
        %1204 = vmatprep.subr.mxu0 0.0
        %1205 = vmatpush1.msra.mxu0 0.0
        %1206 = vmatprep.subr.mxu0 0.0
        %1207 = vmatpush1.msra.mxu0 0.0
        %1208 = vmatprep.subr.mxu0 0.0
        %1209 = vmatpush1.msra.mxu0 0.0
        %1210 = vmatprep.mubr.f32.mxu0 0.0
        %1211 = vmatmul.mubr.f32.gmra.mrb[0].mxu0 %v1141
        %v1212 = vpop.f32.mrb[0].mxu0
        %v1213 = vadd.f32 0.0, %v1212
        %v1214 = vpop.f32.mrb[0].mxu0
        %1215 = vmatprep.mubr.f32.mxu0 0.0
        %1216 = vmatmul.mubr.f32.gmra.mrb[0].mxu0 %v1144
        %v1217 = vpop.f32.mrb[0].mxu0
        %v1218 = vadd.f32 0.0, %v1217
        %v1219 = vpop.f32.mrb[0].mxu0
        %1220 = vdwg.mxu0
        %v1222 = vsel %vm539, %v976, 0
        %v1225 = vsel %vm539, %v977, 0
        %1227 = vmatprep.subr.mxu0 0.0
        %1228 = vmatpush1.msra.mxu0 %v525
        %1229 = vmatprep.subr.mxu0 0.0
        %1230 = vmatpush1.msra.mxu0 %v529
        %1231 = vmatprep.subr.mxu0 0.0
        %1232 = vmatpush1.msra.mxu0 0.0
        %1233 = vmatprep.subr.mxu0 0.0
        %1234 = vmatpush1.msra.mxu0 0.0
        %1235 = vmatprep.subr.mxu0 0.0
        %1236 = vmatpush1.msra.mxu0 0.0
        %1237 = vmatprep.subr.mxu0 0.0
        %1238 = vmatpush1.msra.mxu0 0.0
        %1239 = vmatprep.subr.mxu0 0.0
        %1240 = vmatpush1.msra.mxu0 0.0
        %1241 = vmatprep.subr.mxu0 0.0
        %1242 = vmatpush1.msra.mxu0 0.0
        %1243 = vmatprep.subr.mxu0 0.0
        %1244 = vmatpush1.msra.mxu0 0.0
        %1245 = vmatprep.subr.mxu0 0.0
        %1246 = vmatpush1.msra.mxu0 0.0
        %1247 = vmatprep.subr.mxu0 0.0
        %1248 = vmatpush1.msra.mxu0 0.0
        %1249 = vmatprep.subr.mxu0 0.0
        %1250 = vmatpush1.msra.mxu0 0.0
        %1251 = vmatprep.subr.mxu0 0.0
        %1252 = vmatpush1.msra.mxu0 0.0
        %1253 = vmatprep.subr.mxu0 0.0
        %1254 = vmatpush1.msra.mxu0 0.0
        %1255 = vmatprep.subr.mxu0 0.0
        %1256 = vmatpush1.msra.mxu0 0.0
        %1257 = vmatprep.subr.mxu0 0.0
        %1258 = vmatpush1.msra.mxu0 0.0
        %1259 = vmatprep.subr.mxu0 0.0
        %1260 = vmatpush1.msra.mxu0 0.0
        %1261 = vmatprep.subr.mxu0 0.0
        %1262 = vmatpush1.msra.mxu0 0.0
        %1263 = vmatprep.subr.mxu0 0.0
        %1264 = vmatpush1.msra.mxu0 0.0
        %1265 = vmatprep.subr.mxu0 0.0
        %1266 = vmatpush1.msra.mxu0 0.0
        %1267 = vmatprep.subr.mxu0 0.0
        %1268 = vmatpush1.msra.mxu0 0.0
        %1269 = vmatprep.subr.mxu0 0.0
        %1270 = vmatpush1.msra.mxu0 0.0
        %1271 = vmatprep.subr.mxu0 0.0
        %1272 = vmatpush1.msra.mxu0 0.0
        %1273 = vmatprep.subr.mxu0 0.0
        %1274 = vmatpush1.msra.mxu0 0.0
        %1275 = vmatprep.subr.mxu0 0.0
        %1276 = vmatpush1.msra.mxu0 0.0
        %1277 = vmatprep.subr.mxu0 0.0
        %1278 = vmatpush1.msra.mxu0 0.0
        %1279 = vmatprep.subr.mxu0 0.0
        %1280 = vmatpush1.msra.mxu0 0.0
        %1281 = vmatprep.subr.mxu0 0.0
        %1282 = vmatpush1.msra.mxu0 0.0
        %1283 = vmatprep.subr.mxu0 0.0
        %1284 = vmatpush1.msra.mxu0 0.0
        %1285 = vmatprep.subr.mxu0 0.0
        %1286 = vmatpush1.msra.mxu0 0.0
        %1287 = vmatprep.subr.mxu0 0.0
        %1288 = vmatpush1.msra.mxu0 0.0
        %1289 = vmatprep.subr.mxu0 0.0
        %1290 = vmatpush1.msra.mxu0 0.0
        %1291 = vmatprep.mubr.f32.mxu0 0.0
        %1292 = vmatmul.mubr.f32.gmra.mrb[0].mxu0 %v1222
        %v1293 = vpop.f32.mrb[0].mxu0
        %v1294 = vadd.f32 0.0, %v1293
        %v1295 = vpop.f32.mrb[0].mxu0
        %1296 = vmatprep.mubr.f32.mxu0 0.0
        %1297 = vmatmul.mubr.f32.gmra.mrb[0].mxu0 %v1225
        %v1298 = vpop.f32.mrb[0].mxu0
        %v1299 = vadd.f32 0.0, %v1298
        %v1300 = vpop.f32.mrb[0].mxu0
        %1301 = vdwg.mxu0
        %vm1302 = vcmask 261120
        %1303 = vst.msk [vmem:[#allocation2] sm:$0xff] %vm1302, %v1051
        %1304 = vst.msk [vmem:[#allocation2 + $0x8] sm:$0xff] %vm1302, %v1056
        %1305 = vst.msk [vmem:[#allocation2 + $0x10] sm:$0xff] %vm1302, %v1132
        %1306 = vst.msk [vmem:[#allocation2 + $0x18] sm:$0xff] %vm1302, %v1137
        %1307 = vst.msk [vmem:[#allocation2 + $0x20] sm:$0xff] %vm1302, %v1213
        %1308 = vst.msk [vmem:[#allocation2 + $0x28] sm:$0xff] %vm1302, %v1218
        %1309 = vst.msk [vmem:[#allocation2 + $0x30] sm:$0xff] %vm1302, %v1294
        %1310 = vst.msk [vmem:[#allocation2 + $0x38] sm:$0xff] %vm1302, %v1299
        %s1311 = scalar_lea.vmem [#allocation9], 16
        %v1312 = vld [vmem:[%s1311] sm:$0xff]
        %v1313 = vld [vmem:[%s1311 + $0x8] sm:$0xff]
        %1314 = vrot.lane.b32.xlu0 %v493, 112
        %v1315 = vpop.permute.xlu0 %1314
        %1316 = vrot.lane.b32.xlu0 %v497, 112
        %v1317 = vpop.permute.xlu0 %1316
        %1318 = vrot.lane.b32.xlu0 %v493, 48
        %v1319 = vpop.permute.xlu0 %1318
        %1320 = vrot.lane.b32.xlu0 %v497, 48
        %v1321 = vpop.permute.xlu0 %1320
        %v1322 = vsel %vm539, %v1315, 0
        %v1324 = vsel %vm539, %v1317, 0
        %v1326 = vsel %vm539, %v1319, 0
        %v1328 = vsel %vm539, %v1321, 0
        %1330 = vmatprep.subr.mxu0 0.0
        %1331 = vmatpush1.xpose.msra.mxu0 %v1326
        %1332 = vmatprep.subr.mxu0 0.0
        %1333 = vmatpush1.xpose.msra.mxu0 %v1328
        %1334 = vmatprep.subr.mxu0 0.0
        %1335 = vmatpush1.xpose.msra.mxu0 0.0
        %1336 = vmatprep.subr.mxu0 0.0
        %1337 = vmatpush1.xpose.msra.mxu0 0.0
        %1338 = vmatprep.subr.mxu0 0.0
        %1339 = vmatpush1.xpose.msra.mxu0 0.0
        %1340 = vmatprep.subr.mxu0 0.0
        %1341 = vmatpush1.xpose.msra.mxu0 0.0
        %1342 = vmatprep.subr.mxu0 0.0
        %1343 = vmatpush1.xpose.msra.mxu0 0.0
        %1344 = vmatprep.subr.mxu0 0.0
        %1345 = vmatpush1.xpose.msra.mxu0 0.0
        %1346 = vmatprep.subr.mxu0 0.0
        %1347 = vmatpush1.xpose.msra.mxu0 0.0
        %1348 = vmatprep.subr.mxu0 0.0
        %1349 = vmatpush1.xpose.msra.mxu0 0.0
        %1350 = vmatprep.subr.mxu0 0.0
        %1351 = vmatpush1.xpose.msra.mxu0 0.0
        %1352 = vmatprep.subr.mxu0 0.0
        %1353 = vmatpush1.xpose.msra.mxu0 0.0
        %1354 = vmatprep.subr.mxu0 0.0
        %1355 = vmatpush1.xpose.msra.mxu0 0.0
        %1356 = vmatprep.subr.mxu0 0.0
        %1357 = vmatpush1.xpose.msra.mxu0 0.0
        %1358 = vmatprep.subr.mxu0 0.0
        %1359 = vmatpush1.xpose.msra.mxu0 0.0
        %1360 = vmatprep.subr.mxu0 0.0
        %1361 = vmatpush1.xpose.msra.mxu0 0.0
        %1362 = vmatprep.subr.mxu0 0.0
        %1363 = vmatpush1.xpose.msra.mxu0 0.0
        %1364 = vmatprep.subr.mxu0 0.0
        %1365 = vmatpush1.xpose.msra.mxu0 0.0
        %1366 = vmatprep.subr.mxu0 0.0
        %1367 = vmatpush1.xpose.msra.mxu0 0.0
        %1368 = vmatprep.subr.mxu0 0.0
        %1369 = vmatpush1.xpose.msra.mxu0 0.0
        %1370 = vmatprep.subr.mxu0 0.0
        %1371 = vmatpush1.xpose.msra.mxu0 0.0
        %1372 = vmatprep.subr.mxu0 0.0
        %1373 = vmatpush1.xpose.msra.mxu0 0.0
        %1374 = vmatprep.subr.mxu0 0.0
        %1375 = vmatpush1.xpose.msra.mxu0 0.0
        %1376 = vmatprep.subr.mxu0 0.0
        %1377 = vmatpush1.xpose.msra.mxu0 0.0
        %1378 = vmatprep.subr.mxu0 0.0
        %1379 = vmatpush1.xpose.msra.mxu0 0.0
        %1380 = vmatprep.subr.mxu0 0.0
        %1381 = vmatpush1.xpose.msra.mxu0 0.0
        %1382 = vmatprep.subr.mxu0 0.0
        %1383 = vmatpush1.xpose.msra.mxu0 0.0
        %1384 = vmatprep.subr.mxu0 0.0
        %1385 = vmatpush1.xpose.msra.mxu0 0.0
        %1386 = vmatprep.subr.mxu0 0.0
        %1387 = vmatpush1.xpose.msra.mxu0 0.0
        %1388 = vmatprep.subr.mxu0 0.0
        %1389 = vmatpush1.xpose.msra.mxu0 0.0
        %1390 = vmatprep.subr.mxu0 0.0
        %1391 = vmatpush1.xpose.msra.mxu0 0.0
        %1392 = vmatprep.subr.mxu0 0.0
        %1393 = vmatpush1.xpose.msra.mxu0 0.0
        %1394 = vmatprep.mubr.f32.mxu0 0.0
        %1395 = vmatmul.mubr.f32.gmra.mrb[0].mxu0 %v1322
        %v1396 = vpop.f32.mrb[0].mxu0
        %v1397 = vadd.f32 %v1312, %v1396
        %v1398 = vpop.f32.mrb[0].mxu0
        %1399 = vmatprep.mubr.f32.mxu0 0.0
        %1400 = vmatmul.mubr.f32.gmra.mrb[0].mxu0 %v1324
        %v1401 = vpop.f32.mrb[0].mxu0
        %v1402 = vadd.f32 %v1313, %v1401
        %v1403 = vpop.f32.mrb[0].mxu0
        %1404 = vdwg.mxu0
        %1405 = vrot.lane.b32.xlu0 %v503, 112
        %v1406 = vpop.permute.xlu0 %1405
        %1407 = vrot.lane.b32.xlu0 %v507, 112
        %v1408 = vpop.permute.xlu0 %1407
        %1409 = vrot.lane.b32.xlu0 %v503, 48
        %v1410 = vpop.permute.xlu0 %1409
        %1411 = vrot.lane.b32.xlu0 %v507, 48
        %v1412 = vpop.permute.xlu0 %1411
        %v1413 = vsel %vm539, %v1406, 0
        %v1415 = vsel %vm539, %v1408, 0
        %v1417 = vsel %vm539, %v1410, 0
        %v1419 = vsel %vm539, %v1412, 0
        %1421 = vmatprep.subr.mxu0 0.0
        %1422 = vmatpush1.xpose.msra.mxu0 %v1417
        %1423 = vmatprep.subr.mxu0 0.0
        %1424 = vmatpush1.xpose.msra.mxu0 %v1419
        %1425 = vmatprep.subr.mxu0 0.0
        %1426 = vmatpush1.xpose.msra.mxu0 0.0
        %1427 = vmatprep.subr.mxu0 0.0
        %1428 = vmatpush1.xpose.msra.mxu0 0.0
        %1429 = vmatprep.subr.mxu0 0.0
        %1430 = vmatpush1.xpose.msra.mxu0 0.0
        %1431 = vmatprep.subr.mxu0 0.0
        %1432 = vmatpush1.xpose.msra.mxu0 0.0
        %1433 = vmatprep.subr.mxu0 0.0
        %1434 = vmatpush1.xpose.msra.mxu0 0.0
        %1435 = vmatprep.subr.mxu0 0.0
        %1436 = vmatpush1.xpose.msra.mxu0 0.0
        %1437 = vmatprep.subr.mxu0 0.0
        %1438 = vmatpush1.xpose.msra.mxu0 0.0
        %1439 = vmatprep.subr.mxu0 0.0
        %1440 = vmatpush1.xpose.msra.mxu0 0.0
        %1441 = vmatprep.subr.mxu0 0.0
        %1442 = vmatpush1.xpose.msra.mxu0 0.0
        %1443 = vmatprep.subr.mxu0 0.0
        %1444 = vmatpush1.xpose.msra.mxu0 0.0
        %1445 = vmatprep.subr.mxu0 0.0
        %1446 = vmatpush1.xpose.msra.mxu0 0.0
        %1447 = vmatprep.subr.mxu0 0.0
        %1448 = vmatpush1.xpose.msra.mxu0 0.0
        %1449 = vmatprep.subr.mxu0 0.0
        %1450 = vmatpush1.xpose.msra.mxu0 0.0
        %1451 = vmatprep.subr.mxu0 0.0
        %1452 = vmatpush1.xpose.msra.mxu0 0.0
        %1453 = vmatprep.subr.mxu0 0.0
        %1454 = vmatpush1.xpose.msra.mxu0 0.0
        %1455 = vmatprep.subr.mxu0 0.0
        %1456 = vmatpush1.xpose.msra.mxu0 0.0
        %1457 = vmatprep.subr.mxu0 0.0
        %1458 = vmatpush1.xpose.msra.mxu0 0.0
        %1459 = vmatprep.subr.mxu0 0.0
        %1460 = vmatpush1.xpose.msra.mxu0 0.0
        %1461 = vmatprep.subr.mxu0 0.0
        %1462 = vmatpush1.xpose.msra.mxu0 0.0
        %1463 = vmatprep.subr.mxu0 0.0
        %1464 = vmatpush1.xpose.msra.mxu0 0.0
        %1465 = vmatprep.subr.mxu0 0.0
        %1466 = vmatpush1.xpose.msra.mxu0 0.0
        %1467 = vmatprep.subr.mxu0 0.0
        %1468 = vmatpush1.xpose.msra.mxu0 0.0
        %1469 = vmatprep.subr.mxu0 0.0
        %1470 = vmatpush1.xpose.msra.mxu0 0.0
        %1471 = vmatprep.subr.mxu0 0.0
        %1472 = vmatpush1.xpose.msra.mxu0 0.0
        %1473 = vmatprep.subr.mxu0 0.0
        %1474 = vmatpush1.xpose.msra.mxu0 0.0
        %1475 = vmatprep.subr.mxu0 0.0
        %1476 = vmatpush1.xpose.msra.mxu0 0.0
        %1477 = vmatprep.subr.mxu0 0.0
        %1478 = vmatpush1.xpose.msra.mxu0 0.0
        %1479 = vmatprep.subr.mxu0 0.0
        %1480 = vmatpush1.xpose.msra.mxu0 0.0
        %1481 = vmatprep.subr.mxu0 0.0
        %1482 = vmatpush1.xpose.msra.mxu0 0.0
        %1483 = vmatprep.subr.mxu0 0.0
        %1484 = vmatpush1.xpose.msra.mxu0 0.0
        %1485 = vmatprep.mubr.f32.mxu0 0.0
        %1486 = vmatmul.mubr.f32.gmra.mrb[0].mxu0 %v1413
        %v1487 = vpop.f32.mrb[0].mxu0
        %v1488 = vadd.f32 %v1312, %v1487
        %v1489 = vpop.f32.mrb[0].mxu0
        %1490 = vmatprep.mubr.f32.mxu0 0.0
        %1491 = vmatmul.mubr.f32.gmra.mrb[0].mxu0 %v1415
        %v1492 = vpop.f32.mrb[0].mxu0
        %v1493 = vadd.f32 %v1313, %v1492
        %v1494 = vpop.f32.mrb[0].mxu0
        %1495 = vdwg.mxu0
        %1496 = vrot.lane.b32.xlu0 %v513, 112
        %v1497 = vpop.permute.xlu0 %1496
        %1498 = vrot.lane.b32.xlu0 %v517, 112
        %v1499 = vpop.permute.xlu0 %1498
        %1500 = vrot.lane.b32.xlu0 %v513, 48
        %v1501 = vpop.permute.xlu0 %1500
        %1502 = vrot.lane.b32.xlu0 %v517, 48
        %v1503 = vpop.permute.xlu0 %1502
        %v1504 = vsel %vm539, %v1497, 0
        %v1506 = vsel %vm539, %v1499, 0
        %v1508 = vsel %vm539, %v1501, 0
        %v1510 = vsel %vm539, %v1503, 0
        %1512 = vmatprep.subr.mxu0 0.0
        %1513 = vmatpush1.xpose.msra.mxu0 %v1508
        %1514 = vmatprep.subr.mxu0 0.0
        %1515 = vmatpush1.xpose.msra.mxu0 %v1510
        %1516 = vmatprep.subr.mxu0 0.0
        %1517 = vmatpush1.xpose.msra.mxu0 0.0
        %1518 = vmatprep.subr.mxu0 0.0
        %1519 = vmatpush1.xpose.msra.mxu0 0.0
        %1520 = vmatprep.subr.mxu0 0.0
        %1521 = vmatpush1.xpose.msra.mxu0 0.0
        %1522 = vmatprep.subr.mxu0 0.0
        %1523 = vmatpush1.xpose.msra.mxu0 0.0
        %1524 = vmatprep.subr.mxu0 0.0
        %1525 = vmatpush1.xpose.msra.mxu0 0.0
        %1526 = vmatprep.subr.mxu0 0.0
        %1527 = vmatpush1.xpose.msra.mxu0 0.0
        %1528 = vmatprep.subr.mxu0 0.0
        %1529 = vmatpush1.xpose.msra.mxu0 0.0
        %1530 = vmatprep.subr.mxu0 0.0
        %1531 = vmatpush1.xpose.msra.mxu0 0.0
        %1532 = vmatprep.subr.mxu0 0.0
        %1533 = vmatpush1.xpose.msra.mxu0 0.0
        %1534 = vmatprep.subr.mxu0 0.0
        %1535 = vmatpush1.xpose.msra.mxu0 0.0
        %1536 = vmatprep.subr.mxu0 0.0
        %1537 = vmatpush1.xpose.msra.mxu0 0.0
        %1538 = vmatprep.subr.mxu0 0.0
        %1539 = vmatpush1.xpose.msra.mxu0 0.0
        %1540 = vmatprep.subr.mxu0 0.0
        %1541 = vmatpush1.xpose.msra.mxu0 0.0
        %1542 = vmatprep.subr.mxu0 0.0
        %1543 = vmatpush1.xpose.msra.mxu0 0.0
        %1544 = vmatprep.subr.mxu0 0.0
        %1545 = vmatpush1.xpose.msra.mxu0 0.0
        %1546 = vmatprep.subr.mxu0 0.0
        %1547 = vmatpush1.xpose.msra.mxu0 0.0
        %1548 = vmatprep.subr.mxu0 0.0
        %1549 = vmatpush1.xpose.msra.mxu0 0.0
        %1550 = vmatprep.subr.mxu0 0.0
        %1551 = vmatpush1.xpose.msra.mxu0 0.0
        %1552 = vmatprep.subr.mxu0 0.0
        %1553 = vmatpush1.xpose.msra.mxu0 0.0
        %1554 = vmatprep.subr.mxu0 0.0
        %1555 = vmatpush1.xpose.msra.mxu0 0.0
        %1556 = vmatprep.subr.mxu0 0.0
        %1557 = vmatpush1.xpose.msra.mxu0 0.0
        %1558 = vmatprep.subr.mxu0 0.0
        %1559 = vmatpush1.xpose.msra.mxu0 0.0
        %1560 = vmatprep.subr.mxu0 0.0
        %1561 = vmatpush1.xpose.msra.mxu0 0.0
        %1562 = vmatprep.subr.mxu0 0.0
        %1563 = vmatpush1.xpose.msra.mxu0 0.0
        %1564 = vmatprep.subr.mxu0 0.0
        %1565 = vmatpush1.xpose.msra.mxu0 0.0
        %1566 = vmatprep.subr.mxu0 0.0
        %1567 = vmatpush1.xpose.msra.mxu0 0.0
        %1568 = vmatprep.subr.mxu0 0.0
        %1569 = vmatpush1.xpose.msra.mxu0 0.0
        %1570 = vmatprep.subr.mxu0 0.0
        %1571 = vmatpush1.xpose.msra.mxu0 0.0
        %1572 = vmatprep.subr.mxu0 0.0
        %1573 = vmatpush1.xpose.msra.mxu0 0.0
        %1574 = vmatprep.subr.mxu0 0.0
        %1575 = vmatpush1.xpose.msra.mxu0 0.0
        %1576 = vmatprep.mubr.f32.mxu0 0.0
        %1577 = vmatmul.mubr.f32.gmra.mrb[0].mxu0 %v1504
        %v1578 = vpop.f32.mrb[0].mxu0
        %v1579 = vadd.f32 %v1312, %v1578
        %v1580 = vpop.f32.mrb[0].mxu0
        %1581 = vmatprep.mubr.f32.mxu0 0.0
        %1582 = vmatmul.mubr.f32.gmra.mrb[0].mxu0 %v1506
        %v1583 = vpop.f32.mrb[0].mxu0
        %v1584 = vadd.f32 %v1313, %v1583
        %v1585 = vpop.f32.mrb[0].mxu0
        %1586 = vdwg.mxu0
        %1587 = vrot.lane.b32.xlu0 %v523, 112
        %v1588 = vpop.permute.xlu0 %1587
        %1589 = vrot.lane.b32.xlu0 %v527, 112
        %v1590 = vpop.permute.xlu0 %1589
        %1591 = vrot.lane.b32.xlu0 %v523, 48
        %v1592 = vpop.permute.xlu0 %1591
        %1593 = vrot.lane.b32.xlu0 %v527, 48
        %v1594 = vpop.permute.xlu0 %1593
        %v1595 = vsel %vm539, %v1588, 0
        %v1597 = vsel %vm539, %v1590, 0
        %v1599 = vsel %vm539, %v1592, 0
        %v1601 = vsel %vm539, %v1594, 0
        %1603 = vmatprep.subr.mxu0 0.0
        %1604 = vmatpush1.xpose.msra.mxu0 %v1599
        %1605 = vmatprep.subr.mxu0 0.0
        %1606 = vmatpush1.xpose.msra.mxu0 %v1601
        %1607 = vmatprep.subr.mxu0 0.0
        %1608 = vmatpush1.xpose.msra.mxu0 0.0
        %1609 = vmatprep.subr.mxu0 0.0
        %1610 = vmatpush1.xpose.msra.mxu0 0.0
        %1611 = vmatprep.subr.mxu0 0.0
        %1612 = vmatpush1.xpose.msra.mxu0 0.0
        %1613 = vmatprep.subr.mxu0 0.0
        %1614 = vmatpush1.xpose.msra.mxu0 0.0
        %1615 = vmatprep.subr.mxu0 0.0
        %1616 = vmatpush1.xpose.msra.mxu0 0.0
        %1617 = vmatprep.subr.mxu0 0.0
        %1618 = vmatpush1.xpose.msra.mxu0 0.0
        %1619 = vmatprep.subr.mxu0 0.0
        %1620 = vmatpush1.xpose.msra.mxu0 0.0
        %1621 = vmatprep.subr.mxu0 0.0
        %1622 = vmatpush1.xpose.msra.mxu0 0.0
        %1623 = vmatprep.subr.mxu0 0.0
        %1624 = vmatpush1.xpose.msra.mxu0 0.0
        %1625 = vmatprep.subr.mxu0 0.0
        %1626 = vmatpush1.xpose.msra.mxu0 0.0
        %1627 = vmatprep.subr.mxu0 0.0
        %1628 = vmatpush1.xpose.msra.mxu0 0.0
        %1629 = vmatprep.subr.mxu0 0.0
        %1630 = vmatpush1.xpose.msra.mxu0 0.0
        %1631 = vmatprep.subr.mxu0 0.0
        %1632 = vmatpush1.xpose.msra.mxu0 0.0
        %1633 = vmatprep.subr.mxu0 0.0
        %1634 = vmatpush1.xpose.msra.mxu0 0.0
        %1635 = vmatprep.subr.mxu0 0.0
        %1636 = vmatpush1.xpose.msra.mxu0 0.0
        %1637 = vmatprep.subr.mxu0 0.0
        %1638 = vmatpush1.xpose.msra.mxu0 0.0
        %1639 = vmatprep.subr.mxu0 0.0
        %1640 = vmatpush1.xpose.msra.mxu0 0.0
        %1641 = vmatprep.subr.mxu0 0.0
        %1642 = vmatpush1.xpose.msra.mxu0 0.0
        %1643 = vmatprep.subr.mxu0 0.0
        %1644 = vmatpush1.xpose.msra.mxu0 0.0
        %1645 = vmatprep.subr.mxu0 0.0
        %1646 = vmatpush1.xpose.msra.mxu0 0.0
        %1647 = vmatprep.subr.mxu0 0.0
        %1648 = vmatpush1.xpose.msra.mxu0 0.0
        %1649 = vmatprep.subr.mxu0 0.0
        %1650 = vmatpush1.xpose.msra.mxu0 0.0
        %1651 = vmatprep.subr.mxu0 0.0
        %1652 = vmatpush1.xpose.msra.mxu0 0.0
        %1653 = vmatprep.subr.mxu0 0.0
        %1654 = vmatpush1.xpose.msra.mxu0 0.0
        %1655 = vmatprep.subr.mxu0 0.0
        %1656 = vmatpush1.xpose.msra.mxu0 0.0
        %1657 = vmatprep.subr.mxu0 0.0
        %1658 = vmatpush1.xpose.msra.mxu0 0.0
        %1659 = vmatprep.subr.mxu0 0.0
        %1660 = vmatpush1.xpose.msra.mxu0 0.0
        %1661 = vmatprep.subr.mxu0 0.0
        %1662 = vmatpush1.xpose.msra.mxu0 0.0
        %1663 = vmatprep.subr.mxu0 0.0
        %1664 = vmatpush1.xpose.msra.mxu0 0.0
        %1665 = vmatprep.subr.mxu0 0.0
        %1666 = vmatpush1.xpose.msra.mxu0 0.0
        %1667 = vmatprep.mubr.f32.mxu0 0.0
        %1668 = vmatmul.mubr.f32.gmra.mrb[0].mxu0 %v1595
        %v1669 = vpop.f32.mrb[0].mxu0
        %v1670 = vadd.f32 %v1312, %v1669
        %v1671 = vpop.f32.mrb[0].mxu0
        %1672 = vmatprep.mubr.f32.mxu0 0.0
        %1673 = vmatmul.mubr.f32.gmra.mrb[0].mxu0 %v1597
        %v1674 = vpop.f32.mrb[0].mxu0
        %v1675 = vadd.f32 %v1313, %v1674
        %v1676 = vpop.f32.mrb[0].mxu0
        %1677 = vdwg.mxu0
        %v1678 = vsel %vm539, %v1397, -inf
        %1679 = vmax.xlane.f32.xlu0 %v1678
        %v1680 = vpop.xlane.xlu0 %1679
        %v1681 = vsel %vm539, %v1402, -inf
        %1682 = vmax.xlane.f32.xlu0 %v1681
        %v1683 = vpop.xlane.xlu0 %1682
        %v1684 = vsel %vm539, %v1488, -inf
        %1685 = vmax.xlane.f32.xlu0 %v1684
        %v1686 = vpop.xlane.xlu0 %1685
        %v1687 = vsel %vm539, %v1493, -inf
        %1688 = vmax.xlane.f32.xlu0 %v1687
        %v1689 = vpop.xlane.xlu0 %1688
        %v1690 = vsel %vm539, %v1579, -inf
        %1691 = vmax.xlane.f32.xlu0 %v1690
        %v1692 = vpop.xlane.xlu0 %1691
        %v1693 = vsel %vm539, %v1584, -inf
        %1694 = vmax.xlane.f32.xlu0 %v1693
        %v1695 = vpop.xlane.xlu0 %1694
        %v1696 = vsel %vm539, %v1670, -inf
        %1697 = vmax.xlane.f32.xlu0 %v1696
        %v1698 = vpop.xlane.xlu0 %1697
        %v1699 = vsel %vm539, %v1675, -inf
        %1700 = vmax.xlane.f32.xlu0 %v1699
        %v1701 = vpop.xlane.xlu0 %1700
        %v1702 = vsub.f32 %v1397, %v1680
        %v1703 = vsub.f32 %v1402, %v1683
        %v1704 = vsub.f32 %v1488, %v1686
        %v1705 = vsub.f32 %v1493, %v1689
        %v1706 = vsub.f32 %v1579, %v1692
        %v1707 = vsub.f32 %v1584, %v1695
        %v1708 = vsub.f32 %v1670, %v1698
        %v1709 = vsub.f32 %v1675, %v1701
        %v1710 = vmul.f32 %v1702, 1.442695
        %v1711 = vpow.pop %v1710
        %v1712 = vmul.f32 %v1703, 1.442695
        %v1713 = vpow.pop %v1712
        %v1714 = vmul.f32 %v1704, 1.442695
        %v1715 = vpow.pop %v1714
        %v1716 = vmul.f32 %v1705, 1.442695
        %v1717 = vpow.pop %v1716
        %v1718 = vmul.f32 %v1706, 1.442695
        %v1719 = vpow.pop %v1718
        %v1720 = vmul.f32 %v1707, 1.442695
        %v1721 = vpow.pop %v1720
        %v1722 = vmul.f32 %v1708, 1.442695
        %v1723 = vpow.pop %v1722
        %v1724 = vmul.f32 %v1709, 1.442695
        %v1725 = vpow.pop %v1724
        %v1726 = vsel %vm539, %v1711, 0.0
        %1727 = vadd.xlane.f32.xlu0 %v1726
        %v1728 = vpop.xlane.xlu0 %1727
        %v1729 = vsel %vm539, %v1713, 0.0
        %1730 = vadd.xlane.f32.xlu0 %v1729
        %v1731 = vpop.xlane.xlu0 %1730
        %v1732 = vsel %vm539, %v1715, 0.0
        %1733 = vadd.xlane.f32.xlu0 %v1732
        %v1734 = vpop.xlane.xlu0 %1733
        %v1735 = vsel %vm539, %v1717, 0.0
        %1736 = vadd.xlane.f32.xlu0 %v1735
        %v1737 = vpop.xlane.xlu0 %1736
        %v1738 = vsel %vm539, %v1719, 0.0
        %1739 = vadd.xlane.f32.xlu0 %v1738
        %v1740 = vpop.xlane.xlu0 %1739
        %v1741 = vsel %vm539, %v1721, 0.0
        %1742 = vadd.xlane.f32.xlu0 %v1741
        %v1743 = vpop.xlane.xlu0 %1742
        %v1744 = vsel %vm539, %v1723, 0.0
        %1745 = vadd.xlane.f32.xlu0 %v1744
        %v1746 = vpop.xlane.xlu0 %1745
        %v1747 = vsel %vm539, %v1725, 0.0
        %1748 = vadd.xlane.f32.xlu0 %v1747
        %v1749 = vpop.xlane.xlu0 %1748
        %v1750 = vrcp.pop %v1728
        %v1751 = vrcp.pop %v1731
        %v1752 = vrcp.pop %v1734
        %v1753 = vrcp.pop %v1737
        %v1754 = vrcp.pop %v1740
        %v1755 = vrcp.pop %v1743
        %v1756 = vrcp.pop %v1746
        %v1757 = vrcp.pop %v1749
        %v1758 = vmul.f32 %v1711, %v1750
        %v1759 = vmul.f32 %v1713, %v1751
        %v1760 = vmul.f32 %v1715, %v1752
        %v1761 = vmul.f32 %v1717, %v1753
        %v1762 = vmul.f32 %v1719, %v1754
        %v1763 = vmul.f32 %v1721, %v1755
        %v1764 = vmul.f32 %v1723, %v1756
        %v1765 = vmul.f32 %v1725, %v1757
        %1768 = vrot.lane.b32.xlu0 %v495, 96
        %v1769 = vpop.permute.xlu0 %1768
        %1770 = vrot.lane.b32.xlu0 %v499, 96
        %v1771 = vpop.permute.xlu0 %1770
        %v1775 = vsel %vm539, %v1758, 0
        %v1778 = vsel %vm539, %v1759, 0
        %1780 = vmatprep.subr.mxu0 0.0
        %1781 = vmatpush1.msra.mxu0 %v1769
        %1782 = vmatprep.subr.mxu0 0.0
        %1783 = vmatpush1.msra.mxu0 %v1771
        %1784 = vmatprep.subr.mxu0 0.0
        %1785 = vmatpush1.msra.mxu0 0.0
        %1786 = vmatprep.subr.mxu0 0.0
        %1787 = vmatpush1.msra.mxu0 0.0
        %1788 = vmatprep.subr.mxu0 0.0
        %1789 = vmatpush1.msra.mxu0 0.0
        %1790 = vmatprep.subr.mxu0 0.0
        %1791 = vmatpush1.msra.mxu0 0.0
        %1792 = vmatprep.subr.mxu0 0.0
        %1793 = vmatpush1.msra.mxu0 0.0
        %1794 = vmatprep.subr.mxu0 0.0
        %1795 = vmatpush1.msra.mxu0 0.0
        %1796 = vmatprep.subr.mxu0 0.0
        %1797 = vmatpush1.msra.mxu0 0.0
        %1798 = vmatprep.subr.mxu0 0.0
        %1799 = vmatpush1.msra.mxu0 0.0
        %1800 = vmatprep.subr.mxu0 0.0
        %1801 = vmatpush1.msra.mxu0 0.0
        %1802 = vmatprep.subr.mxu0 0.0
        %1803 = vmatpush1.msra.mxu0 0.0
        %1804 = vmatprep.subr.mxu0 0.0
        %1805 = vmatpush1.msra.mxu0 0.0
        %1806 = vmatprep.subr.mxu0 0.0
        %1807 = vmatpush1.msra.mxu0 0.0
        %1808 = vmatprep.subr.mxu0 0.0
        %1809 = vmatpush1.msra.mxu0 0.0
        %1810 = vmatprep.subr.mxu0 0.0
        %1811 = vmatpush1.msra.mxu0 0.0
        %1812 = vmatprep.subr.mxu0 0.0
        %1813 = vmatpush1.msra.mxu0 0.0
        %1814 = vmatprep.subr.mxu0 0.0
        %1815 = vmatpush1.msra.mxu0 0.0
        %1816 = vmatprep.subr.mxu0 0.0
        %1817 = vmatpush1.msra.mxu0 0.0
        %1818 = vmatprep.subr.mxu0 0.0
        %1819 = vmatpush1.msra.mxu0 0.0
        %1820 = vmatprep.subr.mxu0 0.0
        %1821 = vmatpush1.msra.mxu0 0.0
        %1822 = vmatprep.subr.mxu0 0.0
        %1823 = vmatpush1.msra.mxu0 0.0
        %1824 = vmatprep.subr.mxu0 0.0
        %1825 = vmatpush1.msra.mxu0 0.0
        %1826 = vmatprep.subr.mxu0 0.0
        %1827 = vmatpush1.msra.mxu0 0.0
        %1828 = vmatprep.subr.mxu0 0.0
        %1829 = vmatpush1.msra.mxu0 0.0
        %1830 = vmatprep.subr.mxu0 0.0
        %1831 = vmatpush1.msra.mxu0 0.0
        %1832 = vmatprep.subr.mxu0 0.0
        %1833 = vmatpush1.msra.mxu0 0.0
        %1834 = vmatprep.subr.mxu0 0.0
        %1835 = vmatpush1.msra.mxu0 0.0
        %1836 = vmatprep.subr.mxu0 0.0
        %1837 = vmatpush1.msra.mxu0 0.0
        %1838 = vmatprep.subr.mxu0 0.0
        %1839 = vmatpush1.msra.mxu0 0.0
        %1840 = vmatprep.subr.mxu0 0.0
        %1841 = vmatpush1.msra.mxu0 0.0
        %1842 = vmatprep.subr.mxu0 0.0
        %1843 = vmatpush1.msra.mxu0 0.0
        %1844 = vmatprep.mubr.f32.mxu0 0.0
        %1845 = vmatmul.mubr.f32.gmra.mrb[0].mxu0 %v1775
        %v1846 = vpop.f32.mrb[0].mxu0
        %v1847 = vadd.f32 0.0, %v1846
        %v1848 = vpop.f32.mrb[0].mxu0
        %1849 = vmatprep.mubr.f32.mxu0 0.0
        %1850 = vmatmul.mubr.f32.gmra.mrb[0].mxu0 %v1778
        %v1851 = vpop.f32.mrb[0].mxu0
        %v1852 = vadd.f32 0.0, %v1851
        %v1853 = vpop.f32.mrb[0].mxu0
        %1854 = vdwg.mxu0
        %1857 = vrot.lane.b32.xlu0 %v505, 96
        %v1858 = vpop.permute.xlu0 %1857
        %1859 = vrot.lane.b32.xlu0 %v509, 96
        %v1860 = vpop.permute.xlu0 %1859
        %v1864 = vsel %vm539, %v1760, 0
        %v1867 = vsel %vm539, %v1761, 0
        %1869 = vmatprep.subr.mxu0 0.0
        %1870 = vmatpush1.msra.mxu0 %v1858
        %1871 = vmatprep.subr.mxu0 0.0
        %1872 = vmatpush1.msra.mxu0 %v1860
        %1873 = vmatprep.subr.mxu0 0.0
        %1874 = vmatpush1.msra.mxu0 0.0
        %1875 = vmatprep.subr.mxu0 0.0
        %1876 = vmatpush1.msra.mxu0 0.0
        %1877 = vmatprep.subr.mxu0 0.0
        %1878 = vmatpush1.msra.mxu0 0.0
        %1879 = vmatprep.subr.mxu0 0.0
        %1880 = vmatpush1.msra.mxu0 0.0
        %1881 = vmatprep.subr.mxu0 0.0
        %1882 = vmatpush1.msra.mxu0 0.0
        %1883 = vmatprep.subr.mxu0 0.0
        %1884 = vmatpush1.msra.mxu0 0.0
        %1885 = vmatprep.subr.mxu0 0.0
        %1886 = vmatpush1.msra.mxu0 0.0
        %1887 = vmatprep.subr.mxu0 0.0
        %1888 = vmatpush1.msra.mxu0 0.0
        %1889 = vmatprep.subr.mxu0 0.0
        %1890 = vmatpush1.msra.mxu0 0.0
        %1891 = vmatprep.subr.mxu0 0.0
        %1892 = vmatpush1.msra.mxu0 0.0
        %1893 = vmatprep.subr.mxu0 0.0
        %1894 = vmatpush1.msra.mxu0 0.0
        %1895 = vmatprep.subr.mxu0 0.0
        %1896 = vmatpush1.msra.mxu0 0.0
        %1897 = vmatprep.subr.mxu0 0.0
        %1898 = vmatpush1.msra.mxu0 0.0
        %1899 = vmatprep.subr.mxu0 0.0
        %1900 = vmatpush1.msra.mxu0 0.0
        %1901 = vmatprep.subr.mxu0 0.0
        %1902 = vmatpush1.msra.mxu0 0.0
        %1903 = vmatprep.subr.mxu0 0.0
        %1904 = vmatpush1.msra.mxu0 0.0
        %1905 = vmatprep.subr.mxu0 0.0
        %1906 = vmatpush1.msra.mxu0 0.0
        %1907 = vmatprep.subr.mxu0 0.0
        %1908 = vmatpush1.msra.mxu0 0.0
        %1909 = vmatprep.subr.mxu0 0.0
        %1910 = vmatpush1.msra.mxu0 0.0
        %1911 = vmatprep.subr.mxu0 0.0
        %1912 = vmatpush1.msra.mxu0 0.0
        %1913 = vmatprep.subr.mxu0 0.0
        %1914 = vmatpush1.msra.mxu0 0.0
        %1915 = vmatprep.subr.mxu0 0.0
        %1916 = vmatpush1.msra.mxu0 0.0
        %1917 = vmatprep.subr.mxu0 0.0
        %1918 = vmatpush1.msra.mxu0 0.0
        %1919 = vmatprep.subr.mxu0 0.0
        %1920 = vmatpush1.msra.mxu0 0.0
        %1921 = vmatprep.subr.mxu0 0.0
        %1922 = vmatpush1.msra.mxu0 0.0
        %1923 = vmatprep.subr.mxu0 0.0
        %1924 = vmatpush1.msra.mxu0 0.0
        %1925 = vmatprep.subr.mxu0 0.0
        %1926 = vmatpush1.msra.mxu0 0.0
        %1927 = vmatprep.subr.mxu0 0.0
        %1928 = vmatpush1.msra.mxu0 0.0
        %1929 = vmatprep.subr.mxu0 0.0
        %1930 = vmatpush1.msra.mxu0 0.0
        %1931 = vmatprep.subr.mxu0 0.0
        %1932 = vmatpush1.msra.mxu0 0.0
        %1933 = vmatprep.mubr.f32.mxu0 0.0
        %1934 = vmatmul.mubr.f32.gmra.mrb[0].mxu0 %v1864
        %v1935 = vpop.f32.mrb[0].mxu0
        %v1936 = vadd.f32 0.0, %v1935
        %v1937 = vpop.f32.mrb[0].mxu0
        %1938 = vmatprep.mubr.f32.mxu0 0.0
        %1939 = vmatmul.mubr.f32.gmra.mrb[0].mxu0 %v1867
        %v1940 = vpop.f32.mrb[0].mxu0
        %v1941 = vadd.f32 0.0, %v1940
        %v1942 = vpop.f32.mrb[0].mxu0
        %1943 = vdwg.mxu0
        %1946 = vrot.lane.b32.xlu0 %v515, 96
        %v1947 = vpop.permute.xlu0 %1946
        %1948 = vrot.lane.b32.xlu0 %v519, 96
        %v1949 = vpop.permute.xlu0 %1948
        %v1953 = vsel %vm539, %v1762, 0
        %v1956 = vsel %vm539, %v1763, 0
        %1958 = vmatprep.subr.mxu0 0.0
        %1959 = vmatpush1.msra.mxu0 %v1947
        %1960 = vmatprep.subr.mxu0 0.0
        %1961 = vmatpush1.msra.mxu0 %v1949
        %1962 = vmatprep.subr.mxu0 0.0
        %1963 = vmatpush1.msra.mxu0 0.0
        %1964 = vmatprep.subr.mxu0 0.0
        %1965 = vmatpush1.msra.mxu0 0.0
        %1966 = vmatprep.subr.mxu0 0.0
        %1967 = vmatpush1.msra.mxu0 0.0
        %1968 = vmatprep.subr.mxu0 0.0
        %1969 = vmatpush1.msra.mxu0 0.0
        %1970 = vmatprep.subr.mxu0 0.0
        %1971 = vmatpush1.msra.mxu0 0.0
        %1972 = vmatprep.subr.mxu0 0.0
        %1973 = vmatpush1.msra.mxu0 0.0
        %1974 = vmatprep.subr.mxu0 0.0
        %1975 = vmatpush1.msra.mxu0 0.0
        %1976 = vmatprep.subr.mxu0 0.0
        %1977 = vmatpush1.msra.mxu0 0.0
        %1978 = vmatprep.subr.mxu0 0.0
        %1979 = vmatpush1.msra.mxu0 0.0
        %1980 = vmatprep.subr.mxu0 0.0
        %1981 = vmatpush1.msra.mxu0 0.0
        %1982 = vmatprep.subr.mxu0 0.0
        %1983 = vmatpush1.msra.mxu0 0.0
        %1984 = vmatprep.subr.mxu0 0.0
        %1985 = vmatpush1.msra.mxu0 0.0
        %1986 = vmatprep.subr.mxu0 0.0
        %1987 = vmatpush1.msra.mxu0 0.0
        %1988 = vmatprep.subr.mxu0 0.0
        %1989 = vmatpush1.msra.mxu0 0.0
        %1990 = vmatprep.subr.mxu0 0.0
        %1991 = vmatpush1.msra.mxu0 0.0
        %1992 = vmatprep.subr.mxu0 0.0
        %1993 = vmatpush1.msra.mxu0 0.0
        %1994 = vmatprep.subr.mxu0 0.0
        %1995 = vmatpush1.msra.mxu0 0.0
        %1996 = vmatprep.subr.mxu0 0.0
        %1997 = vmatpush1.msra.mxu0 0.0
        %1998 = vmatprep.subr.mxu0 0.0
        %1999 = vmatpush1.msra.mxu0 0.0
        %2000 = vmatprep.subr.mxu0 0.0
        %2001 = vmatpush1.msra.mxu0 0.0
        %2002 = vmatprep.subr.mxu0 0.0
        %2003 = vmatpush1.msra.mxu0 0.0
        %2004 = vmatprep.subr.mxu0 0.0
        %2005 = vmatpush1.msra.mxu0 0.0
        %2006 = vmatprep.subr.mxu0 0.0
        %2007 = vmatpush1.msra.mxu0 0.0
        %2008 = vmatprep.subr.mxu0 0.0
        %2009 = vmatpush1.msra.mxu0 0.0
        %2010 = vmatprep.subr.mxu0 0.0
        %2011 = vmatpush1.msra.mxu0 0.0
        %2012 = vmatprep.subr.mxu0 0.0
        %2013 = vmatpush1.msra.mxu0 0.0
        %2014 = vmatprep.subr.mxu0 0.0
        %2015 = vmatpush1.msra.mxu0 0.0
        %2016 = vmatprep.subr.mxu0 0.0
        %2017 = vmatpush1.msra.mxu0 0.0
        %2018 = vmatprep.subr.mxu0 0.0
        %2019 = vmatpush1.msra.mxu0 0.0
        %2020 = vmatprep.subr.mxu0 0.0
        %2021 = vmatpush1.msra.mxu0 0.0
        %2022 = vmatprep.mubr.f32.mxu0 0.0
        %2023 = vmatmul.mubr.f32.gmra.mrb[0].mxu0 %v1953
        %v2024 = vpop.f32.mrb[0].mxu0
        %v2025 = vadd.f32 0.0, %v2024
        %v2026 = vpop.f32.mrb[0].mxu0
        %2027 = vmatprep.mubr.f32.mxu0 0.0
        %2028 = vmatmul.mubr.f32.gmra.mrb[0].mxu0 %v1956
        %v2029 = vpop.f32.mrb[0].mxu0
        %v2030 = vadd.f32 0.0, %v2029
        %v2031 = vpop.f32.mrb[0].mxu0
        %2032 = vdwg.mxu0
        %2035 = vrot.lane.b32.xlu0 %v525, 96
        %v2036 = vpop.permute.xlu0 %2035
        %2037 = vrot.lane.b32.xlu0 %v529, 96
        %v2038 = vpop.permute.xlu0 %2037
        %v2042 = vsel %vm539, %v1764, 0
        %v2045 = vsel %vm539, %v1765, 0
        %2047 = vmatprep.subr.mxu0 0.0
        %2048 = vmatpush1.msra.mxu0 %v2036
        %2049 = vmatprep.subr.mxu0 0.0
        %2050 = vmatpush1.msra.mxu0 %v2038
        %2051 = vmatprep.subr.mxu0 0.0
        %2052 = vmatpush1.msra.mxu0 0.0
        %2053 = vmatprep.subr.mxu0 0.0
        %2054 = vmatpush1.msra.mxu0 0.0
        %2055 = vmatprep.subr.mxu0 0.0
        %2056 = vmatpush1.msra.mxu0 0.0
        %2057 = vmatprep.subr.mxu0 0.0
        %2058 = vmatpush1.msra.mxu0 0.0
        %2059 = vmatprep.subr.mxu0 0.0
        %2060 = vmatpush1.msra.mxu0 0.0
        %2061 = vmatprep.subr.mxu0 0.0
        %2062 = vmatpush1.msra.mxu0 0.0
        %2063 = vmatprep.subr.mxu0 0.0
        %2064 = vmatpush1.msra.mxu0 0.0
        %2065 = vmatprep.subr.mxu0 0.0
        %2066 = vmatpush1.msra.mxu0 0.0
        %2067 = vmatprep.subr.mxu0 0.0
        %2068 = vmatpush1.msra.mxu0 0.0
        %2069 = vmatprep.subr.mxu0 0.0
        %2070 = vmatpush1.msra.mxu0 0.0
        %2071 = vmatprep.subr.mxu0 0.0
        %2072 = vmatpush1.msra.mxu0 0.0
        %2073 = vmatprep.subr.mxu0 0.0
        %2074 = vmatpush1.msra.mxu0 0.0
        %2075 = vmatprep.subr.mxu0 0.0
        %2076 = vmatpush1.msra.mxu0 0.0
        %2077 = vmatprep.subr.mxu0 0.0
        %2078 = vmatpush1.msra.mxu0 0.0
        %2079 = vmatprep.subr.mxu0 0.0
        %2080 = vmatpush1.msra.mxu0 0.0
        %2081 = vmatprep.subr.mxu0 0.0
        %2082 = vmatpush1.msra.mxu0 0.0
        %2083 = vmatprep.subr.mxu0 0.0
        %2084 = vmatpush1.msra.mxu0 0.0
        %2085 = vmatprep.subr.mxu0 0.0
        %2086 = vmatpush1.msra.mxu0 0.0
        %2087 = vmatprep.subr.mxu0 0.0
        %2088 = vmatpush1.msra.mxu0 0.0
        %2089 = vmatprep.subr.mxu0 0.0
        %2090 = vmatpush1.msra.mxu0 0.0
        %2091 = vmatprep.subr.mxu0 0.0
        %2092 = vmatpush1.msra.mxu0 0.0
        %2093 = vmatprep.subr.mxu0 0.0
        %2094 = vmatpush1.msra.mxu0 0.0
        %2095 = vmatprep.subr.mxu0 0.0
        %2096 = vmatpush1.msra.mxu0 0.0
        %2097 = vmatprep.subr.mxu0 0.0
        %2098 = vmatpush1.msra.mxu0 0.0
        %2099 = vmatprep.subr.mxu0 0.0
        %2100 = vmatpush1.msra.mxu0 0.0
        %2101 = vmatprep.subr.mxu0 0.0
        %2102 = vmatpush1.msra.mxu0 0.0
        %2103 = vmatprep.subr.mxu0 0.0
        %2104 = vmatpush1.msra.mxu0 0.0
        %2105 = vmatprep.subr.mxu0 0.0
        %2106 = vmatpush1.msra.mxu0 0.0
        %2107 = vmatprep.subr.mxu0 0.0
        %2108 = vmatpush1.msra.mxu0 0.0
        %2109 = vmatprep.subr.mxu0 0.0
        %2110 = vmatpush1.msra.mxu0 0.0
        %2111 = vmatprep.mubr.f32.mxu0 0.0
        %2112 = vmatmul.mubr.f32.gmra.mrb[0].mxu0 %v2042
        %v2113 = vpop.f32.mrb[0].mxu0
        %v2114 = vadd.f32 0.0, %v2113
        %v2115 = vpop.f32.mrb[0].mxu0
        %2116 = vmatprep.mubr.f32.mxu0 0.0
        %2117 = vmatmul.mubr.f32.gmra.mrb[0].mxu0 %v2045
        %v2118 = vpop.f32.mrb[0].mxu0
        %v2119 = vadd.f32 0.0, %v2118
        %v2120 = vpop.f32.mrb[0].mxu0
        %2121 = vdwg.mxu0
        %2130 = vrot.lane.b32.xlu0 %v1847, 32
        %v2131 = vpop.permute.xlu0 %2130
        %2132 = vrot.lane.b32.xlu0 %v1852, 32
        %v2133 = vpop.permute.xlu0 %2132
        %2134 = vrot.lane.b32.xlu0 %v1936, 32
        %v2135 = vpop.permute.xlu0 %2134
        %2136 = vrot.lane.b32.xlu0 %v1941, 32
        %v2137 = vpop.permute.xlu0 %2136
        %2138 = vrot.lane.b32.xlu0 %v2025, 32
        %v2139 = vpop.permute.xlu0 %2138
        %2140 = vrot.lane.b32.xlu0 %v2030, 32
        %v2141 = vpop.permute.xlu0 %2140
        %2142 = vrot.lane.b32.xlu0 %v2114, 32
        %v2143 = vpop.permute.xlu0 %2142
        %2144 = vrot.lane.b32.xlu0 %v2119, 32
        %v2145 = vpop.permute.xlu0 %2144
        %vm2154 = vcmask 523520
        %2155 = vst.msk [vmem:[#allocation2] sm:$0xff] %vm2154, %v2131
        %2156 = vst.msk [vmem:[#allocation2 + $0x8] sm:$0xff] %vm2154, %v2133
        %2157 = vst.msk [vmem:[#allocation2 + $0x10] sm:$0xff] %vm2154, %v2135
        %2158 = vst.msk [vmem:[#allocation2 + $0x18] sm:$0xff] %vm2154, %v2137
        %2159 = vst.msk [vmem:[#allocation2 + $0x20] sm:$0xff] %vm2154, %v2139
        %2160 = vst.msk [vmem:[#allocation2 + $0x28] sm:$0xff] %vm2154, %v2141
        %2161 = vst.msk [vmem:[#allocation2 + $0x30] sm:$0xff] %vm2154, %v2143
        %2162 = vst.msk [vmem:[#allocation2 + $0x38] sm:$0xff] %vm2154, %v2145
        %s2163 = scalar_lea.vmem [#allocation9], 32
        %v2164 = vld [vmem:[%s2163] sm:$0xff]
        %v2165 = vld [vmem:[%s2163 + $0x8] sm:$0xff]
        %2166 = vrot.lane.b32.xlu0 %v493, 96
        %v2167 = vpop.permute.xlu0 %2166
        %2168 = vrot.lane.b32.xlu0 %v497, 96
        %v2169 = vpop.permute.xlu0 %2168
        %2170 = vrot.lane.b32.xlu0 %v493, 32
        %v2171 = vpop.permute.xlu0 %2170
        %2172 = vrot.lane.b32.xlu0 %v497, 32
        %v2173 = vpop.permute.xlu0 %2172
        %v2174 = vsel %vm539, %v2167, 0
        %v2176 = vsel %vm539, %v2169, 0
        %v2178 = vsel %vm539, %v2171, 0
        %v2180 = vsel %vm539, %v2173, 0
        %2182 = vmatprep.subr.mxu0 0.0
        %2183 = vmatpush1.xpose.msra.mxu0 %v2178
        %2184 = vmatprep.subr.mxu0 0.0
        %2185 = vmatpush1.xpose.msra.mxu0 %v2180
        %2186 = vmatprep.subr.mxu0 0.0
        %2187 = vmatpush1.xpose.msra.mxu0 0.0
        %2188 = vmatprep.subr.mxu0 0.0
        %2189 = vmatpush1.xpose.msra.mxu0 0.0
        %2190 = vmatprep.subr.mxu0 0.0
        %2191 = vmatpush1.xpose.msra.mxu0 0.0
        %2192 = vmatprep.subr.mxu0 0.0
        %2193 = vmatpush1.xpose.msra.mxu0 0.0
        %2194 = vmatprep.subr.mxu0 0.0
        %2195 = vmatpush1.xpose.msra.mxu0 0.0
        %2196 = vmatprep.subr.mxu0 0.0
        %2197 = vmatpush1.xpose.msra.mxu0 0.0
        %2198 = vmatprep.subr.mxu0 0.0
        %2199 = vmatpush1.xpose.msra.mxu0 0.0
        %2200 = vmatprep.subr.mxu0 0.0
        %2201 = vmatpush1.xpose.msra.mxu0 0.0
        %2202 = vmatprep.subr.mxu0 0.0
        %2203 = vmatpush1.xpose.msra.mxu0 0.0
        %2204 = vmatprep.subr.mxu0 0.0
        %2205 = vmatpush1.xpose.msra.mxu0 0.0
        %2206 = vmatprep.subr.mxu0 0.0
        %2207 = vmatpush1.xpose.msra.mxu0 0.0
        %2208 = vmatprep.subr.mxu0 0.0
        %2209 = vmatpush1.xpose.msra.mxu0 0.0
        %2210 = vmatprep.subr.mxu0 0.0
        %2211 = vmatpush1.xpose.msra.mxu0 0.0
        %2212 = vmatprep.subr.mxu0 0.0
        %2213 = vmatpush1.xpose.msra.mxu0 0.0
        %2214 = vmatprep.subr.mxu0 0.0
        %2215 = vmatpush1.xpose.msra.mxu0 0.0
        %2216 = vmatprep.subr.mxu0 0.0
        %2217 = vmatpush1.xpose.msra.mxu0 0.0
        %2218 = vmatprep.subr.mxu0 0.0
        %2219 = vmatpush1.xpose.msra.mxu0 0.0
        %2220 = vmatprep.subr.mxu0 0.0
        %2221 = vmatpush1.xpose.msra.mxu0 0.0
        %2222 = vmatprep.subr.mxu0 0.0
        %2223 = vmatpush1.xpose.msra.mxu0 0.0
        %2224 = vmatprep.subr.mxu0 0.0
        %2225 = vmatpush1.xpose.msra.mxu0 0.0
        %2226 = vmatprep.subr.mxu0 0.0
        %2227 = vmatpush1.xpose.msra.mxu0 0.0
        %2228 = vmatprep.subr.mxu0 0.0
        %2229 = vmatpush1.xpose.msra.mxu0 0.0
        %2230 = vmatprep.subr.mxu0 0.0
        %2231 = vmatpush1.xpose.msra.mxu0 0.0
        %2232 = vmatprep.subr.mxu0 0.0
        %2233 = vmatpush1.xpose.msra.mxu0 0.0
        %2234 = vmatprep.subr.mxu0 0.0
        %2235 = vmatpush1.xpose.msra.mxu0 0.0
        %2236 = vmatprep.subr.mxu0 0.0
        %2237 = vmatpush1.xpose.msra.mxu0 0.0
        %2238 = vmatprep.subr.mxu0 0.0
        %2239 = vmatpush1.xpose.msra.mxu0 0.0
        %2240 = vmatprep.subr.mxu0 0.0
        %2241 = vmatpush1.xpose.msra.mxu0 0.0
        %2242 = vmatprep.subr.mxu0 0.0
        %2243 = vmatpush1.xpose.msra.mxu0 0.0
        %2244 = vmatprep.subr.mxu0 0.0
        %2245 = vmatpush1.xpose.msra.mxu0 0.0
        %2246 = vmatprep.mubr.f32.mxu0 0.0
        %2247 = vmatmul.mubr.f32.gmra.mrb[0].mxu0 %v2174
        %v2248 = vpop.f32.mrb[0].mxu0
        %v2249 = vadd.f32 %v2164, %v2248
        %v2250 = vpop.f32.mrb[0].mxu0
        %2251 = vmatprep.mubr.f32.mxu0 0.0
        %2252 = vmatmul.mubr.f32.gmra.mrb[0].mxu0 %v2176
        %v2253 = vpop.f32.mrb[0].mxu0
        %v2254 = vadd.f32 %v2165, %v2253
        %v2255 = vpop.f32.mrb[0].mxu0
        %2256 = vdwg.mxu0
        %2257 = vrot.lane.b32.xlu0 %v503, 96
        %v2258 = vpop.permute.xlu0 %2257
        %2259 = vrot.lane.b32.xlu0 %v507, 96
        %v2260 = vpop.permute.xlu0 %2259
        %2261 = vrot.lane.b32.xlu0 %v503, 32
        %v2262 = vpop.permute.xlu0 %2261
        %2263 = vrot.lane.b32.xlu0 %v507, 32
        %v2264 = vpop.permute.xlu0 %2263
        %v2265 = vsel %vm539, %v2258, 0
        %v2267 = vsel %vm539, %v2260, 0
        %v2269 = vsel %vm539, %v2262, 0
        %v2271 = vsel %vm539, %v2264, 0
        %2273 = vmatprep.subr.mxu0 0.0
        %2274 = vmatpush1.xpose.msra.mxu0 %v2269
        %2275 = vmatprep.subr.mxu0 0.0
        %2276 = vmatpush1.xpose.msra.mxu0 %v2271
        %2277 = vmatprep.subr.mxu0 0.0
        %2278 = vmatpush1.xpose.msra.mxu0 0.0
        %2279 = vmatprep.subr.mxu0 0.0
        %2280 = vmatpush1.xpose.msra.mxu0 0.0
        %2281 = vmatprep.subr.mxu0 0.0
        %2282 = vmatpush1.xpose.msra.mxu0 0.0
        %2283 = vmatprep.subr.mxu0 0.0
        %2284 = vmatpush1.xpose.msra.mxu0 0.0
        %2285 = vmatprep.subr.mxu0 0.0
        %2286 = vmatpush1.xpose.msra.mxu0 0.0
        %2287 = vmatprep.subr.mxu0 0.0
        %2288 = vmatpush1.xpose.msra.mxu0 0.0
        %2289 = vmatprep.subr.mxu0 0.0
        %2290 = vmatpush1.xpose.msra.mxu0 0.0
        %2291 = vmatprep.subr.mxu0 0.0
        %2292 = vmatpush1.xpose.msra.mxu0 0.0
        %2293 = vmatprep.subr.mxu0 0.0
        %2294 = vmatpush1.xpose.msra.mxu0 0.0
        %2295 = vmatprep.subr.mxu0 0.0
        %2296 = vmatpush1.xpose.msra.mxu0 0.0
        %2297 = vmatprep.subr.mxu0 0.0
        %2298 = vmatpush1.xpose.msra.mxu0 0.0
        %2299 = vmatprep.subr.mxu0 0.0
        %2300 = vmatpush1.xpose.msra.mxu0 0.0
        %2301 = vmatprep.subr.mxu0 0.0
        %2302 = vmatpush1.xpose.msra.mxu0 0.0
        %2303 = vmatprep.subr.mxu0 0.0
        %2304 = vmatpush1.xpose.msra.mxu0 0.0
        %2305 = vmatprep.subr.mxu0 0.0
        %2306 = vmatpush1.xpose.msra.mxu0 0.0
        %2307 = vmatprep.subr.mxu0 0.0
        %2308 = vmatpush1.xpose.msra.mxu0 0.0
        %2309 = vmatprep.subr.mxu0 0.0
        %2310 = vmatpush1.xpose.msra.mxu0 0.0
        %2311 = vmatprep.subr.mxu0 0.0
        %2312 = vmatpush1.xpose.msra.mxu0 0.0
        %2313 = vmatprep.subr.mxu0 0.0
        %2314 = vmatpush1.xpose.msra.mxu0 0.0
        %2315 = vmatprep.subr.mxu0 0.0
        %2316 = vmatpush1.xpose.msra.mxu0 0.0
        %2317 = vmatprep.subr.mxu0 0.0
        %2318 = vmatpush1.xpose.msra.mxu0 0.0
        %2319 = vmatprep.subr.mxu0 0.0
        %2320 = vmatpush1.xpose.msra.mxu0 0.0
        %2321 = vmatprep.subr.mxu0 0.0
        %2322 = vmatpush1.xpose.msra.mxu0 0.0
        %2323 = vmatprep.subr.mxu0 0.0
        %2324 = vmatpush1.xpose.msra.mxu0 0.0
        %2325 = vmatprep.subr.mxu0 0.0
        %2326 = vmatpush1.xpose.msra.mxu0 0.0
        %2327 = vmatprep.subr.mxu0 0.0
        %2328 = vmatpush1.xpose.msra.mxu0 0.0
        %2329 = vmatprep.subr.mxu0 0.0
        %2330 = vmatpush1.xpose.msra.mxu0 0.0
        %2331 = vmatprep.subr.mxu0 0.0
        %2332 = vmatpush1.xpose.msra.mxu0 0.0
        %2333 = vmatprep.subr.mxu0 0.0
        %2334 = vmatpush1.xpose.msra.mxu0 0.0
        %2335 = vmatprep.subr.mxu0 0.0
        %2336 = vmatpush1.xpose.msra.mxu0 0.0
        %2337 = vmatprep.mubr.f32.mxu0 0.0
        %2338 = vmatmul.mubr.f32.gmra.mrb[0].mxu0 %v2265
        %v2339 = vpop.f32.mrb[0].mxu0
        %v2340 = vadd.f32 %v2164, %v2339
        %v2341 = vpop.f32.mrb[0].mxu0
        %2342 = vmatprep.mubr.f32.mxu0 0.0
        %2343 = vmatmul.mubr.f32.gmra.mrb[0].mxu0 %v2267
        %v2344 = vpop.f32.mrb[0].mxu0
        %v2345 = vadd.f32 %v2165, %v2344
        %v2346 = vpop.f32.mrb[0].mxu0
        %2347 = vdwg.mxu0
        %2348 = vrot.lane.b32.xlu0 %v513, 96
        %v2349 = vpop.permute.xlu0 %2348
        %2350 = vrot.lane.b32.xlu0 %v517, 96
        %v2351 = vpop.permute.xlu0 %2350
        %2352 = vrot.lane.b32.xlu0 %v513, 32
        %v2353 = vpop.permute.xlu0 %2352
        %2354 = vrot.lane.b32.xlu0 %v517, 32
        %v2355 = vpop.permute.xlu0 %2354
        %v2356 = vsel %vm539, %v2349, 0
        %v2358 = vsel %vm539, %v2351, 0
        %v2360 = vsel %vm539, %v2353, 0
        %v2362 = vsel %vm539, %v2355, 0
        %2364 = vmatprep.subr.mxu0 0.0
        %2365 = vmatpush1.xpose.msra.mxu0 %v2360
        %2366 = vmatprep.subr.mxu0 0.0
        %2367 = vmatpush1.xpose.msra.mxu0 %v2362
        %2368 = vmatprep.subr.mxu0 0.0
        %2369 = vmatpush1.xpose.msra.mxu0 0.0
        %2370 = vmatprep.subr.mxu0 0.0
        %2371 = vmatpush1.xpose.msra.mxu0 0.0
        %2372 = vmatprep.subr.mxu0 0.0
        %2373 = vmatpush1.xpose.msra.mxu0 0.0
        %2374 = vmatprep.subr.mxu0 0.0
        %2375 = vmatpush1.xpose.msra.mxu0 0.0
        %2376 = vmatprep.subr.mxu0 0.0
        %2377 = vmatpush1.xpose.msra.mxu0 0.0
        %2378 = vmatprep.subr.mxu0 0.0
        %2379 = vmatpush1.xpose.msra.mxu0 0.0
        %2380 = vmatprep.subr.mxu0 0.0
        %2381 = vmatpush1.xpose.msra.mxu0 0.0
        %2382 = vmatprep.subr.mxu0 0.0
        %2383 = vmatpush1.xpose.msra.mxu0 0.0
        %2384 = vmatprep.subr.mxu0 0.0
        %2385 = vmatpush1.xpose.msra.mxu0 0.0
        %2386 = vmatprep.subr.mxu0 0.0
        %2387 = vmatpush1.xpose.msra.mxu0 0.0
        %2388 = vmatprep.subr.mxu0 0.0
        %2389 = vmatpush1.xpose.msra.mxu0 0.0
        %2390 = vmatprep.subr.mxu0 0.0
        %2391 = vmatpush1.xpose.msra.mxu0 0.0
        %2392 = vmatprep.subr.mxu0 0.0
        %2393 = vmatpush1.xpose.msra.mxu0 0.0
        %2394 = vmatprep.subr.mxu0 0.0
        %2395 = vmatpush1.xpose.msra.mxu0 0.0
        %2396 = vmatprep.subr.mxu0 0.0
        %2397 = vmatpush1.xpose.msra.mxu0 0.0
        %2398 = vmatprep.subr.mxu0 0.0
        %2399 = vmatpush1.xpose.msra.mxu0 0.0
        %2400 = vmatprep.subr.mxu0 0.0
        %2401 = vmatpush1.xpose.msra.mxu0 0.0
        %2402 = vmatprep.subr.mxu0 0.0
        %2403 = vmatpush1.xpose.msra.mxu0 0.0
        %2404 = vmatprep.subr.mxu0 0.0
        %2405 = vmatpush1.xpose.msra.mxu0 0.0
        %2406 = vmatprep.subr.mxu0 0.0
        %2407 = vmatpush1.xpose.msra.mxu0 0.0
        %2408 = vmatprep.subr.mxu0 0.0
        %2409 = vmatpush1.xpose.msra.mxu0 0.0
        %2410 = vmatprep.subr.mxu0 0.0
        %2411 = vmatpush1.xpose.msra.mxu0 0.0
        %2412 = vmatprep.subr.mxu0 0.0
        %2413 = vmatpush1.xpose.msra.mxu0 0.0
        %2414 = vmatprep.subr.mxu0 0.0
        %2415 = vmatpush1.xpose.msra.mxu0 0.0
        %2416 = vmatprep.subr.mxu0 0.0
        %2417 = vmatpush1.xpose.msra.mxu0 0.0
        %2418 = vmatprep.subr.mxu0 0.0
        %2419 = vmatpush1.xpose.msra.mxu0 0.0
        %2420 = vmatprep.subr.mxu0 0.0
        %2421 = vmatpush1.xpose.msra.mxu0 0.0
        %2422 = vmatprep.subr.mxu0 0.0
        %2423 = vmatpush1.xpose.msra.mxu0 0.0
        %2424 = vmatprep.subr.mxu0 0.0
        %2425 = vmatpush1.xpose.msra.mxu0 0.0
        %2426 = vmatprep.subr.mxu0 0.0
        %2427 = vmatpush1.xpose.msra.mxu0 0.0
        %2428 = vmatprep.mubr.f32.mxu0 0.0
        %2429 = vmatmul.mubr.f32.gmra.mrb[0].mxu0 %v2356
        %v2430 = vpop.f32.mrb[0].mxu0
        %v2431 = vadd.f32 %v2164, %v2430
        %v2432 = vpop.f32.mrb[0].mxu0
        %2433 = vmatprep.mubr.f32.mxu0 0.0
        %2434 = vmatmul.mubr.f32.gmra.mrb[0].mxu0 %v2358
        %v2435 = vpop.f32.mrb[0].mxu0
        %v2436 = vadd.f32 %v2165, %v2435
        %v2437 = vpop.f32.mrb[0].mxu0
        %2438 = vdwg.mxu0
        %2439 = vrot.lane.b32.xlu0 %v523, 96
        %v2440 = vpop.permute.xlu0 %2439
        %2441 = vrot.lane.b32.xlu0 %v527, 96
        %v2442 = vpop.permute.xlu0 %2441
        %2443 = vrot.lane.b32.xlu0 %v523, 32
        %v2444 = vpop.permute.xlu0 %2443
        %2445 = vrot.lane.b32.xlu0 %v527, 32
        %v2446 = vpop.permute.xlu0 %2445
        %v2447 = vsel %vm539, %v2440, 0
        %v2449 = vsel %vm539, %v2442, 0
        %v2451 = vsel %vm539, %v2444, 0
        %v2453 = vsel %vm539, %v2446, 0
        %2455 = vmatprep.subr.mxu0 0.0
        %2456 = vmatpush1.xpose.msra.mxu0 %v2451
        %2457 = vmatprep.subr.mxu0 0.0
        %2458 = vmatpush1.xpose.msra.mxu0 %v2453
        %2459 = vmatprep.subr.mxu0 0.0
        %2460 = vmatpush1.xpose.msra.mxu0 0.0
        %2461 = vmatprep.subr.mxu0 0.0
        %2462 = vmatpush1.xpose.msra.mxu0 0.0
        %2463 = vmatprep.subr.mxu0 0.0
        %2464 = vmatpush1.xpose.msra.mxu0 0.0
        %2465 = vmatprep.subr.mxu0 0.0
        %2466 = vmatpush1.xpose.msra.mxu0 0.0
        %2467 = vmatprep.subr.mxu0 0.0
        %2468 = vmatpush1.xpose.msra.mxu0 0.0
        %2469 = vmatprep.subr.mxu0 0.0
        %2470 = vmatpush1.xpose.msra.mxu0 0.0
        %2471 = vmatprep.subr.mxu0 0.0
        %2472 = vmatpush1.xpose.msra.mxu0 0.0
        %2473 = vmatprep.subr.mxu0 0.0
        %2474 = vmatpush1.xpose.msra.mxu0 0.0
        %2475 = vmatprep.subr.mxu0 0.0
        %2476 = vmatpush1.xpose.msra.mxu0 0.0
        %2477 = vmatprep.subr.mxu0 0.0
        %2478 = vmatpush1.xpose.msra.mxu0 0.0
        %2479 = vmatprep.subr.mxu0 0.0
        %2480 = vmatpush1.xpose.msra.mxu0 0.0
        %2481 = vmatprep.subr.mxu0 0.0
        %2482 = vmatpush1.xpose.msra.mxu0 0.0
        %2483 = vmatprep.subr.mxu0 0.0
        %2484 = vmatpush1.xpose.msra.mxu0 0.0
        %2485 = vmatprep.subr.mxu0 0.0
        %2486 = vmatpush1.xpose.msra.mxu0 0.0
        %2487 = vmatprep.subr.mxu0 0.0
        %2488 = vmatpush1.xpose.msra.mxu0 0.0
        %2489 = vmatprep.subr.mxu0 0.0
        %2490 = vmatpush1.xpose.msra.mxu0 0.0
        %2491 = vmatprep.subr.mxu0 0.0
        %2492 = vmatpush1.xpose.msra.mxu0 0.0
        %2493 = vmatprep.subr.mxu0 0.0
        %2494 = vmatpush1.xpose.msra.mxu0 0.0
        %2495 = vmatprep.subr.mxu0 0.0
        %2496 = vmatpush1.xpose.msra.mxu0 0.0
        %2497 = vmatprep.subr.mxu0 0.0
        %2498 = vmatpush1.xpose.msra.mxu0 0.0
        %2499 = vmatprep.subr.mxu0 0.0
        %2500 = vmatpush1.xpose.msra.mxu0 0.0
        %2501 = vmatprep.subr.mxu0 0.0
        %2502 = vmatpush1.xpose.msra.mxu0 0.0
        %2503 = vmatprep.subr.mxu0 0.0
        %2504 = vmatpush1.xpose.msra.mxu0 0.0
        %2505 = vmatprep.subr.mxu0 0.0
        %2506 = vmatpush1.xpose.msra.mxu0 0.0
        %2507 = vmatprep.subr.mxu0 0.0
        %2508 = vmatpush1.xpose.msra.mxu0 0.0
        %2509 = vmatprep.subr.mxu0 0.0
        %2510 = vmatpush1.xpose.msra.mxu0 0.0
        %2511 = vmatprep.subr.mxu0 0.0
        %2512 = vmatpush1.xpose.msra.mxu0 0.0
        %2513 = vmatprep.subr.mxu0 0.0
        %2514 = vmatpush1.xpose.msra.mxu0 0.0
        %2515 = vmatprep.subr.mxu0 0.0
        %2516 = vmatpush1.xpose.msra.mxu0 0.0
        %2517 = vmatprep.subr.mxu0 0.0
        %2518 = vmatpush1.xpose.msra.mxu0 0.0
        %2519 = vmatprep.mubr.f32.mxu0 0.0
        %2520 = vmatmul.mubr.f32.gmra.mrb[0].mxu0 %v2447
        %v2521 = vpop.f32.mrb[0].mxu0
        %v2522 = vadd.f32 %v2164, %v2521
        %v2523 = vpop.f32.mrb[0].mxu0
        %2524 = vmatprep.mubr.f32.mxu0 0.0
        %2525 = vmatmul.mubr.f32.gmra.mrb[0].mxu0 %v2449
        %v2526 = vpop.f32.mrb[0].mxu0
        %v2527 = vadd.f32 %v2165, %v2526
        %v2528 = vpop.f32.mrb[0].mxu0
        %2529 = vdwg.mxu0
        %v2530 = vsel %vm539, %v2249, -inf
        %2531 = vmax.xlane.f32.xlu0 %v2530
        %v2532 = vpop.xlane.xlu0 %2531
        %v2533 = vsel %vm539, %v2254, -inf
        %2534 = vmax.xlane.f32.xlu0 %v2533
        %v2535 = vpop.xlane.xlu0 %2534
        %v2536 = vsel %vm539, %v2340, -inf
        %2537 = vmax.xlane.f32.xlu0 %v2536
        %v2538 = vpop.xlane.xlu0 %2537
        %v2539 = vsel %vm539, %v2345, -inf
        %2540 = vmax.xlane.f32.xlu0 %v2539
        %v2541 = vpop.xlane.xlu0 %2540
        %v2542 = vsel %vm539, %v2431, -inf
        %2543 = vmax.xlane.f32.xlu0 %v2542
        %v2544 = vpop.xlane.xlu0 %2543
        %v2545 = vsel %vm539, %v2436, -inf
        %2546 = vmax.xlane.f32.xlu0 %v2545
        %v2547 = vpop.xlane.xlu0 %2546
        %v2548 = vsel %vm539, %v2522, -inf
        %2549 = vmax.xlane.f32.xlu0 %v2548
        %v2550 = vpop.xlane.xlu0 %2549
        %v2551 = vsel %vm539, %v2527, -inf
        %2552 = vmax.xlane.f32.xlu0 %v2551
        %v2553 = vpop.xlane.xlu0 %2552
        %v2554 = vsub.f32 %v2249, %v2532
        %v2555 = vsub.f32 %v2254, %v2535
        %v2556 = vsub.f32 %v2340, %v2538
        %v2557 = vsub.f32 %v2345, %v2541
        %v2558 = vsub.f32 %v2431, %v2544
        %v2559 = vsub.f32 %v2436, %v2547
        %v2560 = vsub.f32 %v2522, %v2550
        %v2561 = vsub.f32 %v2527, %v2553
        %v2562 = vmul.f32 %v2554, 1.442695
        %v2563 = vpow.pop %v2562
        %v2564 = vmul.f32 %v2555, 1.442695
        %v2565 = vpow.pop %v2564
        %v2566 = vmul.f32 %v2556, 1.442695
        %v2567 = vpow.pop %v2566
        %v2568 = vmul.f32 %v2557, 1.442695
        %v2569 = vpow.pop %v2568
        %v2570 = vmul.f32 %v2558, 1.442695
        %v2571 = vpow.pop %v2570
        %v2572 = vmul.f32 %v2559, 1.442695
        %v2573 = vpow.pop %v2572
        %v2574 = vmul.f32 %v2560, 1.442695
        %v2575 = vpow.pop %v2574
        %v2576 = vmul.f32 %v2561, 1.442695
        %v2577 = vpow.pop %v2576
        %v2578 = vsel %vm539, %v2563, 0.0
        %2579 = vadd.xlane.f32.xlu0 %v2578
        %v2580 = vpop.xlane.xlu0 %2579
        %v2581 = vsel %vm539, %v2565, 0.0
        %2582 = vadd.xlane.f32.xlu0 %v2581
        %v2583 = vpop.xlane.xlu0 %2582
        %v2584 = vsel %vm539, %v2567, 0.0
        %2585 = vadd.xlane.f32.xlu0 %v2584
        %v2586 = vpop.xlane.xlu0 %2585
        %v2587 = vsel %vm539, %v2569, 0.0
        %2588 = vadd.xlane.f32.xlu0 %v2587
        %v2589 = vpop.xlane.xlu0 %2588
        %v2590 = vsel %vm539, %v2571, 0.0
        %2591 = vadd.xlane.f32.xlu0 %v2590
        %v2592 = vpop.xlane.xlu0 %2591
        %v2593 = vsel %vm539, %v2573, 0.0
        %2594 = vadd.xlane.f32.xlu0 %v2593
        %v2595 = vpop.xlane.xlu0 %2594
        %v2596 = vsel %vm539, %v2575, 0.0
        %2597 = vadd.xlane.f32.xlu0 %v2596
        %v2598 = vpop.xlane.xlu0 %2597
        %v2599 = vsel %vm539, %v2577, 0.0
        %2600 = vadd.xlane.f32.xlu0 %v2599
        %v2601 = vpop.xlane.xlu0 %2600
        %v2602 = vrcp.pop %v2580
        %v2603 = vrcp.pop %v2583
        %v2604 = vrcp.pop %v2586
        %v2605 = vrcp.pop %v2589
        %v2606 = vrcp.pop %v2592
        %v2607 = vrcp.pop %v2595
        %v2608 = vrcp.pop %v2598
        %v2609 = vrcp.pop %v2601
        %v2610 = vmul.f32 %v2563, %v2602
        %v2611 = vmul.f32 %v2565, %v2603
        %v2612 = vmul.f32 %v2567, %v2604
        %v2613 = vmul.f32 %v2569, %v2605
        %v2614 = vmul.f32 %v2571, %v2606
        %v2615 = vmul.f32 %v2573, %v2607
        %v2616 = vmul.f32 %v2575, %v2608
        %v2617 = vmul.f32 %v2577, %v2609
        %2618 = vrot.lane.b32.xlu0 %v495, 64
        %v2619 = vpop.permute.xlu0 %2618
        %2620 = vrot.lane.b32.xlu0 %v499, 64
        %v2621 = vpop.permute.xlu0 %2620
        %v2625 = vsel %vm539, %v2610, 0
        %v2628 = vsel %vm539, %v2611, 0
        %2630 = vmatprep.subr.mxu0 0.0
        %2631 = vmatpush1.msra.mxu0 %v2619
        %2632 = vmatprep.subr.mxu0 0.0
        %2633 = vmatpush1.msra.mxu0 %v2621
        %2634 = vmatprep.subr.mxu0 0.0
        %2635 = vmatpush1.msra.mxu0 0.0
        %2636 = vmatprep.subr.mxu0 0.0
        %2637 = vmatpush1.msra.mxu0 0.0
        %2638 = vmatprep.subr.mxu0 0.0
        %2639 = vmatpush1.msra.mxu0 0.0
        %2640 = vmatprep.subr.mxu0 0.0
        %2641 = vmatpush1.msra.mxu0 0.0
        %2642 = vmatprep.subr.mxu0 0.0
        %2643 = vmatpush1.msra.mxu0 0.0
        %2644 = vmatprep.subr.mxu0 0.0
        %2645 = vmatpush1.msra.mxu0 0.0
        %2646 = vmatprep.subr.mxu0 0.0
        %2647 = vmatpush1.msra.mxu0 0.0
        %2648 = vmatprep.subr.mxu0 0.0
        %2649 = vmatpush1.msra.mxu0 0.0
        %2650 = vmatprep.subr.mxu0 0.0
        %2651 = vmatpush1.msra.mxu0 0.0
        %2652 = vmatprep.subr.mxu0 0.0
        %2653 = vmatpush1.msra.mxu0 0.0
        %2654 = vmatprep.subr.mxu0 0.0
        %2655 = vmatpush1.msra.mxu0 0.0
        %2656 = vmatprep.subr.mxu0 0.0
        %2657 = vmatpush1.msra.mxu0 0.0
        %2658 = vmatprep.subr.mxu0 0.0
        %2659 = vmatpush1.msra.mxu0 0.0
        %2660 = vmatprep.subr.mxu0 0.0
        %2661 = vmatpush1.msra.mxu0 0.0
        %2662 = vmatprep.subr.mxu0 0.0
        %2663 = vmatpush1.msra.mxu0 0.0
        %2664 = vmatprep.subr.mxu0 0.0
        %2665 = vmatpush1.msra.mxu0 0.0
        %2666 = vmatprep.subr.mxu0 0.0
        %2667 = vmatpush1.msra.mxu0 0.0
        %2668 = vmatprep.subr.mxu0 0.0
        %2669 = vmatpush1.msra.mxu0 0.0
        %2670 = vmatprep.subr.mxu0 0.0
        %2671 = vmatpush1.msra.mxu0 0.0
        %2672 = vmatprep.subr.mxu0 0.0
        %2673 = vmatpush1.msra.mxu0 0.0
        %2674 = vmatprep.subr.mxu0 0.0
        %2675 = vmatpush1.msra.mxu0 0.0
        %2676 = vmatprep.subr.mxu0 0.0
        %2677 = vmatpush1.msra.mxu0 0.0
        %2678 = vmatprep.subr.mxu0 0.0
        %2679 = vmatpush1.msra.mxu0 0.0
        %2680 = vmatprep.subr.mxu0 0.0
        %2681 = vmatpush1.msra.mxu0 0.0
        %2682 = vmatprep.subr.mxu0 0.0
        %2683 = vmatpush1.msra.mxu0 0.0
        %2684 = vmatprep.subr.mxu0 0.0
        %2685 = vmatpush1.msra.mxu0 0.0
        %2686 = vmatprep.subr.mxu0 0.0
        %2687 = vmatpush1.msra.mxu0 0.0
        %2688 = vmatprep.subr.mxu0 0.0
        %2689 = vmatpush1.msra.mxu0 0.0
        %2690 = vmatprep.subr.mxu0 0.0
        %2691 = vmatpush1.msra.mxu0 0.0
        %2692 = vmatprep.subr.mxu0 0.0
        %2693 = vmatpush1.msra.mxu0 0.0
        %2694 = vmatprep.mubr.f32.mxu0 0.0
        %2695 = vmatmul.mubr.f32.gmra.mrb[0].mxu0 %v2625
        %v2696 = vpop.f32.mrb[0].mxu0
        %v2697 = vadd.f32 0.0, %v2696
        %v2698 = vpop.f32.mrb[0].mxu0
        %2699 = vmatprep.mubr.f32.mxu0 0.0
        %2700 = vmatmul.mubr.f32.gmra.mrb[0].mxu0 %v2628
        %v2701 = vpop.f32.mrb[0].mxu0
        %v2702 = vadd.f32 0.0, %v2701
        %v2703 = vpop.f32.mrb[0].mxu0
        %2704 = vdwg.mxu0
        %2705 = vrot.lane.b32.xlu0 %v505, 64
        %v2706 = vpop.permute.xlu0 %2705
        %2707 = vrot.lane.b32.xlu0 %v509, 64
        %v2708 = vpop.permute.xlu0 %2707
        %v2712 = vsel %vm539, %v2612, 0
        %v2715 = vsel %vm539, %v2613, 0
        %2717 = vmatprep.subr.mxu0 0.0
        %2718 = vmatpush1.msra.mxu0 %v2706
        %2719 = vmatprep.subr.mxu0 0.0
        %2720 = vmatpush1.msra.mxu0 %v2708
        %2721 = vmatprep.subr.mxu0 0.0
        %2722 = vmatpush1.msra.mxu0 0.0
        %2723 = vmatprep.subr.mxu0 0.0
        %2724 = vmatpush1.msra.mxu0 0.0
        %2725 = vmatprep.subr.mxu0 0.0
        %2726 = vmatpush1.msra.mxu0 0.0
        %2727 = vmatprep.subr.mxu0 0.0
        %2728 = vmatpush1.msra.mxu0 0.0
        %2729 = vmatprep.subr.mxu0 0.0
        %2730 = vmatpush1.msra.mxu0 0.0
        %2731 = vmatprep.subr.mxu0 0.0
        %2732 = vmatpush1.msra.mxu0 0.0
        %2733 = vmatprep.subr.mxu0 0.0
        %2734 = vmatpush1.msra.mxu0 0.0
        %2735 = vmatprep.subr.mxu0 0.0
        %2736 = vmatpush1.msra.mxu0 0.0
        %2737 = vmatprep.subr.mxu0 0.0
        %2738 = vmatpush1.msra.mxu0 0.0
        %2739 = vmatprep.subr.mxu0 0.0
        %2740 = vmatpush1.msra.mxu0 0.0
        %2741 = vmatprep.subr.mxu0 0.0
        %2742 = vmatpush1.msra.mxu0 0.0
        %2743 = vmatprep.subr.mxu0 0.0
        %2744 = vmatpush1.msra.mxu0 0.0
        %2745 = vmatprep.subr.mxu0 0.0
        %2746 = vmatpush1.msra.mxu0 0.0
        %2747 = vmatprep.subr.mxu0 0.0
        %2748 = vmatpush1.msra.mxu0 0.0
        %2749 = vmatprep.subr.mxu0 0.0
        %2750 = vmatpush1.msra.mxu0 0.0
        %2751 = vmatprep.subr.mxu0 0.0
        %2752 = vmatpush1.msra.mxu0 0.0
        %2753 = vmatprep.subr.mxu0 0.0
        %2754 = vmatpush1.msra.mxu0 0.0
        %2755 = vmatprep.subr.mxu0 0.0
        %2756 = vmatpush1.msra.mxu0 0.0
        %2757 = vmatprep.subr.mxu0 0.0
        %2758 = vmatpush1.msra.mxu0 0.0
        %2759 = vmatprep.subr.mxu0 0.0
        %2760 = vmatpush1.msra.mxu0 0.0
        %2761 = vmatprep.subr.mxu0 0.0
        %2762 = vmatpush1.msra.mxu0 0.0
        %2763 = vmatprep.subr.mxu0 0.0
        %2764 = vmatpush1.msra.mxu0 0.0
        %2765 = vmatprep.subr.mxu0 0.0
        %2766 = vmatpush1.msra.mxu0 0.0
        %2767 = vmatprep.subr.mxu0 0.0
        %2768 = vmatpush1.msra.mxu0 0.0
        %2769 = vmatprep.subr.mxu0 0.0
        %2770 = vmatpush1.msra.mxu0 0.0
        %2771 = vmatprep.subr.mxu0 0.0
        %2772 = vmatpush1.msra.mxu0 0.0
        %2773 = vmatprep.subr.mxu0 0.0
        %2774 = vmatpush1.msra.mxu0 0.0
        %2775 = vmatprep.subr.mxu0 0.0
        %2776 = vmatpush1.msra.mxu0 0.0
        %2777 = vmatprep.subr.mxu0 0.0
        %2778 = vmatpush1.msra.mxu0 0.0
        %2779 = vmatprep.subr.mxu0 0.0
        %2780 = vmatpush1.msra.mxu0 0.0
        %2781 = vmatprep.mubr.f32.mxu0 0.0
        %2782 = vmatmul.mubr.f32.gmra.mrb[0].mxu0 %v2712
        %v2783 = vpop.f32.mrb[0].mxu0
        %v2784 = vadd.f32 0.0, %v2783
        %v2785 = vpop.f32.mrb[0].mxu0
        %2786 = vmatprep.mubr.f32.mxu0 0.0
        %2787 = vmatmul.mubr.f32.gmra.mrb[0].mxu0 %v2715
        %v2788 = vpop.f32.mrb[0].mxu0
        %v2789 = vadd.f32 0.0, %v2788
        %v2790 = vpop.f32.mrb[0].mxu0
        %2791 = vdwg.mxu0
        %2792 = vrot.lane.b32.xlu0 %v515, 64
        %v2793 = vpop.permute.xlu0 %2792
        %2794 = vrot.lane.b32.xlu0 %v519, 64
        %v2795 = vpop.permute.xlu0 %2794
        %v2799 = vsel %vm539, %v2614, 0
        %v2802 = vsel %vm539, %v2615, 0
        %2804 = vmatprep.subr.mxu0 0.0
        %2805 = vmatpush1.msra.mxu0 %v2793
        %2806 = vmatprep.subr.mxu0 0.0
        %2807 = vmatpush1.msra.mxu0 %v2795
        %2808 = vmatprep.subr.mxu0 0.0
        %2809 = vmatpush1.msra.mxu0 0.0
        %2810 = vmatprep.subr.mxu0 0.0
        %2811 = vmatpush1.msra.mxu0 0.0
        %2812 = vmatprep.subr.mxu0 0.0
        %2813 = vmatpush1.msra.mxu0 0.0
        %2814 = vmatprep.subr.mxu0 0.0
        %2815 = vmatpush1.msra.mxu0 0.0
        %2816 = vmatprep.subr.mxu0 0.0
        %2817 = vmatpush1.msra.mxu0 0.0
        %2818 = vmatprep.subr.mxu0 0.0
        %2819 = vmatpush1.msra.mxu0 0.0
        %2820 = vmatprep.subr.mxu0 0.0
        %2821 = vmatpush1.msra.mxu0 0.0
        %2822 = vmatprep.subr.mxu0 0.0
        %2823 = vmatpush1.msra.mxu0 0.0
        %2824 = vmatprep.subr.mxu0 0.0
        %2825 = vmatpush1.msra.mxu0 0.0
        %2826 = vmatprep.subr.mxu0 0.0
        %2827 = vmatpush1.msra.mxu0 0.0
        %2828 = vmatprep.subr.mxu0 0.0
        %2829 = vmatpush1.msra.mxu0 0.0
        %2830 = vmatprep.subr.mxu0 0.0
        %2831 = vmatpush1.msra.mxu0 0.0
        %2832 = vmatprep.subr.mxu0 0.0
        %2833 = vmatpush1.msra.mxu0 0.0
        %2834 = vmatprep.subr.mxu0 0.0
        %2835 = vmatpush1.msra.mxu0 0.0
        %2836 = vmatprep.subr.mxu0 0.0
        %2837 = vmatpush1.msra.mxu0 0.0
        %2838 = vmatprep.subr.mxu0 0.0
        %2839 = vmatpush1.msra.mxu0 0.0
        %2840 = vmatprep.subr.mxu0 0.0
        %2841 = vmatpush1.msra.mxu0 0.0
        %2842 = vmatprep.subr.mxu0 0.0
        %2843 = vmatpush1.msra.mxu0 0.0
        %2844 = vmatprep.subr.mxu0 0.0
        %2845 = vmatpush1.msra.mxu0 0.0
        %2846 = vmatprep.subr.mxu0 0.0
        %2847 = vmatpush1.msra.mxu0 0.0
        %2848 = vmatprep.subr.mxu0 0.0
        %2849 = vmatpush1.msra.mxu0 0.0
        %2850 = vmatprep.subr.mxu0 0.0
        %2851 = vmatpush1.msra.mxu0 0.0
        %2852 = vmatprep.subr.mxu0 0.0
        %2853 = vmatpush1.msra.mxu0 0.0
        %2854 = vmatprep.subr.mxu0 0.0
        %2855 = vmatpush1.msra.mxu0 0.0
        %2856 = vmatprep.subr.mxu0 0.0
        %2857 = vmatpush1.msra.mxu0 0.0
        %2858 = vmatprep.subr.mxu0 0.0
        %2859 = vmatpush1.msra.mxu0 0.0
        %2860 = vmatprep.subr.mxu0 0.0
        %2861 = vmatpush1.msra.mxu0 0.0
        %2862 = vmatprep.subr.mxu0 0.0
        %2863 = vmatpush1.msra.mxu0 0.0
        %2864 = vmatprep.subr.mxu0 0.0
        %2865 = vmatpush1.msra.mxu0 0.0
        %2866 = vmatprep.subr.mxu0 0.0
        %2867 = vmatpush1.msra.mxu0 0.0
        %2868 = vmatprep.mubr.f32.mxu0 0.0
        %2869 = vmatmul.mubr.f32.gmra.mrb[0].mxu0 %v2799
        %v2870 = vpop.f32.mrb[0].mxu0
        %v2871 = vadd.f32 0.0, %v2870
        %v2872 = vpop.f32.mrb[0].mxu0
        %2873 = vmatprep.mubr.f32.mxu0 0.0
        %2874 = vmatmul.mubr.f32.gmra.mrb[0].mxu0 %v2802
        %v2875 = vpop.f32.mrb[0].mxu0
        %v2876 = vadd.f32 0.0, %v2875
        %v2877 = vpop.f32.mrb[0].mxu0
        %2878 = vdwg.mxu0
        %2879 = vrot.lane.b32.xlu0 %v525, 64
        %v2880 = vpop.permute.xlu0 %2879
        %2881 = vrot.lane.b32.xlu0 %v529, 64
        %v2882 = vpop.permute.xlu0 %2881
        %v2886 = vsel %vm539, %v2616, 0
        %v2889 = vsel %vm539, %v2617, 0
        %2891 = vmatprep.subr.mxu0 0.0
        %2892 = vmatpush1.msra.mxu0 %v2880
        %2893 = vmatprep.subr.mxu0 0.0
        %2894 = vmatpush1.msra.mxu0 %v2882
        %2895 = vmatprep.subr.mxu0 0.0
        %2896 = vmatpush1.msra.mxu0 0.0
        %2897 = vmatprep.subr.mxu0 0.0
        %2898 = vmatpush1.msra.mxu0 0.0
        %2899 = vmatprep.subr.mxu0 0.0
        %2900 = vmatpush1.msra.mxu0 0.0
        %2901 = vmatprep.subr.mxu0 0.0
        %2902 = vmatpush1.msra.mxu0 0.0
        %2903 = vmatprep.subr.mxu0 0.0
        %2904 = vmatpush1.msra.mxu0 0.0
        %2905 = vmatprep.subr.mxu0 0.0
        %2906 = vmatpush1.msra.mxu0 0.0
        %2907 = vmatprep.subr.mxu0 0.0
        %2908 = vmatpush1.msra.mxu0 0.0
        %2909 = vmatprep.subr.mxu0 0.0
        %2910 = vmatpush1.msra.mxu0 0.0
        %2911 = vmatprep.subr.mxu0 0.0
        %2912 = vmatpush1.msra.mxu0 0.0
        %2913 = vmatprep.subr.mxu0 0.0
        %2914 = vmatpush1.msra.mxu0 0.0
        %2915 = vmatprep.subr.mxu0 0.0
        %2916 = vmatpush1.msra.mxu0 0.0
        %2917 = vmatprep.subr.mxu0 0.0
        %2918 = vmatpush1.msra.mxu0 0.0
        %2919 = vmatprep.subr.mxu0 0.0
        %2920 = vmatpush1.msra.mxu0 0.0
        %2921 = vmatprep.subr.mxu0 0.0
        %2922 = vmatpush1.msra.mxu0 0.0
        %2923 = vmatprep.subr.mxu0 0.0
        %2924 = vmatpush1.msra.mxu0 0.0
        %2925 = vmatprep.subr.mxu0 0.0
        %2926 = vmatpush1.msra.mxu0 0.0
        %2927 = vmatprep.subr.mxu0 0.0
        %2928 = vmatpush1.msra.mxu0 0.0
        %2929 = vmatprep.subr.mxu0 0.0
        %2930 = vmatpush1.msra.mxu0 0.0
        %2931 = vmatprep.subr.mxu0 0.0
        %2932 = vmatpush1.msra.mxu0 0.0
        %2933 = vmatprep.subr.mxu0 0.0
        %2934 = vmatpush1.msra.mxu0 0.0
        %2935 = vmatprep.subr.mxu0 0.0
        %2936 = vmatpush1.msra.mxu0 0.0
        %2937 = vmatprep.subr.mxu0 0.0
        %2938 = vmatpush1.msra.mxu0 0.0
        %2939 = vmatprep.subr.mxu0 0.0
        %2940 = vmatpush1.msra.mxu0 0.0
        %2941 = vmatprep.subr.mxu0 0.0
        %2942 = vmatpush1.msra.mxu0 0.0
        %2943 = vmatprep.subr.mxu0 0.0
        %2944 = vmatpush1.msra.mxu0 0.0
        %2945 = vmatprep.subr.mxu0 0.0
        %2946 = vmatpush1.msra.mxu0 0.0
        %2947 = vmatprep.subr.mxu0 0.0
        %2948 = vmatpush1.msra.mxu0 0.0
        %2949 = vmatprep.subr.mxu0 0.0
        %2950 = vmatpush1.msra.mxu0 0.0
        %2951 = vmatprep.subr.mxu0 0.0
        %2952 = vmatpush1.msra.mxu0 0.0
        %2953 = vmatprep.subr.mxu0 0.0
        %2954 = vmatpush1.msra.mxu0 0.0
        %2955 = vmatprep.mubr.f32.mxu0 0.0
        %2956 = vmatmul.mubr.f32.gmra.mrb[0].mxu0 %v2886
        %v2957 = vpop.f32.mrb[0].mxu0
        %v2958 = vadd.f32 0.0, %v2957
        %v2959 = vpop.f32.mrb[0].mxu0
        %2960 = vmatprep.mubr.f32.mxu0 0.0
        %2961 = vmatmul.mubr.f32.gmra.mrb[0].mxu0 %v2889
        %v2962 = vpop.f32.mrb[0].mxu0
        %v2963 = vadd.f32 0.0, %v2962
        %v2964 = vpop.f32.mrb[0].mxu0
        %2965 = vdwg.mxu0
        %2974 = vrot.lane.b32.xlu0 %v2697, 64
        %v2975 = vpop.permute.xlu0 %2974
        %2976 = vrot.lane.b32.xlu0 %v2702, 64
        %v2977 = vpop.permute.xlu0 %2976
        %2978 = vrot.lane.b32.xlu0 %v2784, 64
        %v2979 = vpop.permute.xlu0 %2978
        %2980 = vrot.lane.b32.xlu0 %v2789, 64
        %v2981 = vpop.permute.xlu0 %2980
        %2982 = vrot.lane.b32.xlu0 %v2871, 64
        %v2983 = vpop.permute.xlu0 %2982
        %2984 = vrot.lane.b32.xlu0 %v2876, 64
        %v2985 = vpop.permute.xlu0 %2984
        %2986 = vrot.lane.b32.xlu0 %v2958, 64
        %v2987 = vpop.permute.xlu0 %2986
        %2988 = vrot.lane.b32.xlu0 %v2963, 64
        %v2989 = vpop.permute.xlu0 %2988
        %vm2998 = vcmask 785920
        %2999 = vst.msk [vmem:[#allocation2] sm:$0xff] %vm2998, %v2975
        %3000 = vst.msk [vmem:[#allocation2 + $0x8] sm:$0xff] %vm2998, %v2977
        %3001 = vst.msk [vmem:[#allocation2 + $0x10] sm:$0xff] %vm2998, %v2979
        %3002 = vst.msk [vmem:[#allocation2 + $0x18] sm:$0xff] %vm2998, %v2981
        %3003 = vst.msk [vmem:[#allocation2 + $0x20] sm:$0xff] %vm2998, %v2983
        %3004 = vst.msk [vmem:[#allocation2 + $0x28] sm:$0xff] %vm2998, %v2985
        %3005 = vst.msk [vmem:[#allocation2 + $0x30] sm:$0xff] %vm2998, %v2987
        %3006 = vst.msk [vmem:[#allocation2 + $0x38] sm:$0xff] %vm2998, %v2989
        %s3007 = scalar_lea.vmem [#allocation9], 48
        %v3008 = vld [vmem:[%s3007] sm:$0xff]
        %v3009 = vld [vmem:[%s3007 + $0x8] sm:$0xff]
        %3010 = vrot.lane.b32.xlu0 %v493, 80
        %v3011 = vpop.permute.xlu0 %3010
        %3012 = vrot.lane.b32.xlu0 %v497, 80
        %v3013 = vpop.permute.xlu0 %3012
        %3014 = vrot.lane.b32.xlu0 %v493, 16
        %v3015 = vpop.permute.xlu0 %3014
        %3016 = vrot.lane.b32.xlu0 %v497, 16
        %v3017 = vpop.permute.xlu0 %3016
        %v3018 = vsel %vm539, %v3011, 0
        %v3020 = vsel %vm539, %v3013, 0
        %v3022 = vsel %vm539, %v3015, 0
        %v3024 = vsel %vm539, %v3017, 0
        %3026 = vmatprep.subr.mxu0 0.0
        %3027 = vmatpush1.xpose.msra.mxu0 %v3022
        %3028 = vmatprep.subr.mxu0 0.0
        %3029 = vmatpush1.xpose.msra.mxu0 %v3024
        %3030 = vmatprep.subr.mxu0 0.0
        %3031 = vmatpush1.xpose.msra.mxu0 0.0
        %3032 = vmatprep.subr.mxu0 0.0
        %3033 = vmatpush1.xpose.msra.mxu0 0.0
        %3034 = vmatprep.subr.mxu0 0.0
        %3035 = vmatpush1.xpose.msra.mxu0 0.0
        %3036 = vmatprep.subr.mxu0 0.0
        %3037 = vmatpush1.xpose.msra.mxu0 0.0
        %3038 = vmatprep.subr.mxu0 0.0
        %3039 = vmatpush1.xpose.msra.mxu0 0.0
        %3040 = vmatprep.subr.mxu0 0.0
        %3041 = vmatpush1.xpose.msra.mxu0 0.0
        %3042 = vmatprep.subr.mxu0 0.0
        %3043 = vmatpush1.xpose.msra.mxu0 0.0
        %3044 = vmatprep.subr.mxu0 0.0
        %3045 = vmatpush1.xpose.msra.mxu0 0.0
        %3046 = vmatprep.subr.mxu0 0.0
        %3047 = vmatpush1.xpose.msra.mxu0 0.0
        %3048 = vmatprep.subr.mxu0 0.0
        %3049 = vmatpush1.xpose.msra.mxu0 0.0
        %3050 = vmatprep.subr.mxu0 0.0
        %3051 = vmatpush1.xpose.msra.mxu0 0.0
        %3052 = vmatprep.subr.mxu0 0.0
        %3053 = vmatpush1.xpose.msra.mxu0 0.0
        %3054 = vmatprep.subr.mxu0 0.0
        %3055 = vmatpush1.xpose.msra.mxu0 0.0
        %3056 = vmatprep.subr.mxu0 0.0
        %3057 = vmatpush1.xpose.msra.mxu0 0.0
        %3058 = vmatprep.subr.mxu0 0.0
        %3059 = vmatpush1.xpose.msra.mxu0 0.0
        %3060 = vmatprep.subr.mxu0 0.0
        %3061 = vmatpush1.xpose.msra.mxu0 0.0
        %3062 = vmatprep.subr.mxu0 0.0
        %3063 = vmatpush1.xpose.msra.mxu0 0.0
        %3064 = vmatprep.subr.mxu0 0.0
        %3065 = vmatpush1.xpose.msra.mxu0 0.0
        %3066 = vmatprep.subr.mxu0 0.0
        %3067 = vmatpush1.xpose.msra.mxu0 0.0
        %3068 = vmatprep.subr.mxu0 0.0
        %3069 = vmatpush1.xpose.msra.mxu0 0.0
        %3070 = vmatprep.subr.mxu0 0.0
        %3071 = vmatpush1.xpose.msra.mxu0 0.0
        %3072 = vmatprep.subr.mxu0 0.0
        %3073 = vmatpush1.xpose.msra.mxu0 0.0
        %3074 = vmatprep.subr.mxu0 0.0
        %3075 = vmatpush1.xpose.msra.mxu0 0.0
        %3076 = vmatprep.subr.mxu0 0.0
        %3077 = vmatpush1.xpose.msra.mxu0 0.0
        %3078 = vmatprep.subr.mxu0 0.0
        %3079 = vmatpush1.xpose.msra.mxu0 0.0
        %3080 = vmatprep.subr.mxu0 0.0
        %3081 = vmatpush1.xpose.msra.mxu0 0.0
        %3082 = vmatprep.subr.mxu0 0.0
        %3083 = vmatpush1.xpose.msra.mxu0 0.0
        %3084 = vmatprep.subr.mxu0 0.0
        %3085 = vmatpush1.xpose.msra.mxu0 0.0
        %3086 = vmatprep.subr.mxu0 0.0
        %3087 = vmatpush1.xpose.msra.mxu0 0.0
        %3088 = vmatprep.subr.mxu0 0.0
        %3089 = vmatpush1.xpose.msra.mxu0 0.0
        %3090 = vmatprep.mubr.f32.mxu0 0.0
        %3091 = vmatmul.mubr.f32.gmra.mrb[0].mxu0 %v3018
        %v3092 = vpop.f32.mrb[0].mxu0
        %v3093 = vadd.f32 %v3008, %v3092
        %v3094 = vpop.f32.mrb[0].mxu0
        %3095 = vmatprep.mubr.f32.mxu0 0.0
        %3096 = vmatmul.mubr.f32.gmra.mrb[0].mxu0 %v3020
        %v3097 = vpop.f32.mrb[0].mxu0
        %v3098 = vadd.f32 %v3009, %v3097
        %v3099 = vpop.f32.mrb[0].mxu0
        %3100 = vdwg.mxu0
        %3101 = vrot.lane.b32.xlu0 %v503, 80
        %v3102 = vpop.permute.xlu0 %3101
        %3103 = vrot.lane.b32.xlu0 %v507, 80
        %v3104 = vpop.permute.xlu0 %3103
        %3105 = vrot.lane.b32.xlu0 %v503, 16
        %v3106 = vpop.permute.xlu0 %3105
        %3107 = vrot.lane.b32.xlu0 %v507, 16
        %v3108 = vpop.permute.xlu0 %3107
        %v3109 = vsel %vm539, %v3102, 0
        %v3111 = vsel %vm539, %v3104, 0
        %v3113 = vsel %vm539, %v3106, 0
        %v3115 = vsel %vm539, %v3108, 0
        %3117 = vmatprep.subr.mxu0 0.0
        %3118 = vmatpush1.xpose.msra.mxu0 %v3113
        %3119 = vmatprep.subr.mxu0 0.0
        %3120 = vmatpush1.xpose.msra.mxu0 %v3115
        %3121 = vmatprep.subr.mxu0 0.0
        %3122 = vmatpush1.xpose.msra.mxu0 0.0
        %3123 = vmatprep.subr.mxu0 0.0
        %3124 = vmatpush1.xpose.msra.mxu0 0.0
        %3125 = vmatprep.subr.mxu0 0.0
        %3126 = vmatpush1.xpose.msra.mxu0 0.0
        %3127 = vmatprep.subr.mxu0 0.0
        %3128 = vmatpush1.xpose.msra.mxu0 0.0
        %3129 = vmatprep.subr.mxu0 0.0
        %3130 = vmatpush1.xpose.msra.mxu0 0.0
        %3131 = vmatprep.subr.mxu0 0.0
        %3132 = vmatpush1.xpose.msra.mxu0 0.0
        %3133 = vmatprep.subr.mxu0 0.0
        %3134 = vmatpush1.xpose.msra.mxu0 0.0
        %3135 = vmatprep.subr.mxu0 0.0
        %3136 = vmatpush1.xpose.msra.mxu0 0.0
        %3137 = vmatprep.subr.mxu0 0.0
        %3138 = vmatpush1.xpose.msra.mxu0 0.0
        %3139 = vmatprep.subr.mxu0 0.0
        %3140 = vmatpush1.xpose.msra.mxu0 0.0
        %3141 = vmatprep.subr.mxu0 0.0
        %3142 = vmatpush1.xpose.msra.mxu0 0.0
        %3143 = vmatprep.subr.mxu0 0.0
        %3144 = vmatpush1.xpose.msra.mxu0 0.0
        %3145 = vmatprep.subr.mxu0 0.0
        %3146 = vmatpush1.xpose.msra.mxu0 0.0
        %3147 = vmatprep.subr.mxu0 0.0
        %3148 = vmatpush1.xpose.msra.mxu0 0.0
        %3149 = vmatprep.subr.mxu0 0.0
        %3150 = vmatpush1.xpose.msra.mxu0 0.0
        %3151 = vmatprep.subr.mxu0 0.0
        %3152 = vmatpush1.xpose.msra.mxu0 0.0
        %3153 = vmatprep.subr.mxu0 0.0
        %3154 = vmatpush1.xpose.msra.mxu0 0.0
        %3155 = vmatprep.subr.mxu0 0.0
        %3156 = vmatpush1.xpose.msra.mxu0 0.0
        %3157 = vmatprep.subr.mxu0 0.0
        %3158 = vmatpush1.xpose.msra.mxu0 0.0
        %3159 = vmatprep.subr.mxu0 0.0
        %3160 = vmatpush1.xpose.msra.mxu0 0.0
        %3161 = vmatprep.subr.mxu0 0.0
        %3162 = vmatpush1.xpose.msra.mxu0 0.0
        %3163 = vmatprep.subr.mxu0 0.0
        %3164 = vmatpush1.xpose.msra.mxu0 0.0
        %3165 = vmatprep.subr.mxu0 0.0
        %3166 = vmatpush1.xpose.msra.mxu0 0.0
        %3167 = vmatprep.subr.mxu0 0.0
        %3168 = vmatpush1.xpose.msra.mxu0 0.0
        %3169 = vmatprep.subr.mxu0 0.0
        %3170 = vmatpush1.xpose.msra.mxu0 0.0
        %3171 = vmatprep.subr.mxu0 0.0
        %3172 = vmatpush1.xpose.msra.mxu0 0.0
        %3173 = vmatprep.subr.mxu0 0.0
        %3174 = vmatpush1.xpose.msra.mxu0 0.0
        %3175 = vmatprep.subr.mxu0 0.0
        %3176 = vmatpush1.xpose.msra.mxu0 0.0
        %3177 = vmatprep.subr.mxu0 0.0
        %3178 = vmatpush1.xpose.msra.mxu0 0.0
        %3179 = vmatprep.subr.mxu0 0.0
        %3180 = vmatpush1.xpose.msra.mxu0 0.0
        %3181 = vmatprep.mubr.f32.mxu0 0.0
        %3182 = vmatmul.mubr.f32.gmra.mrb[0].mxu0 %v3109
        %v3183 = vpop.f32.mrb[0].mxu0
        %v3184 = vadd.f32 %v3008, %v3183
        %v3185 = vpop.f32.mrb[0].mxu0
        %3186 = vmatprep.mubr.f32.mxu0 0.0
        %3187 = vmatmul.mubr.f32.gmra.mrb[0].mxu0 %v3111
        %v3188 = vpop.f32.mrb[0].mxu0
        %v3189 = vadd.f32 %v3009, %v3188
        %v3190 = vpop.f32.mrb[0].mxu0
        %3191 = vdwg.mxu0
        %3192 = vrot.lane.b32.xlu0 %v513, 80
        %v3193 = vpop.permute.xlu0 %3192
        %3194 = vrot.lane.b32.xlu0 %v517, 80
        %v3195 = vpop.permute.xlu0 %3194
        %3196 = vrot.lane.b32.xlu0 %v513, 16
        %v3197 = vpop.permute.xlu0 %3196
        %3198 = vrot.lane.b32.xlu0 %v517, 16
        %v3199 = vpop.permute.xlu0 %3198
        %v3200 = vsel %vm539, %v3193, 0
        %v3202 = vsel %vm539, %v3195, 0
        %v3204 = vsel %vm539, %v3197, 0
        %v3206 = vsel %vm539, %v3199, 0
        %3208 = vmatprep.subr.mxu0 0.0
        %3209 = vmatpush1.xpose.msra.mxu0 %v3204
        %3210 = vmatprep.subr.mxu0 0.0
        %3211 = vmatpush1.xpose.msra.mxu0 %v3206
        %3212 = vmatprep.subr.mxu0 0.0
        %3213 = vmatpush1.xpose.msra.mxu0 0.0
        %3214 = vmatprep.subr.mxu0 0.0
        %3215 = vmatpush1.xpose.msra.mxu0 0.0
        %3216 = vmatprep.subr.mxu0 0.0
        %3217 = vmatpush1.xpose.msra.mxu0 0.0
        %3218 = vmatprep.subr.mxu0 0.0
        %3219 = vmatpush1.xpose.msra.mxu0 0.0
        %3220 = vmatprep.subr.mxu0 0.0
        %3221 = vmatpush1.xpose.msra.mxu0 0.0
        %3222 = vmatprep.subr.mxu0 0.0
        %3223 = vmatpush1.xpose.msra.mxu0 0.0
        %3224 = vmatprep.subr.mxu0 0.0
        %3225 = vmatpush1.xpose.msra.mxu0 0.0
        %3226 = vmatprep.subr.mxu0 0.0
        %3227 = vmatpush1.xpose.msra.mxu0 0.0
        %3228 = vmatprep.subr.mxu0 0.0
        %3229 = vmatpush1.xpose.msra.mxu0 0.0
        %3230 = vmatprep.subr.mxu0 0.0
        %3231 = vmatpush1.xpose.msra.mxu0 0.0
        %3232 = vmatprep.subr.mxu0 0.0
        %3233 = vmatpush1.xpose.msra.mxu0 0.0
        %3234 = vmatprep.subr.mxu0 0.0
        %3235 = vmatpush1.xpose.msra.mxu0 0.0
        %3236 = vmatprep.subr.mxu0 0.0
        %3237 = vmatpush1.xpose.msra.mxu0 0.0
        %3238 = vmatprep.subr.mxu0 0.0
        %3239 = vmatpush1.xpose.msra.mxu0 0.0
        %3240 = vmatprep.subr.mxu0 0.0
        %3241 = vmatpush1.xpose.msra.mxu0 0.0
        %3242 = vmatprep.subr.mxu0 0.0
        %3243 = vmatpush1.xpose.msra.mxu0 0.0
        %3244 = vmatprep.subr.mxu0 0.0
        %3245 = vmatpush1.xpose.msra.mxu0 0.0
        %3246 = vmatprep.subr.mxu0 0.0
        %3247 = vmatpush1.xpose.msra.mxu0 0.0
        %3248 = vmatprep.subr.mxu0 0.0
        %3249 = vmatpush1.xpose.msra.mxu0 0.0
        %3250 = vmatprep.subr.mxu0 0.0
        %3251 = vmatpush1.xpose.msra.mxu0 0.0
        %3252 = vmatprep.subr.mxu0 0.0
        %3253 = vmatpush1.xpose.msra.mxu0 0.0
        %3254 = vmatprep.subr.mxu0 0.0
        %3255 = vmatpush1.xpose.msra.mxu0 0.0
        %3256 = vmatprep.subr.mxu0 0.0
        %3257 = vmatpush1.xpose.msra.mxu0 0.0
        %3258 = vmatprep.subr.mxu0 0.0
        %3259 = vmatpush1.xpose.msra.mxu0 0.0
        %3260 = vmatprep.subr.mxu0 0.0
        %3261 = vmatpush1.xpose.msra.mxu0 0.0
        %3262 = vmatprep.subr.mxu0 0.0
        %3263 = vmatpush1.xpose.msra.mxu0 0.0
        %3264 = vmatprep.subr.mxu0 0.0
        %3265 = vmatpush1.xpose.msra.mxu0 0.0
        %3266 = vmatprep.subr.mxu0 0.0
        %3267 = vmatpush1.xpose.msra.mxu0 0.0
        %3268 = vmatprep.subr.mxu0 0.0
        %3269 = vmatpush1.xpose.msra.mxu0 0.0
        %3270 = vmatprep.subr.mxu0 0.0
        %3271 = vmatpush1.xpose.msra.mxu0 0.0
        %3272 = vmatprep.mubr.f32.mxu0 0.0
        %3273 = vmatmul.mubr.f32.gmra.mrb[0].mxu0 %v3200
        %v3274 = vpop.f32.mrb[0].mxu0
        %v3275 = vadd.f32 %v3008, %v3274
        %v3276 = vpop.f32.mrb[0].mxu0
        %3277 = vmatprep.mubr.f32.mxu0 0.0
        %3278 = vmatmul.mubr.f32.gmra.mrb[0].mxu0 %v3202
        %v3279 = vpop.f32.mrb[0].mxu0
        %v3280 = vadd.f32 %v3009, %v3279
        %v3281 = vpop.f32.mrb[0].mxu0
        %3282 = vdwg.mxu0
        %3283 = vrot.lane.b32.xlu0 %v523, 80
        %v3284 = vpop.permute.xlu0 %3283
        %3285 = vrot.lane.b32.xlu0 %v527, 80
        %v3286 = vpop.permute.xlu0 %3285
        %3287 = vrot.lane.b32.xlu0 %v523, 16
        %v3288 = vpop.permute.xlu0 %3287
        %3289 = vrot.lane.b32.xlu0 %v527, 16
        %v3290 = vpop.permute.xlu0 %3289
        %v3291 = vsel %vm539, %v3284, 0
        %v3293 = vsel %vm539, %v3286, 0
        %v3295 = vsel %vm539, %v3288, 0
        %v3297 = vsel %vm539, %v3290, 0
        %3299 = vmatprep.subr.mxu0 0.0
        %3300 = vmatpush1.xpose.msra.mxu0 %v3295
        %3301 = vmatprep.subr.mxu0 0.0
        %3302 = vmatpush1.xpose.msra.mxu0 %v3297
        %3303 = vmatprep.subr.mxu0 0.0
        %3304 = vmatpush1.xpose.msra.mxu0 0.0
        %3305 = vmatprep.subr.mxu0 0.0
        %3306 = vmatpush1.xpose.msra.mxu0 0.0
        %3307 = vmatprep.subr.mxu0 0.0
        %3308 = vmatpush1.xpose.msra.mxu0 0.0
        %3309 = vmatprep.subr.mxu0 0.0
        %3310 = vmatpush1.xpose.msra.mxu0 0.0
        %3311 = vmatprep.subr.mxu0 0.0
        %3312 = vmatpush1.xpose.msra.mxu0 0.0
        %3313 = vmatprep.subr.mxu0 0.0
        %3314 = vmatpush1.xpose.msra.mxu0 0.0
        %3315 = vmatprep.subr.mxu0 0.0
        %3316 = vmatpush1.xpose.msra.mxu0 0.0
        %3317 = vmatprep.subr.mxu0 0.0
        %3318 = vmatpush1.xpose.msra.mxu0 0.0
        %3319 = vmatprep.subr.mxu0 0.0
        %3320 = vmatpush1.xpose.msra.mxu0 0.0
        %3321 = vmatprep.subr.mxu0 0.0
        %3322 = vmatpush1.xpose.msra.mxu0 0.0
        %3323 = vmatprep.subr.mxu0 0.0
        %3324 = vmatpush1.xpose.msra.mxu0 0.0
        %3325 = vmatprep.subr.mxu0 0.0
        %3326 = vmatpush1.xpose.msra.mxu0 0.0
        %3327 = vmatprep.subr.mxu0 0.0
        %3328 = vmatpush1.xpose.msra.mxu0 0.0
        %3329 = vmatprep.subr.mxu0 0.0
        %3330 = vmatpush1.xpose.msra.mxu0 0.0
        %3331 = vmatprep.subr.mxu0 0.0
        %3332 = vmatpush1.xpose.msra.mxu0 0.0
        %3333 = vmatprep.subr.mxu0 0.0
        %3334 = vmatpush1.xpose.msra.mxu0 0.0
        %3335 = vmatprep.subr.mxu0 0.0
        %3336 = vmatpush1.xpose.msra.mxu0 0.0
        %3337 = vmatprep.subr.mxu0 0.0
        %3338 = vmatpush1.xpose.msra.mxu0 0.0
        %3339 = vmatprep.subr.mxu0 0.0
        %3340 = vmatpush1.xpose.msra.mxu0 0.0
        %3341 = vmatprep.subr.mxu0 0.0
        %3342 = vmatpush1.xpose.msra.mxu0 0.0
        %3343 = vmatprep.subr.mxu0 0.0
        %3344 = vmatpush1.xpose.msra.mxu0 0.0
        %3345 = vmatprep.subr.mxu0 0.0
        %3346 = vmatpush1.xpose.msra.mxu0 0.0
        %3347 = vmatprep.subr.mxu0 0.0
        %3348 = vmatpush1.xpose.msra.mxu0 0.0
        %3349 = vmatprep.subr.mxu0 0.0
        %3350 = vmatpush1.xpose.msra.mxu0 0.0
        %3351 = vmatprep.subr.mxu0 0.0
        %3352 = vmatpush1.xpose.msra.mxu0 0.0
        %3353 = vmatprep.subr.mxu0 0.0
        %3354 = vmatpush1.xpose.msra.mxu0 0.0
        %3355 = vmatprep.subr.mxu0 0.0
        %3356 = vmatpush1.xpose.msra.mxu0 0.0
        %3357 = vmatprep.subr.mxu0 0.0
        %3358 = vmatpush1.xpose.msra.mxu0 0.0
        %3359 = vmatprep.subr.mxu0 0.0
        %3360 = vmatpush1.xpose.msra.mxu0 0.0
        %3361 = vmatprep.subr.mxu0 0.0
        %3362 = vmatpush1.xpose.msra.mxu0 0.0
        %3363 = vmatprep.mubr.f32.mxu0 0.0
        %3364 = vmatmul.mubr.f32.gmra.mrb[0].mxu0 %v3291
        %v3365 = vpop.f32.mrb[0].mxu0
        %v3366 = vadd.f32 %v3008, %v3365
        %v3367 = vpop.f32.mrb[0].mxu0
        %3368 = vmatprep.mubr.f32.mxu0 0.0
        %3369 = vmatmul.mubr.f32.gmra.mrb[0].mxu0 %v3293
        %v3370 = vpop.f32.mrb[0].mxu0
        %v3371 = vadd.f32 %v3009, %v3370
        %v3372 = vpop.f32.mrb[0].mxu0
        %3373 = vdwg.mxu0
        %v3374 = vsel %vm539, %v3093, -inf
        %3375 = vmax.xlane.f32.xlu0 %v3374
        %v3376 = vpop.xlane.xlu0 %3375
        %v3377 = vsel %vm539, %v3098, -inf
        %3378 = vmax.xlane.f32.xlu0 %v3377
        %v3379 = vpop.xlane.xlu0 %3378
        %v3380 = vsel %vm539, %v3184, -inf
        %3381 = vmax.xlane.f32.xlu0 %v3380
        %v3382 = vpop.xlane.xlu0 %3381
        %v3383 = vsel %vm539, %v3189, -inf
        %3384 = vmax.xlane.f32.xlu0 %v3383
        %v3385 = vpop.xlane.xlu0 %3384
        %v3386 = vsel %vm539, %v3275, -inf
        %3387 = vmax.xlane.f32.xlu0 %v3386
        %v3388 = vpop.xlane.xlu0 %3387
        %v3389 = vsel %vm539, %v3280, -inf
        %3390 = vmax.xlane.f32.xlu0 %v3389
        %v3391 = vpop.xlane.xlu0 %3390
        %v3392 = vsel %vm539, %v3366, -inf
        %3393 = vmax.xlane.f32.xlu0 %v3392
        %v3394 = vpop.xlane.xlu0 %3393
        %v3395 = vsel %vm539, %v3371, -inf
        %3396 = vmax.xlane.f32.xlu0 %v3395
        %v3397 = vpop.xlane.xlu0 %3396
        %v3398 = vsub.f32 %v3093, %v3376
        %v3399 = vsub.f32 %v3098, %v3379
        %v3400 = vsub.f32 %v3184, %v3382
        %v3401 = vsub.f32 %v3189, %v3385
        %v3402 = vsub.f32 %v3275, %v3388
        %v3403 = vsub.f32 %v3280, %v3391
        %v3404 = vsub.f32 %v3366, %v3394
        %v3405 = vsub.f32 %v3371, %v3397
        %v3406 = vmul.f32 %v3398, 1.442695
        %v3407 = vpow.pop %v3406
        %v3408 = vmul.f32 %v3399, 1.442695
        %v3409 = vpow.pop %v3408
        %v3410 = vmul.f32 %v3400, 1.442695
        %v3411 = vpow.pop %v3410
        %v3412 = vmul.f32 %v3401, 1.442695
        %v3413 = vpow.pop %v3412
        %v3414 = vmul.f32 %v3402, 1.442695
        %v3415 = vpow.pop %v3414
        %v3416 = vmul.f32 %v3403, 1.442695
        %v3417 = vpow.pop %v3416
        %v3418 = vmul.f32 %v3404, 1.442695
        %v3419 = vpow.pop %v3418
        %v3420 = vmul.f32 %v3405, 1.442695
        %v3421 = vpow.pop %v3420
        %v3422 = vsel %vm539, %v3407, 0.0
        %3423 = vadd.xlane.f32.xlu0 %v3422
        %v3424 = vpop.xlane.xlu0 %3423
        %v3425 = vsel %vm539, %v3409, 0.0
        %3426 = vadd.xlane.f32.xlu0 %v3425
        %v3427 = vpop.xlane.xlu0 %3426
        %v3428 = vsel %vm539, %v3411, 0.0
        %3429 = vadd.xlane.f32.xlu0 %v3428
        %v3430 = vpop.xlane.xlu0 %3429
        %v3431 = vsel %vm539, %v3413, 0.0
        %3432 = vadd.xlane.f32.xlu0 %v3431
        %v3433 = vpop.xlane.xlu0 %3432
        %v3434 = vsel %vm539, %v3415, 0.0
        %3435 = vadd.xlane.f32.xlu0 %v3434
        %v3436 = vpop.xlane.xlu0 %3435
        %v3437 = vsel %vm539, %v3417, 0.0
        %3438 = vadd.xlane.f32.xlu0 %v3437
        %v3439 = vpop.xlane.xlu0 %3438
        %v3440 = vsel %vm539, %v3419, 0.0
        %3441 = vadd.xlane.f32.xlu0 %v3440
        %v3442 = vpop.xlane.xlu0 %3441
        %v3443 = vsel %vm539, %v3421, 0.0
        %3444 = vadd.xlane.f32.xlu0 %v3443
        %v3445 = vpop.xlane.xlu0 %3444
        %v3446 = vrcp.pop %v3424
        %v3447 = vrcp.pop %v3427
        %v3448 = vrcp.pop %v3430
        %v3449 = vrcp.pop %v3433
        %v3450 = vrcp.pop %v3436
        %v3451 = vrcp.pop %v3439
        %v3452 = vrcp.pop %v3442
        %v3453 = vrcp.pop %v3445
        %v3454 = vmul.f32 %v3407, %v3446
        %v3455 = vmul.f32 %v3409, %v3447
        %v3456 = vmul.f32 %v3411, %v3448
        %v3457 = vmul.f32 %v3413, %v3449
        %v3458 = vmul.f32 %v3415, %v3450
        %v3459 = vmul.f32 %v3417, %v3451
        %v3460 = vmul.f32 %v3419, %v3452
        %v3461 = vmul.f32 %v3421, %v3453
        %3462 = vrot.lane.b32.xlu0 %v495, 32
        %v3463 = vpop.permute.xlu0 %3462
        %3464 = vrot.lane.b32.xlu0 %v499, 32
        %v3465 = vpop.permute.xlu0 %3464
        %v3469 = vsel %vm539, %v3454, 0
        %v3472 = vsel %vm539, %v3455, 0
        %3474 = vmatprep.subr.mxu0 0.0
        %3475 = vmatpush1.msra.mxu0 %v3463
        %3476 = vmatprep.subr.mxu0 0.0
        %3477 = vmatpush1.msra.mxu0 %v3465
        %3478 = vmatprep.subr.mxu0 0.0
        %3479 = vmatpush1.msra.mxu0 0.0
        %3480 = vmatprep.subr.mxu0 0.0
        %3481 = vmatpush1.msra.mxu0 0.0
        %3482 = vmatprep.subr.mxu0 0.0
        %3483 = vmatpush1.msra.mxu0 0.0
        %3484 = vmatprep.subr.mxu0 0.0
        %3485 = vmatpush1.msra.mxu0 0.0
        %3486 = vmatprep.subr.mxu0 0.0
        %3487 = vmatpush1.msra.mxu0 0.0
        %3488 = vmatprep.subr.mxu0 0.0
        %3489 = vmatpush1.msra.mxu0 0.0
        %3490 = vmatprep.subr.mxu0 0.0
        %3491 = vmatpush1.msra.mxu0 0.0
        %3492 = vmatprep.subr.mxu0 0.0
        %3493 = vmatpush1.msra.mxu0 0.0
        %3494 = vmatprep.subr.mxu0 0.0
        %3495 = vmatpush1.msra.mxu0 0.0
        %3496 = vmatprep.subr.mxu0 0.0
        %3497 = vmatpush1.msra.mxu0 0.0
        %3498 = vmatprep.subr.mxu0 0.0
        %3499 = vmatpush1.msra.mxu0 0.0
        %3500 = vmatprep.subr.mxu0 0.0
        %3501 = vmatpush1.msra.mxu0 0.0
        %3502 = vmatprep.subr.mxu0 0.0
        %3503 = vmatpush1.msra.mxu0 0.0
        %3504 = vmatprep.subr.mxu0 0.0
        %3505 = vmatpush1.msra.mxu0 0.0
        %3506 = vmatprep.subr.mxu0 0.0
        %3507 = vmatpush1.msra.mxu0 0.0
        %3508 = vmatprep.subr.mxu0 0.0
        %3509 = vmatpush1.msra.mxu0 0.0
        %3510 = vmatprep.subr.mxu0 0.0
        %3511 = vmatpush1.msra.mxu0 0.0
        %3512 = vmatprep.subr.mxu0 0.0
        %3513 = vmatpush1.msra.mxu0 0.0
        %3514 = vmatprep.subr.mxu0 0.0
        %3515 = vmatpush1.msra.mxu0 0.0
        %3516 = vmatprep.subr.mxu0 0.0
        %3517 = vmatpush1.msra.mxu0 0.0
        %3518 = vmatprep.subr.mxu0 0.0
        %3519 = vmatpush1.msra.mxu0 0.0
        %3520 = vmatprep.subr.mxu0 0.0
        %3521 = vmatpush1.msra.mxu0 0.0
        %3522 = vmatprep.subr.mxu0 0.0
        %3523 = vmatpush1.msra.mxu0 0.0
        %3524 = vmatprep.subr.mxu0 0.0
        %3525 = vmatpush1.msra.mxu0 0.0
        %3526 = vmatprep.subr.mxu0 0.0
        %3527 = vmatpush1.msra.mxu0 0.0
        %3528 = vmatprep.subr.mxu0 0.0
        %3529 = vmatpush1.msra.mxu0 0.0
        %3530 = vmatprep.subr.mxu0 0.0
        %3531 = vmatpush1.msra.mxu0 0.0
        %3532 = vmatprep.subr.mxu0 0.0
        %3533 = vmatpush1.msra.mxu0 0.0
        %3534 = vmatprep.subr.mxu0 0.0
        %3535 = vmatpush1.msra.mxu0 0.0
        %3536 = vmatprep.subr.mxu0 0.0
        %3537 = vmatpush1.msra.mxu0 0.0
        %3538 = vmatprep.mubr.f32.mxu0 0.0
        %3539 = vmatmul.mubr.f32.gmra.mrb[0].mxu0 %v3469
        %v3540 = vpop.f32.mrb[0].mxu0
        %v3541 = vadd.f32 0.0, %v3540
        %v3542 = vpop.f32.mrb[0].mxu0
        %3543 = vmatprep.mubr.f32.mxu0 0.0
        %3544 = vmatmul.mubr.f32.gmra.mrb[0].mxu0 %v3472
        %v3545 = vpop.f32.mrb[0].mxu0
        %v3546 = vadd.f32 0.0, %v3545
        %v3547 = vpop.f32.mrb[0].mxu0
        %3548 = vdwg.mxu0
        %3549 = vrot.lane.b32.xlu0 %v505, 32
        %v3550 = vpop.permute.xlu0 %3549
        %3551 = vrot.lane.b32.xlu0 %v509, 32
        %v3552 = vpop.permute.xlu0 %3551
        %v3556 = vsel %vm539, %v3456, 0
        %v3559 = vsel %vm539, %v3457, 0
        %3561 = vmatprep.subr.mxu0 0.0
        %3562 = vmatpush1.msra.mxu0 %v3550
        %3563 = vmatprep.subr.mxu0 0.0
        %3564 = vmatpush1.msra.mxu0 %v3552
        %3565 = vmatprep.subr.mxu0 0.0
        %3566 = vmatpush1.msra.mxu0 0.0
        %3567 = vmatprep.subr.mxu0 0.0
        %3568 = vmatpush1.msra.mxu0 0.0
        %3569 = vmatprep.subr.mxu0 0.0
        %3570 = vmatpush1.msra.mxu0 0.0
        %3571 = vmatprep.subr.mxu0 0.0
        %3572 = vmatpush1.msra.mxu0 0.0
        %3573 = vmatprep.subr.mxu0 0.0
        %3574 = vmatpush1.msra.mxu0 0.0
        %3575 = vmatprep.subr.mxu0 0.0
        %3576 = vmatpush1.msra.mxu0 0.0
        %3577 = vmatprep.subr.mxu0 0.0
        %3578 = vmatpush1.msra.mxu0 0.0
        %3579 = vmatprep.subr.mxu0 0.0
        %3580 = vmatpush1.msra.mxu0 0.0
        %3581 = vmatprep.subr.mxu0 0.0
        %3582 = vmatpush1.msra.mxu0 0.0
        %3583 = vmatprep.subr.mxu0 0.0
        %3584 = vmatpush1.msra.mxu0 0.0
        %3585 = vmatprep.subr.mxu0 0.0
        %3586 = vmatpush1.msra.mxu0 0.0
        %3587 = vmatprep.subr.mxu0 0.0
        %3588 = vmatpush1.msra.mxu0 0.0
        %3589 = vmatprep.subr.mxu0 0.0
        %3590 = vmatpush1.msra.mxu0 0.0
        %3591 = vmatprep.subr.mxu0 0.0
        %3592 = vmatpush1.msra.mxu0 0.0
        %3593 = vmatprep.subr.mxu0 0.0
        %3594 = vmatpush1.msra.mxu0 0.0
        %3595 = vmatprep.subr.mxu0 0.0
        %3596 = vmatpush1.msra.mxu0 0.0
        %3597 = vmatprep.subr.mxu0 0.0
        %3598 = vmatpush1.msra.mxu0 0.0
        %3599 = vmatprep.subr.mxu0 0.0
        %3600 = vmatpush1.msra.mxu0 0.0
        %3601 = vmatprep.subr.mxu0 0.0
        %3602 = vmatpush1.msra.mxu0 0.0
        %3603 = vmatprep.subr.mxu0 0.0
        %3604 = vmatpush1.msra.mxu0 0.0
        %3605 = vmatprep.subr.mxu0 0.0
        %3606 = vmatpush1.msra.mxu0 0.0
        %3607 = vmatprep.subr.mxu0 0.0
        %3608 = vmatpush1.msra.mxu0 0.0
        %3609 = vmatprep.subr.mxu0 0.0
        %3610 = vmatpush1.msra.mxu0 0.0
        %3611 = vmatprep.subr.mxu0 0.0
        %3612 = vmatpush1.msra.mxu0 0.0
        %3613 = vmatprep.subr.mxu0 0.0
        %3614 = vmatpush1.msra.mxu0 0.0
        %3615 = vmatprep.subr.mxu0 0.0
        %3616 = vmatpush1.msra.mxu0 0.0
        %3617 = vmatprep.subr.mxu0 0.0
        %3618 = vmatpush1.msra.mxu0 0.0
        %3619 = vmatprep.subr.mxu0 0.0
        %3620 = vmatpush1.msra.mxu0 0.0
        %3621 = vmatprep.subr.mxu0 0.0
        %3622 = vmatpush1.msra.mxu0 0.0
        %3623 = vmatprep.subr.mxu0 0.0
        %3624 = vmatpush1.msra.mxu0 0.0
        %3625 = vmatprep.mubr.f32.mxu0 0.0
        %3626 = vmatmul.mubr.f32.gmra.mrb[0].mxu0 %v3556
        %v3627 = vpop.f32.mrb[0].mxu0
        %v3628 = vadd.f32 0.0, %v3627
        %v3629 = vpop.f32.mrb[0].mxu0
        %3630 = vmatprep.mubr.f32.mxu0 0.0
        %3631 = vmatmul.mubr.f32.gmra.mrb[0].mxu0 %v3559
        %v3632 = vpop.f32.mrb[0].mxu0
        %v3633 = vadd.f32 0.0, %v3632
        %v3634 = vpop.f32.mrb[0].mxu0
        %3635 = vdwg.mxu0
        %3636 = vrot.lane.b32.xlu0 %v515, 32
        %v3637 = vpop.permute.xlu0 %3636
        %3638 = vrot.lane.b32.xlu0 %v519, 32
        %v3639 = vpop.permute.xlu0 %3638
        %v3643 = vsel %vm539, %v3458, 0
        %v3646 = vsel %vm539, %v3459, 0
        %3648 = vmatprep.subr.mxu0 0.0
        %3649 = vmatpush1.msra.mxu0 %v3637
        %3650 = vmatprep.subr.mxu0 0.0
        %3651 = vmatpush1.msra.mxu0 %v3639
        %3652 = vmatprep.subr.mxu0 0.0
        %3653 = vmatpush1.msra.mxu0 0.0
        %3654 = vmatprep.subr.mxu0 0.0
        %3655 = vmatpush1.msra.mxu0 0.0
        %3656 = vmatprep.subr.mxu0 0.0
        %3657 = vmatpush1.msra.mxu0 0.0
        %3658 = vmatprep.subr.mxu0 0.0
        %3659 = vmatpush1.msra.mxu0 0.0
        %3660 = vmatprep.subr.mxu0 0.0
        %3661 = vmatpush1.msra.mxu0 0.0
        %3662 = vmatprep.subr.mxu0 0.0
        %3663 = vmatpush1.msra.mxu0 0.0
        %3664 = vmatprep.subr.mxu0 0.0
        %3665 = vmatpush1.msra.mxu0 0.0
        %3666 = vmatprep.subr.mxu0 0.0
        %3667 = vmatpush1.msra.mxu0 0.0
        %3668 = vmatprep.subr.mxu0 0.0
        %3669 = vmatpush1.msra.mxu0 0.0
        %3670 = vmatprep.subr.mxu0 0.0
        %3671 = vmatpush1.msra.mxu0 0.0
        %3672 = vmatprep.subr.mxu0 0.0
        %3673 = vmatpush1.msra.mxu0 0.0
        %3674 = vmatprep.subr.mxu0 0.0
        %3675 = vmatpush1.msra.mxu0 0.0
        %3676 = vmatprep.subr.mxu0 0.0
        %3677 = vmatpush1.msra.mxu0 0.0
        %3678 = vmatprep.subr.mxu0 0.0
        %3679 = vmatpush1.msra.mxu0 0.0
        %3680 = vmatprep.subr.mxu0 0.0
        %3681 = vmatpush1.msra.mxu0 0.0
        %3682 = vmatprep.subr.mxu0 0.0
        %3683 = vmatpush1.msra.mxu0 0.0
        %3684 = vmatprep.subr.mxu0 0.0
        %3685 = vmatpush1.msra.mxu0 0.0
        %3686 = vmatprep.subr.mxu0 0.0
        %3687 = vmatpush1.msra.mxu0 0.0
        %3688 = vmatprep.subr.mxu0 0.0
        %3689 = vmatpush1.msra.mxu0 0.0
        %3690 = vmatprep.subr.mxu0 0.0
        %3691 = vmatpush1.msra.mxu0 0.0
        %3692 = vmatprep.subr.mxu0 0.0
        %3693 = vmatpush1.msra.mxu0 0.0
        %3694 = vmatprep.subr.mxu0 0.0
        %3695 = vmatpush1.msra.mxu0 0.0
        %3696 = vmatprep.subr.mxu0 0.0
        %3697 = vmatpush1.msra.mxu0 0.0
        %3698 = vmatprep.subr.mxu0 0.0
        %3699 = vmatpush1.msra.mxu0 0.0
        %3700 = vmatprep.subr.mxu0 0.0
        %3701 = vmatpush1.msra.mxu0 0.0
        %3702 = vmatprep.subr.mxu0 0.0
        %3703 = vmatpush1.msra.mxu0 0.0
        %3704 = vmatprep.subr.mxu0 0.0
        %3705 = vmatpush1.msra.mxu0 0.0
        %3706 = vmatprep.subr.mxu0 0.0
        %3707 = vmatpush1.msra.mxu0 0.0
        %3708 = vmatprep.subr.mxu0 0.0
        %3709 = vmatpush1.msra.mxu0 0.0
        %3710 = vmatprep.subr.mxu0 0.0
        %3711 = vmatpush1.msra.mxu0 0.0
        %3712 = vmatprep.mubr.f32.mxu0 0.0
        %3713 = vmatmul.mubr.f32.gmra.mrb[0].mxu0 %v3643
        %v3714 = vpop.f32.mrb[0].mxu0
        %v3715 = vadd.f32 0.0, %v3714
        %v3716 = vpop.f32.mrb[0].mxu0
        %3717 = vmatprep.mubr.f32.mxu0 0.0
        %3718 = vmatmul.mubr.f32.gmra.mrb[0].mxu0 %v3646
        %v3719 = vpop.f32.mrb[0].mxu0
        %v3720 = vadd.f32 0.0, %v3719
        %v3721 = vpop.f32.mrb[0].mxu0
        %3722 = vdwg.mxu0
        %3723 = vrot.lane.b32.xlu0 %v525, 32
        %v3724 = vpop.permute.xlu0 %3723
        %3725 = vrot.lane.b32.xlu0 %v529, 32
        %v3726 = vpop.permute.xlu0 %3725
        %v3730 = vsel %vm539, %v3460, 0
        %v3733 = vsel %vm539, %v3461, 0
        %3735 = vmatprep.subr.mxu0 0.0
        %3736 = vmatpush1.msra.mxu0 %v3724
        %3737 = vmatprep.subr.mxu0 0.0
        %3738 = vmatpush1.msra.mxu0 %v3726
        %3739 = vmatprep.subr.mxu0 0.0
        %3740 = vmatpush1.msra.mxu0 0.0
        %3741 = vmatprep.subr.mxu0 0.0
        %3742 = vmatpush1.msra.mxu0 0.0
        %3743 = vmatprep.subr.mxu0 0.0
        %3744 = vmatpush1.msra.mxu0 0.0
        %3745 = vmatprep.subr.mxu0 0.0
        %3746 = vmatpush1.msra.mxu0 0.0
        %3747 = vmatprep.subr.mxu0 0.0
        %3748 = vmatpush1.msra.mxu0 0.0
        %3749 = vmatprep.subr.mxu0 0.0
        %3750 = vmatpush1.msra.mxu0 0.0
        %3751 = vmatprep.subr.mxu0 0.0
        %3752 = vmatpush1.msra.mxu0 0.0
        %3753 = vmatprep.subr.mxu0 0.0
        %3754 = vmatpush1.msra.mxu0 0.0
        %3755 = vmatprep.subr.mxu0 0.0
        %3756 = vmatpush1.msra.mxu0 0.0
        %3757 = vmatprep.subr.mxu0 0.0
        %3758 = vmatpush1.msra.mxu0 0.0
        %3759 = vmatprep.subr.mxu0 0.0
        %3760 = vmatpush1.msra.mxu0 0.0
        %3761 = vmatprep.subr.mxu0 0.0
        %3762 = vmatpush1.msra.mxu0 0.0
        %3763 = vmatprep.subr.mxu0 0.0
        %3764 = vmatpush1.msra.mxu0 0.0
        %3765 = vmatprep.subr.mxu0 0.0
        %3766 = vmatpush1.msra.mxu0 0.0
        %3767 = vmatprep.subr.mxu0 0.0
        %3768 = vmatpush1.msra.mxu0 0.0
        %3769 = vmatprep.subr.mxu0 0.0
        %3770 = vmatpush1.msra.mxu0 0.0
        %3771 = vmatprep.subr.mxu0 0.0
        %3772 = vmatpush1.msra.mxu0 0.0
        %3773 = vmatprep.subr.mxu0 0.0
        %3774 = vmatpush1.msra.mxu0 0.0
        %3775 = vmatprep.subr.mxu0 0.0
        %3776 = vmatpush1.msra.mxu0 0.0
        %3777 = vmatprep.subr.mxu0 0.0
        %3778 = vmatpush1.msra.mxu0 0.0
        %3779 = vmatprep.subr.mxu0 0.0
        %3780 = vmatpush1.msra.mxu0 0.0
        %3781 = vmatprep.subr.mxu0 0.0
        %3782 = vmatpush1.msra.mxu0 0.0
        %3783 = vmatprep.subr.mxu0 0.0
        %3784 = vmatpush1.msra.mxu0 0.0
        %3785 = vmatprep.subr.mxu0 0.0
        %3786 = vmatpush1.msra.mxu0 0.0
        %3787 = vmatprep.subr.mxu0 0.0
        %3788 = vmatpush1.msra.mxu0 0.0
        %3789 = vmatprep.subr.mxu0 0.0
        %3790 = vmatpush1.msra.mxu0 0.0
        %3791 = vmatprep.subr.mxu0 0.0
        %3792 = vmatpush1.msra.mxu0 0.0
        %3793 = vmatprep.subr.mxu0 0.0
        %3794 = vmatpush1.msra.mxu0 0.0
        %3795 = vmatprep.subr.mxu0 0.0
        %3796 = vmatpush1.msra.mxu0 0.0
        %3797 = vmatprep.subr.mxu0 0.0
        %3798 = vmatpush1.msra.mxu0 0.0
        %3799 = vmatprep.mubr.f32.mxu0 0.0
        %3800 = vmatmul.mubr.f32.gmra.mrb[0].mxu0 %v3730
        %v3801 = vpop.f32.mrb[0].mxu0
        %v3802 = vadd.f32 0.0, %v3801
        %v3803 = vpop.f32.mrb[0].mxu0
        %3804 = vmatprep.mubr.f32.mxu0 0.0
        %3805 = vmatmul.mubr.f32.gmra.mrb[0].mxu0 %v3733
        %v3806 = vpop.f32.mrb[0].mxu0
        %v3807 = vadd.f32 0.0, %v3806
        %v3808 = vpop.f32.mrb[0].mxu0
        %3809 = vdwg.mxu0
        %3818 = vrot.lane.b32.xlu0 %v3541, 96
        %v3819 = vpop.permute.xlu0 %3818
        %3820 = vrot.lane.b32.xlu0 %v3546, 96
        %v3821 = vpop.permute.xlu0 %3820
        %3822 = vrot.lane.b32.xlu0 %v3628, 96
        %v3823 = vpop.permute.xlu0 %3822
        %3824 = vrot.lane.b32.xlu0 %v3633, 96
        %v3825 = vpop.permute.xlu0 %3824
        %3826 = vrot.lane.b32.xlu0 %v3715, 96
        %v3827 = vpop.permute.xlu0 %3826
        %3828 = vrot.lane.b32.xlu0 %v3720, 96
        %v3829 = vpop.permute.xlu0 %3828
        %3830 = vrot.lane.b32.xlu0 %v3802, 96
        %v3831 = vpop.permute.xlu0 %3830
        %3832 = vrot.lane.b32.xlu0 %v3807, 96
        %v3833 = vpop.permute.xlu0 %3832
        %vm3842 = vcmask 1048320
        %3843 = vst.msk [vmem:[#allocation2] sm:$0xff] %vm3842, %v3819
        %3844 = vst.msk [vmem:[#allocation2 + $0x8] sm:$0xff] %vm3842, %v3821
        %3845 = vst.msk [vmem:[#allocation2 + $0x10] sm:$0xff] %vm3842, %v3823
        %3846 = vst.msk [vmem:[#allocation2 + $0x18] sm:$0xff] %vm3842, %v3825
        %3847 = vst.msk [vmem:[#allocation2 + $0x20] sm:$0xff] %vm3842, %v3827
        %3848 = vst.msk [vmem:[#allocation2 + $0x28] sm:$0xff] %vm3842, %v3829
        %3849 = vst.msk [vmem:[#allocation2 + $0x30] sm:$0xff] %vm3842, %v3831
        %3850 = vst.msk [vmem:[#allocation2 + $0x38] sm:$0xff] %vm3842, %v3833
        %v3851 = vld [vmem:[#allocation2] sm:$0xff]
        %v3852 = vld [vmem:[#allocation2 + $0x8] sm:$0xff]
        %v3853 = vld [vmem:[#allocation2 + $0x10] sm:$0xff]
        %v3854 = vld [vmem:[#allocation2 + $0x18] sm:$0xff]
        %v3855 = vld [vmem:[#allocation2 + $0x20] sm:$0xff]
        %v3856 = vld [vmem:[#allocation2 + $0x28] sm:$0xff]
        %v3857 = vld [vmem:[#allocation2 + $0x30] sm:$0xff]
        %v3858 = vld [vmem:[#allocation2 + $0x38] sm:$0xff]
        %v3859 = vadd.f32 %v3851, 3.0
        %v3860 = vadd.f32 %v3852, 3.0
        %v3861 = vadd.f32 %v3853, 3.0
        %v3862 = vadd.f32 %v3854, 3.0
        %v3863 = vadd.f32 %v3855, 3.0
        %v3864 = vadd.f32 %v3856, 3.0
        %v3865 = vadd.f32 %v3857, 3.0
        %v3866 = vadd.f32 %v3858, 3.0
        %v3867 = vmax.f32 %v3859, 0.0
        %v3868 = vmax.f32 %v3860, 0.0
        %v3869 = vmax.f32 %v3861, 0.0
        %v3870 = vmax.f32 %v3862, 0.0
        %v3871 = vmax.f32 %v3863, 0.0
        %v3872 = vmax.f32 %v3864, 0.0
        %v3873 = vmax.f32 %v3865, 0.0
        %v3874 = vmax.f32 %v3866, 0.0
        %v3875 = vmin.f32 %v3867, 6.0
        %v3876 = vmin.f32 %v3868, 6.0
        %v3877 = vmin.f32 %v3869, 6.0
        %v3878 = vmin.f32 %v3870, 6.0
        %v3879 = vmin.f32 %v3871, 6.0
        %v3880 = vmin.f32 %v3872, 6.0
        %v3881 = vmin.f32 %v3873, 6.0
        %v3882 = vmin.f32 %v3874, 6.0
        %v3883 = vmul.f32 %v3851, %v3875
        %v3884 = vmul.f32 %v3852, %v3876
        %v3885 = vmul.f32 %v3853, %v3877
        %v3886 = vmul.f32 %v3854, %v3878
        %v3887 = vmul.f32 %v3855, %v3879
        %v3888 = vmul.f32 %v3856, %v3880
        %v3889 = vmul.f32 %v3857, %v3881
        %v3890 = vmul.f32 %v3858, %v3882
        %v3891 = vmul.f32 %v3883, 0.16666667
        %v3892 = vmul.f32 %v3884, 0.16666667
        %v3893 = vmul.f32 %v3885, 0.16666667
        %v3894 = vmul.f32 %v3886, 0.16666667
        %v3895 = vmul.f32 %v3887, 0.16666667
        %v3896 = vmul.f32 %v3888, 0.16666667
        %v3897 = vmul.f32 %v3889, 0.16666667
        %v3898 = vmul.f32 %v3890, 0.16666667
        %v3899 = vpack.c.bf16 %v3892, %v3891
        %v3900 = vpack.c.bf16 %v3894, %v3893
        %v3901 = vpack.c.bf16 %v3896, %v3895
        %v3902 = vpack.c.bf16 %v3898, %v3897
        %v3903 = vld [vmem:[#allocation8] sm:$0xf]
        %v3904 = vld [vmem:[#allocation8 + $0x4] sm:$0xf]
        %v3905 = vld [vmem:[#allocation8 + $0x8] sm:$0xf]
        %v3906 = vld [vmem:[#allocation8 + $0xc] sm:$0xf]
        %v3907 = vld [vmem:[#allocation8 + $0x10] sm:$0xf]
        %v3908 = vld [vmem:[#allocation8 + $0x14] sm:$0xf]
        %v3909 = vld [vmem:[#allocation8 + $0x18] sm:$0xf]
        %v3910 = vld [vmem:[#allocation8 + $0x1c] sm:$0xf]
        %v3911 = vld [vmem:[#allocation8 + $0x20] sm:$0xf]
        %v3912 = vld [vmem:[#allocation8 + $0x24] sm:$0xf]
        %v3913 = vld [vmem:[#allocation8 + $0x28] sm:$0xf]
        %v3914 = vld [vmem:[#allocation8 + $0x2c] sm:$0xf]
        %v3915 = vld [vmem:[#allocation8 + $0x30] sm:$0xf]
        %v3916 = vld [vmem:[#allocation8 + $0x34] sm:$0xf]
        %v3917 = vld [vmem:[#allocation8 + $0x38] sm:$0xf]
        %v3918 = vld [vmem:[#allocation8 + $0x3c] sm:$0xf]
        %v3919 = vld [vmem:[%s4] sm:$0x1]
        %v3921 = vlaneseq
        %v3922 = vshrl.u32 %v3921, 7
        %v3923 = vsub.s32 0, %v3922
        %v3924 = vrot.slane %v3919, %v3923
        %v3942 = vunpack.c.l.b16 %v3903
        %v3943 = vunpack.c.l.b16 %v3904
        %v3944 = vunpack.c.l.b16 %v3905
        %v3945 = vunpack.c.l.b16 %v3906
        %v3946 = vunpack.c.l.b16 %v3907
        %v3947 = vunpack.c.l.b16 %v3908
        %v3948 = vunpack.c.l.b16 %v3909
        %v3949 = vunpack.c.l.b16 %v3910
        %v3950 = vunpack.c.l.b16 %v3911
        %v3951 = vunpack.c.l.b16 %v3912
        %v3952 = vunpack.c.l.b16 %v3913
        %v3953 = vunpack.c.l.b16 %v3914
        %v3954 = vunpack.c.l.b16 %v3915
        %v3955 = vunpack.c.l.b16 %v3916
        %v3956 = vunpack.c.l.b16 %v3917
        %v3957 = vunpack.c.l.b16 %v3918
        %v3958 = vpack.c.b16 %v3943, %v3942
        %v3959 = vpack.c.b16 %v3945, %v3944
        %v3960 = vpack.c.b16 %v3947, %v3946
        %v3961 = vpack.c.b16 %v3949, %v3948
        %v3962 = vpack.c.b16 %v3951, %v3950
        %v3963 = vpack.c.b16 %v3953, %v3952
        %v3964 = vpack.c.b16 %v3955, %v3954
        %v3965 = vpack.c.b16 %v3957, %v3956
        %3974 = vmatprep.subr.bf16.mxu0 0
        %3975 = vmatpush1.bf16.msra.mxu0 %v3958
        %3976 = vmatprep.subr.bf16.mxu0 0
        %3977 = vmatpush1.bf16.msra.mxu0 %v3959
        %3978 = vmatprep.subr.bf16.mxu0 0
        %3979 = vmatpush1.bf16.msra.mxu0 %v3960
        %3980 = vmatprep.subr.bf16.mxu0 0
        %3981 = vmatpush1.bf16.msra.mxu0 %v3961
        %3982 = vmatprep.subr.bf16.mxu0 0
        %3983 = vmatpush1.bf16.msra.mxu0 %v3962
        %3984 = vmatprep.subr.bf16.mxu0 0
        %3985 = vmatpush1.bf16.msra.mxu0 %v3963
        %3986 = vmatprep.subr.bf16.mxu0 0
        %3987 = vmatpush1.bf16.msra.mxu0 %v3964
        %3988 = vmatprep.subr.bf16.mxu0 0
        %3989 = vmatpush1.bf16.msra.mxu0 %v3965
        %3990 = vmatprep.subr.bf16.mxu0 0
        %3991 = vmatpush1.bf16.msra.mxu0 0
        %3992 = vmatprep.subr.bf16.mxu0 0
        %3993 = vmatpush1.bf16.msra.mxu0 0
        %3994 = vmatprep.subr.bf16.mxu0 0
        %3995 = vmatpush1.bf16.msra.mxu0 0
        %3996 = vmatprep.subr.bf16.mxu0 0
        %3997 = vmatpush1.bf16.msra.mxu0 0
        %3998 = vmatprep.subr.bf16.mxu0 0
        %3999 = vmatpush1.bf16.msra.mxu0 0
        %4000 = vmatprep.subr.bf16.mxu0 0
        %4001 = vmatpush1.bf16.msra.mxu0 0
        %4002 = vmatprep.subr.bf16.mxu0 0
        %4003 = vmatpush1.bf16.msra.mxu0 0
        %4004 = vmatprep.subr.bf16.mxu0 0
        %4005 = vmatpush1.bf16.msra.mxu0 0
        %4006 = vmatprep.mubr.bf16.mxu0 0
        %4007 = vmatmul.mubr.bf16.gmra.mrb[0].mxu0 %v3899
        %v4008 = vpop.f32.mrb[0].mxu0
        %v4009 = vadd.f32 %v3924, %v4008
        %v4010 = vpop.f32.mrb[0].mxu0
        %v4011 = vpop.f32.mrb[0].mxu0
        %v4012 = vadd.f32 %v3924, %v4011
        %v4013 = vpop.f32.mrb[0].mxu0
        %4014 = vmatprep.mubr.bf16.mxu0 0
        %4015 = vmatmul.mubr.bf16.gmra.mrb[0].mxu0 %v3900
        %v4016 = vpop.f32.mrb[0].mxu0
        %v4017 = vadd.f32 %v3924, %v4016
        %v4018 = vpop.f32.mrb[0].mxu0
        %v4019 = vpop.f32.mrb[0].mxu0
        %v4020 = vadd.f32 %v3924, %v4019
        %v4021 = vpop.f32.mrb[0].mxu0
        %4022 = vmatprep.mubr.bf16.mxu0 0
        %4023 = vmatmul.mubr.bf16.gmra.mrb[0].mxu0 %v3901
        %v4024 = vpop.f32.mrb[0].mxu0
        %v4025 = vadd.f32 %v3924, %v4024
        %v4026 = vpop.f32.mrb[0].mxu0
        %v4027 = vpop.f32.mrb[0].mxu0
        %v4028 = vadd.f32 %v3924, %v4027
        %v4029 = vpop.f32.mrb[0].mxu0
        %4030 = vmatprep.mubr.bf16.mxu0 0
        %4031 = vmatmul.mubr.bf16.gmra.mrb[0].mxu0 %v3902
        %v4032 = vpop.f32.mrb[0].mxu0
        %v4033 = vadd.f32 %v3924, %v4032
        %v4034 = vpop.f32.mrb[0].mxu0
        %v4035 = vpop.f32.mrb[0].mxu0
        %v4036 = vadd.f32 %v3924, %v4035
        %v4037 = vpop.f32.mrb[0].mxu0
        %4038 = vdwg.mxu0
        %4039 = vst [vmem:[%s314] sm:$0xff] %v4009
        %4040 = vst [vmem:[%s314 + $0x8] sm:$0xff] %v4012
        %4041 = vst [vmem:[%s314 + $0x10] sm:$0xff] %v4017
        %4042 = vst [vmem:[%s314 + $0x18] sm:$0xff] %v4020
        %4043 = vst [vmem:[%s314 + $0x20] sm:$0xff] %v4025
        %4044 = vst [vmem:[%s314 + $0x28] sm:$0xff] %v4028
        %4045 = vst [vmem:[%s314 + $0x30] sm:$0xff] %v4033
        %4046 = vst [vmem:[%s314 + $0x38] sm:$0xff] %v4036
        %s4047 = sand.u32 %s164, 1
        %s4048 = scalar_lea.sflag [#allocation5], %s4047
        %s4049 = sand.u32 %s164, 1
        %s4050 = smul.addr %s4049, 64
        %s4051 = scalar_lea.vmem [#allocation11], %s4050
        // Predicated region
        $region61: #{tpu_custom_call.1} parent=43 // pred_check
          %p4052 = pneg %p174
        $region62: #{tpu_custom_call.1} parent=43 // pred_check_branch
          %4054 = sbr.rel (%p4052) target = $region64
        $region63: #{tpu_custom_call.1} parent=43 // pred_region
          %s4055 = smul.u32 4, %s25
          %s4057 = ssub.s32 1024, 1024
          %4058 = vsyncadd %s4048, %s4057
          %s4059 = smul.addr %s4055, 2
          %s4060 = smul.addr %s4059, 128
          %s4061 = scalar_lea.hbm %s6, %s4060
          %s4062 = sshll.u32 %s4051, 4
          %s4063 = int_to_ptr.vmem [resolvable:$true] %s4062
          %4068 = dma.vmem_to_hbm [thread:$0]  %s4063, 1024, %s4061, %s4048, 128, 128, 8
        $region64: #{tpu_custom_call.1} parent=43 // pred_fallthru
          _
      $region44: #{tpu_custom_call.1} parent=5 // pred_fallthru
        _
      %p4069 = scmp.le.s32.totalorder 2, %s20
      // Predicated region
      $region65: #{tpu_custom_call.1} parent=5 // pred_check
        %p4070 = pneg %p4069
      $region66: #{tpu_custom_call.1} parent=5 // pred_check_branch
        %4072 = sbr.rel (%p4070) target = $region68
      $region67: #{tpu_custom_call.1} parent=5 // pred_region
        %s4073 = ssub.s32 %s20, 2
        // Predicated region
        $region69: #{tpu_custom_call.1} parent=67 // pred_check
          %p4074 = pneg %p180
        $region70: #{tpu_custom_call.1} parent=67 // pred_check_branch
          %4076 = sbr.rel (%p4074) target = $region72
        $region71: #{tpu_custom_call.1} parent=67 // pred_region
          %s4077 = sand.u32 %s165, 1
          %s4078 = scalar_lea.sflag [#allocation5], %s4077
          %s4079 = sand.u32 %s165, 1
          %s4080 = smul.addr %s4079, 64
          %s4081 = scalar_lea.vmem [#allocation11], %s4080
          %4082 = dma.done %s4078, 1024
        $region72: #{tpu_custom_call.1} parent=67 // pred_fallthru
          _
      $region68: #{tpu_custom_call.1} parent=5 // pred_fallthru
        _
    $region6: #{tpu_custom_call.1} parent=1 // loop_footer
      %s24 = sadd.s32 1, %s20
    $region7: #{tpu_custom_call.1} parent=1 // loop_footer_branch
      %19 = sbr.rel target = $region3
    $region8: #{tpu_custom_call.1} parent=1 // loop_exit
      _
    %4083 = vsyncpa [#allocation4], 1
    %s4084 = scalar_lea.sflag [#allocation4], 1
    %4085 = vsyncpa %s4084, 1
    %4086 = vsyncpa [#allocation7], 1
    %4087 = vsyncpa [#allocation10], 1
    %4088 = vsyncpa [#allocation5], 1
    %s4089 = scalar_lea.sflag [#allocation5], 1
    %4090 = vsyncpa %s4089, 1

</llo_original>
